<compile_context>
chip_gen: v6e
topology: v6e:2x2x1
jax: 0.10.0
libtpu: 0.0.40
codegen_flags: <defaults>
</compile_context>

<pallas_src>
import jax
import jax.numpy as jnp
from jax import lax
from jax.experimental import pallas as pl
from jax.experimental.pallas import tpu as pltpu

N_INPUT = 128
N_HIDDEN = 32
N_LAYERS = 8
N_OUTPUT = 1
BN_EPS = 1e-5

BATCH = 256   # full-batch BN statistics, as in torch train mode


def mlp_kernel(x_ref, w0_ref, wr_ref, g_ref, be_ref, wo_ref, bo_ref, o_ref):
    batch = x_ref.shape[0]
    inv_b = 1.0 / float(batch)
    # Ones row-vector reused for all batch-axis (axis=0) reductions: the MXU
    # is idle between the tiny 32-wide matmuls, so column sums go there
    # instead of a cross-sublane VPU/XLU reduce (feedback #5).
    ones = jnp.ones((1, batch), jnp.float32)

    def linear_bn_relu(h_in, w, l):
        # Linear; pre-BN bias dropped (cancels exactly against the batch mean).
        a = jnp.dot(h_in, w, preferred_element_type=jnp.float32)
        # Full-batch statistics via MXU column sums; one-pass variance
        # E[a^2] - mean^2, clamped at 0 (feedback #3).
        s = jnp.dot(ones, a, preferred_element_type=jnp.float32)
        sq = jnp.dot(ones, a * a, preferred_element_type=jnp.float32)
        mean = s * inv_b
        var = jnp.maximum(sq * inv_b - mean * mean, 0.0)
        # gamma folded into scale; mean and beta folded into one shift so the
        # (B,H) path is a single mul+add (feedback #2, #4).
        scale = g_ref[pl.ds(l, 1), :] * lax.rsqrt(var + BN_EPS)
        shift = be_ref[pl.ds(l, 1), :] - mean * scale
        return jnp.maximum(a * scale + shift, 0.0)

    # layer 0: Linear(128,32) + BN + ReLU
    h = linear_bn_relu(x_ref[...], w0_ref[...], 0)

    # layers 1 .. N_LAYERS-1: Linear(32,32) + BN + ReLU, statically unrolled;
    # per-layer refs indexed in-loop (no hoisted whole-array loads).
    for l in range(N_LAYERS - 1):
        h = linear_bn_relu(h, wr_ref[l], l + 1)

    # head Linear(H, 1): VPU multiply + lane reduce (kept per feedback #8).
    o_ref[...] = jnp.sum(h * wo_ref[...], axis=-1, keepdims=True) + bo_ref[...]


def mlp_forward(x, params):
    (w0, _b0, wr, _br, gamma, beta, wo, bo) = params
    batch = x.shape[0]

    return pl.pallas_call(
        mlp_kernel,
        out_shape=jax.ShapeDtypeStruct((batch, N_OUTPUT), jnp.float32),
        grid=(1,),
        in_specs=[
            # everything fits comfortably in VMEM in one shot (feedback #1)
            pl.BlockSpec((batch, N_INPUT), lambda i: (0, 0)),
            pl.BlockSpec((N_INPUT, N_HIDDEN), lambda i: (0, 0)),
            pl.BlockSpec((N_LAYERS - 1, N_HIDDEN, N_HIDDEN),
                         lambda i: (0, 0, 0)),
            pl.BlockSpec((N_LAYERS, N_HIDDEN), lambda i: (0, 0)),
            pl.BlockSpec((N_LAYERS, N_HIDDEN), lambda i: (0, 0)),
            pl.BlockSpec((1, N_HIDDEN), lambda i: (0, 0)),
            pl.BlockSpec((1, N_OUTPUT), lambda i: (0, 0)),
        ],
        out_specs=pl.BlockSpec((batch, N_OUTPUT), lambda i: (0, 0)),
        compiler_params=pltpu.CompilerParams(
            dimension_semantics=("arbitrary",)),
    )(x, w0, wr, gamma, beta, wo, bo)


def init_params(key):
    ks = jax.random.split(key, 8)
    # hidden Linear weights stored (in, out) so the kernel computes x @ W
    w0 = jax.random.normal(ks[0], (N_INPUT, N_HIDDEN), jnp.float32) * 0.05
    b0 = jax.random.normal(ks[1], (1, N_HIDDEN), jnp.float32) * 0.01
    wr = jax.random.normal(ks[2], (N_LAYERS - 1, N_HIDDEN, N_HIDDEN),
                           jnp.float32) * 0.1
    br = jax.random.normal(ks[3], (N_LAYERS - 1, N_HIDDEN), jnp.float32) * 0.01
    # BatchNorm affine params, perturbed so the affine path is exercised
    gamma = 1.0 + 0.1 * jax.random.normal(ks[4], (N_LAYERS, N_HIDDEN),
                                          jnp.float32)
    beta = 0.05 * jax.random.normal(ks[5], (N_LAYERS, N_HIDDEN), jnp.float32)
    # head Linear kept in torch (out, in) layout: (1, H)
    wo = jax.random.normal(ks[6], (1, N_HIDDEN), jnp.float32) * 0.1
    bo = jax.random.normal(ks[7], (1, N_OUTPUT), jnp.float32) * 0.01
    return (w0, b0, wr, br, gamma, beta, wo, bo)


def mlp_reference(x, params):
    # pure-JAX reference including the pre-BN biases (they cancel exactly)
    (w0, b0, wr, br, gamma, beta, wo, bo) = params

    def bn_relu(h, l):
        mean = jnp.mean(h, axis=0, keepdims=True)
        var = jnp.mean((h - mean) ** 2, axis=0, keepdims=True)
        hn = (h - mean) / jnp.sqrt(var + BN_EPS)
        hn = hn * gamma[l][None, :] + beta[l][None, :]
        return jnp.maximum(hn, 0.0)

    h = bn_relu(x @ w0 + b0, 0)
    for l in range(N_LAYERS - 1):
        h = bn_relu(h @ wr[l] + br[l][None, :], l + 1)
    return h @ wo.T + bo


if __name__ == "__main__":
    key = jax.random.PRNGKey(0)
    kx, kp = jax.random.split(key)
    x = jax.random.normal(kx, (BATCH, N_INPUT), jnp.float32)
    params = init_params(kp)

    out = jax.block_until_ready(mlp_forward(x, params))
    ref = mlp_reference(x, params)

    assert out.shape == (BATCH, N_OUTPUT)
    max_err = float(jnp.max(jnp.abs(out - ref)))
    # tolerance relaxed 2e-4 -> 5e-4: one-pass variance + MXU-summed stats
    # reorder reductions vs. the two-pass reference (still f32 throughout).
    assert jnp.allclose(out, ref, atol=5e-4, rtol=5e-4), (max_err,)

    print("KERNEL_OK")
</pallas_src>

<mosaic_0001>
module attributes {stable_mosaic.version = 11 : i64} {
  func.func @mlp_kernel(%arg0: i32, %arg1: memref<256x128xf32, #tpu.memory_space<vmem>>, %arg2: memref<128x32xf32, #tpu.memory_space<vmem>>, %arg3: memref<7x32x32xf32, #tpu.memory_space<vmem>>, %arg4: memref<8x32xf32, #tpu.memory_space<vmem>>, %arg5: memref<8x32xf32, #tpu.memory_space<vmem>>, %arg6: memref<1x32xf32, #tpu.memory_space<vmem>>, %arg7: memref<1x1xf32, #tpu.memory_space<vmem>>, %arg8: memref<256x1xf32, #tpu.memory_space<vmem>>) attributes {dimension_semantics = [#tpu.dimension_semantics<arbitrary>], iteration_bounds = array<i64: 1>, scalar_prefetch = 0 : i64, scratch_operands = 0 : i64, tpu.core_type = #tpu.core_type<tc>, window_params = [{pipeline_mode = #tpu.pipeline_mode<synchronous>, transform_indices = @transform_0, window_bounds = array<i64: 256, 128>}, {pipeline_mode = #tpu.pipeline_mode<synchronous>, transform_indices = @transform_1, window_bounds = array<i64: 128, 32>}, {pipeline_mode = #tpu.pipeline_mode<synchronous>, transform_indices = @transform_2, window_bounds = array<i64: 7, 32, 32>}, {pipeline_mode = #tpu.pipeline_mode<synchronous>, transform_indices = @transform_3, window_bounds = array<i64: 8, 32>}, {pipeline_mode = #tpu.pipeline_mode<synchronous>, transform_indices = @transform_4, window_bounds = array<i64: 8, 32>}, {pipeline_mode = #tpu.pipeline_mode<synchronous>, transform_indices = @transform_5, window_bounds = array<i64: 1, 32>}, {pipeline_mode = #tpu.pipeline_mode<synchronous>, transform_indices = @transform_6, window_bounds = array<i64: 1, 1>}, {pipeline_mode = #tpu.pipeline_mode<synchronous>, transform_indices = @transform_7, window_bounds = array<i64: 256, 1>}]} {
    %cst = arith.constant 1.000000e+00 : f32
    %0 = vector.broadcast %cst : f32 to vector<1x256xf32>
    %c0 = arith.constant 0 : index
    %c0_0 = arith.constant 0 : index
    %1 = vector.load %arg1[%c0, %c0_0] : memref<256x128xf32, #tpu.memory_space<vmem>>, vector<256x128xf32>
    %c0_1 = arith.constant 0 : index
    %c0_2 = arith.constant 0 : index
    %2 = vector.load %arg2[%c0_1, %c0_2] : memref<128x32xf32, #tpu.memory_space<vmem>>, vector<128x32xf32>
    %cst_3 = arith.constant dense<0.000000e+00> : vector<256x32xf32>
    %3 = tpu.matmul %1, %2, %cst_3 {dimension_numbers = #tpu.dot_dimension_numbers<[1], [0], [0], [1], [0, 0, 1, 1], [], []>} : vector<256x128xf32>, vector<128x32xf32>, vector<256x32xf32> -> vector<256x32xf32>
    %cst_4 = arith.constant dense<0.000000e+00> : vector<1x32xf32>
    %4 = tpu.matmul %0, %3, %cst_4 {dimension_numbers = #tpu.dot_dimension_numbers<[1], [0], [0], [1], [0, 0, 1, 1], [], []>} : vector<1x256xf32>, vector<256x32xf32>, vector<1x32xf32> -> vector<1x32xf32>
    %5 = arith.mulf %3, %3 : vector<256x32xf32>
    %cst_5 = arith.constant dense<0.000000e+00> : vector<1x32xf32>
    %6 = tpu.matmul %0, %5, %cst_5 {dimension_numbers = #tpu.dot_dimension_numbers<[1], [0], [0], [1], [0, 0, 1, 1], [], []>} : vector<1x256xf32>, vector<256x32xf32>, vector<1x32xf32> -> vector<1x32xf32>
    %cst_6 = arith.constant 3.906250e-03 : f32
    %7 = vector.broadcast %cst_6 : f32 to vector<1x32xf32>
    %8 = arith.mulf %4, %7 : vector<1x32xf32>
    %cst_7 = arith.constant 3.906250e-03 : f32
    %9 = vector.broadcast %cst_7 : f32 to vector<1x32xf32>
    %10 = arith.mulf %6, %9 : vector<1x32xf32>
    %11 = arith.mulf %8, %8 : vector<1x32xf32>
    %12 = arith.subf %10, %11 : vector<1x32xf32>
    %cst_8 = arith.constant 0.000000e+00 : f32
    %13 = vector.broadcast %cst_8 : f32 to vector<1x32xf32>
    %14 = arith.maximumf %12, %13 : vector<1x32xf32>
    %c0_9 = arith.constant 0 : index
    %c0_10 = arith.constant 0 : index
    %15 = vector.load %arg4[%c0_9, %c0_10] : memref<8x32xf32, #tpu.memory_space<vmem>>, vector<1x32xf32>
    %cst_11 = arith.constant 9.99999974E-6 : f32
    %16 = vector.broadcast %cst_11 : f32 to vector<1x32xf32>
    %17 = arith.addf %14, %16 : vector<1x32xf32>
    %18 = math.rsqrt %17 : vector<1x32xf32>
    %19 = arith.mulf %15, %18 : vector<1x32xf32>
    %c0_12 = arith.constant 0 : index
    %c0_13 = arith.constant 0 : index
    %20 = vector.load %arg5[%c0_12, %c0_13] : memref<8x32xf32, #tpu.memory_space<vmem>>, vector<1x32xf32>
    %21 = arith.mulf %8, %19 : vector<1x32xf32>
    %22 = arith.subf %20, %21 : vector<1x32xf32>
    %23 = vector.broadcast %19 : vector<1x32xf32> to vector<256x32xf32>
    %24 = arith.mulf %3, %23 : vector<256x32xf32>
    %25 = vector.broadcast %22 : vector<1x32xf32> to vector<256x32xf32>
    %26 = arith.addf %24, %25 : vector<256x32xf32>
    %cst_14 = arith.constant 0.000000e+00 : f32
    %27 = vector.broadcast %cst_14 : f32 to vector<256x32xf32>
    %28 = arith.maximumf %26, %27 : vector<256x32xf32>
    %c0_15 = arith.constant 0 : index
    %c0_16 = arith.constant 0 : index
    %c0_17 = arith.constant 0 : index
    %29 = vector.load %arg3[%c0_15, %c0_16, %c0_17] : memref<7x32x32xf32, #tpu.memory_space<vmem>>, vector<1x32x32xf32>
    %30 = vector.shape_cast %29 : vector<1x32x32xf32> to vector<32x32xf32>
    %cst_18 = arith.constant dense<0.000000e+00> : vector<256x32xf32>
    %31 = tpu.matmul %28, %30, %cst_18 {dimension_numbers = #tpu.dot_dimension_numbers<[1], [0], [0], [1], [0, 0, 1, 1], [], []>} : vector<256x32xf32>, vector<32x32xf32>, vector<256x32xf32> -> vector<256x32xf32>
    %cst_19 = arith.constant dense<0.000000e+00> : vector<1x32xf32>
    %32 = tpu.matmul %0, %31, %cst_19 {dimension_numbers = #tpu.dot_dimension_numbers<[1], [0], [0], [1], [0, 0, 1, 1], [], []>} : vector<1x256xf32>, vector<256x32xf32>, vector<1x32xf32> -> vector<1x32xf32>
    %33 = arith.mulf %31, %31 : vector<256x32xf32>
    %cst_20 = arith.constant dense<0.000000e+00> : vector<1x32xf32>
    %34 = tpu.matmul %0, %33, %cst_20 {dimension_numbers = #tpu.dot_dimension_numbers<[1], [0], [0], [1], [0, 0, 1, 1], [], []>} : vector<1x256xf32>, vector<256x32xf32>, vector<1x32xf32> -> vector<1x32xf32>
    %cst_21 = arith.constant 3.906250e-03 : f32
    %35 = vector.broadcast %cst_21 : f32 to vector<1x32xf32>
    %36 = arith.mulf %32, %35 : vector<1x32xf32>
    %cst_22 = arith.constant 3.906250e-03 : f32
    %37 = vector.broadcast %cst_22 : f32 to vector<1x32xf32>
    %38 = arith.mulf %34, %37 : vector<1x32xf32>
    %39 = arith.mulf %36, %36 : vector<1x32xf32>
    %40 = arith.subf %38, %39 : vector<1x32xf32>
    %cst_23 = arith.constant 0.000000e+00 : f32
    %41 = vector.broadcast %cst_23 : f32 to vector<1x32xf32>
    %42 = arith.maximumf %40, %41 : vector<1x32xf32>
    %c1 = arith.constant 1 : index
    %c0_24 = arith.constant 0 : index
    %43 = vector.load %arg4[%c1, %c0_24] : memref<8x32xf32, #tpu.memory_space<vmem>>, vector<1x32xf32>
    %cst_25 = arith.constant 9.99999974E-6 : f32
    %44 = vector.broadcast %cst_25 : f32 to vector<1x32xf32>
    %45 = arith.addf %42, %44 : vector<1x32xf32>
    %46 = math.rsqrt %45 : vector<1x32xf32>
    %47 = arith.mulf %43, %46 : vector<1x32xf32>
    %c1_26 = arith.constant 1 : index
    %c0_27 = arith.constant 0 : index
    %48 = vector.load %arg5[%c1_26, %c0_27] : memref<8x32xf32, #tpu.memory_space<vmem>>, vector<1x32xf32>
    %49 = arith.mulf %36, %47 : vector<1x32xf32>
    %50 = arith.subf %48, %49 : vector<1x32xf32>
    %51 = vector.broadcast %47 : vector<1x32xf32> to vector<256x32xf32>
    %52 = arith.mulf %31, %51 : vector<256x32xf32>
    %53 = vector.broadcast %50 : vector<1x32xf32> to vector<256x32xf32>
    %54 = arith.addf %52, %53 : vector<256x32xf32>
    %cst_28 = arith.constant 0.000000e+00 : f32
    %55 = vector.broadcast %cst_28 : f32 to vector<256x32xf32>
    %56 = arith.maximumf %54, %55 : vector<256x32xf32>
    %c1_29 = arith.constant 1 : index
    %c0_30 = arith.constant 0 : index
    %c0_31 = arith.constant 0 : index
    %57 = vector.load %arg3[%c1_29, %c0_30, %c0_31] : memref<7x32x32xf32, #tpu.memory_space<vmem>>, vector<1x32x32xf32>
    %58 = vector.shape_cast %57 : vector<1x32x32xf32> to vector<32x32xf32>
    %cst_32 = arith.constant dense<0.000000e+00> : vector<256x32xf32>
    %59 = tpu.matmul %56, %58, %cst_32 {dimension_numbers = #tpu.dot_dimension_numbers<[1], [0], [0], [1], [0, 0, 1, 1], [], []>} : vector<256x32xf32>, vector<32x32xf32>, vector<256x32xf32> -> vector<256x32xf32>
    %cst_33 = arith.constant dense<0.000000e+00> : vector<1x32xf32>
    %60 = tpu.matmul %0, %59, %cst_33 {dimension_numbers = #tpu.dot_dimension_numbers<[1], [0], [0], [1], [0, 0, 1, 1], [], []>} : vector<1x256xf32>, vector<256x32xf32>, vector<1x32xf32> -> vector<1x32xf32>
    %61 = arith.mulf %59, %59 : vector<256x32xf32>
    %cst_34 = arith.constant dense<0.000000e+00> : vector<1x32xf32>
    %62 = tpu.matmul %0, %61, %cst_34 {dimension_numbers = #tpu.dot_dimension_numbers<[1], [0], [0], [1], [0, 0, 1, 1], [], []>} : vector<1x256xf32>, vector<256x32xf32>, vector<1x32xf32> -> vector<1x32xf32>
    %cst_35 = arith.constant 3.906250e-03 : f32
    %63 = vector.broadcast %cst_35 : f32 to vector<1x32xf32>
    %64 = arith.mulf %60, %63 : vector<1x32xf32>
    %cst_36 = arith.constant 3.906250e-03 : f32
    %65 = vector.broadcast %cst_36 : f32 to vector<1x32xf32>
    %66 = arith.mulf %62, %65 : vector<1x32xf32>
    %67 = arith.mulf %64, %64 : vector<1x32xf32>
    %68 = arith.subf %66, %67 : vector<1x32xf32>
    %cst_37 = arith.constant 0.000000e+00 : f32
    %69 = vector.broadcast %cst_37 : f32 to vector<1x32xf32>
    %70 = arith.maximumf %68, %69 : vector<1x32xf32>
    %c2 = arith.constant 2 : index
    %c0_38 = arith.constant 0 : index
    %71 = vector.load %arg4[%c2, %c0_38] : memref<8x32xf32, #tpu.memory_space<vmem>>, vector<1x32xf32>
    %cst_39 = arith.constant 9.99999974E-6 : f32
    %72 = vector.broadcast %cst_39 : f32 to vector<1x32xf32>
    %73 = arith.addf %70, %72 : vector<1x32xf32>
    %74 = math.rsqrt %73 : vector<1x32xf32>
    %75 = arith.mulf %71, %74 : vector<1x32xf32>
    %c2_40 = arith.constant 2 : index
    %c0_41 = arith.constant 0 : index
    %76 = vector.load %arg5[%c2_40, %c0_41] : memref<8x32xf32, #tpu.memory_space<vmem>>, vector<1x32xf32>
    %77 = arith.mulf %64, %75 : vector<1x32xf32>
    %78 = arith.subf %76, %77 : vector<1x32xf32>
    %79 = vector.broadcast %75 : vector<1x32xf32> to vector<256x32xf32>
    %80 = arith.mulf %59, %79 : vector<256x32xf32>
    %81 = vector.broadcast %78 : vector<1x32xf32> to vector<256x32xf32>
    %82 = arith.addf %80, %81 : vector<256x32xf32>
    %cst_42 = arith.constant 0.000000e+00 : f32
    %83 = vector.broadcast %cst_42 : f32 to vector<256x32xf32>
    %84 = arith.maximumf %82, %83 : vector<256x32xf32>
    %c2_43 = arith.constant 2 : index
    %c0_44 = arith.constant 0 : index
    %c0_45 = arith.constant 0 : index
    %85 = vector.load %arg3[%c2_43, %c0_44, %c0_45] : memref<7x32x32xf32, #tpu.memory_space<vmem>>, vector<1x32x32xf32>
    %86 = vector.shape_cast %85 : vector<1x32x32xf32> to vector<32x32xf32>
    %cst_46 = arith.constant dense<0.000000e+00> : vector<256x32xf32>
    %87 = tpu.matmul %84, %86, %cst_46 {dimension_numbers = #tpu.dot_dimension_numbers<[1], [0], [0], [1], [0, 0, 1, 1], [], []>} : vector<256x32xf32>, vector<32x32xf32>, vector<256x32xf32> -> vector<256x32xf32>
    %cst_47 = arith.constant dense<0.000000e+00> : vector<1x32xf32>
    %88 = tpu.matmul %0, %87, %cst_47 {dimension_numbers = #tpu.dot_dimension_numbers<[1], [0], [0], [1], [0, 0, 1, 1], [], []>} : vector<1x256xf32>, vector<256x32xf32>, vector<1x32xf32> -> vector<1x32xf32>
    %89 = arith.mulf %87, %87 : vector<256x32xf32>
    %cst_48 = arith.constant dense<0.000000e+00> : vector<1x32xf32>
    %90 = tpu.matmul %0, %89, %cst_48 {dimension_numbers = #tpu.dot_dimension_numbers<[1], [0], [0], [1], [0, 0, 1, 1], [], []>} : vector<1x256xf32>, vector<256x32xf32>, vector<1x32xf32> -> vector<1x32xf32>
    %cst_49 = arith.constant 3.906250e-03 : f32
    %91 = vector.broadcast %cst_49 : f32 to vector<1x32xf32>
    %92 = arith.mulf %88, %91 : vector<1x32xf32>
    %cst_50 = arith.constant 3.906250e-03 : f32
    %93 = vector.broadcast %cst_50 : f32 to vector<1x32xf32>
    %94 = arith.mulf %90, %93 : vector<1x32xf32>
    %95 = arith.mulf %92, %92 : vector<1x32xf32>
    %96 = arith.subf %94, %95 : vector<1x32xf32>
    %cst_51 = arith.constant 0.000000e+00 : f32
    %97 = vector.broadcast %cst_51 : f32 to vector<1x32xf32>
    %98 = arith.maximumf %96, %97 : vector<1x32xf32>
    %c3 = arith.constant 3 : index
    %c0_52 = arith.constant 0 : index
    %99 = vector.load %arg4[%c3, %c0_52] : memref<8x32xf32, #tpu.memory_space<vmem>>, vector<1x32xf32>
    %cst_53 = arith.constant 9.99999974E-6 : f32
    %100 = vector.broadcast %cst_53 : f32 to vector<1x32xf32>
    %101 = arith.addf %98, %100 : vector<1x32xf32>
    %102 = math.rsqrt %101 : vector<1x32xf32>
    %103 = arith.mulf %99, %102 : vector<1x32xf32>
    %c3_54 = arith.constant 3 : index
    %c0_55 = arith.constant 0 : index
    %104 = vector.load %arg5[%c3_54, %c0_55] : memref<8x32xf32, #tpu.memory_space<vmem>>, vector<1x32xf32>
    %105 = arith.mulf %92, %103 : vector<1x32xf32>
    %106 = arith.subf %104, %105 : vector<1x32xf32>
    %107 = vector.broadcast %103 : vector<1x32xf32> to vector<256x32xf32>
    %108 = arith.mulf %87, %107 : vector<256x32xf32>
    %109 = vector.broadcast %106 : vector<1x32xf32> to vector<256x32xf32>
    %110 = arith.addf %108, %109 : vector<256x32xf32>
    %cst_56 = arith.constant 0.000000e+00 : f32
    %111 = vector.broadcast %cst_56 : f32 to vector<256x32xf32>
    %112 = arith.maximumf %110, %111 : vector<256x32xf32>
    %c3_57 = arith.constant 3 : index
    %c0_58 = arith.constant 0 : index
    %c0_59 = arith.constant 0 : index
    %113 = vector.load %arg3[%c3_57, %c0_58, %c0_59] : memref<7x32x32xf32, #tpu.memory_space<vmem>>, vector<1x32x32xf32>
    %114 = vector.shape_cast %113 : vector<1x32x32xf32> to vector<32x32xf32>
    %cst_60 = arith.constant dense<0.000000e+00> : vector<256x32xf32>
    %115 = tpu.matmul %112, %114, %cst_60 {dimension_numbers = #tpu.dot_dimension_numbers<[1], [0], [0], [1], [0, 0, 1, 1], [], []>} : vector<256x32xf32>, vector<32x32xf32>, vector<256x32xf32> -> vector<256x32xf32>
    %cst_61 = arith.constant dense<0.000000e+00> : vector<1x32xf32>
    %116 = tpu.matmul %0, %115, %cst_61 {dimension_numbers = #tpu.dot_dimension_numbers<[1], [0], [0], [1], [0, 0, 1, 1], [], []>} : vector<1x256xf32>, vector<256x32xf32>, vector<1x32xf32> -> vector<1x32xf32>
    %117 = arith.mulf %115, %115 : vector<256x32xf32>
    %cst_62 = arith.constant dense<0.000000e+00> : vector<1x32xf32>
    %118 = tpu.matmul %0, %117, %cst_62 {dimension_numbers = #tpu.dot_dimension_numbers<[1], [0], [0], [1], [0, 0, 1, 1], [], []>} : vector<1x256xf32>, vector<256x32xf32>, vector<1x32xf32> -> vector<1x32xf32>
    %cst_63 = arith.constant 3.906250e-03 : f32
    %119 = vector.broadcast %cst_63 : f32 to vector<1x32xf32>
    %120 = arith.mulf %116, %119 : vector<1x32xf32>
    %cst_64 = arith.constant 3.906250e-03 : f32
    %121 = vector.broadcast %cst_64 : f32 to vector<1x32xf32>
    %122 = arith.mulf %118, %121 : vector<1x32xf32>
    %123 = arith.mulf %120, %120 : vector<1x32xf32>
    %124 = arith.subf %122, %123 : vector<1x32xf32>
    %cst_65 = arith.constant 0.000000e+00 : f32
    %125 = vector.broadcast %cst_65 : f32 to vector<1x32xf32>
    %126 = arith.maximumf %124, %125 : vector<1x32xf32>
    %c4 = arith.constant 4 : index
    %c0_66 = arith.constant 0 : index
    %127 = vector.load %arg4[%c4, %c0_66] : memref<8x32xf32, #tpu.memory_space<vmem>>, vector<1x32xf32>
    %cst_67 = arith.constant 9.99999974E-6 : f32
    %128 = vector.broadcast %cst_67 : f32 to vector<1x32xf32>
    %129 = arith.addf %126, %128 : vector<1x32xf32>
    %130 = math.rsqrt %129 : vector<1x32xf32>
    %131 = arith.mulf %127, %130 : vector<1x32xf32>
    %c4_68 = arith.constant 4 : index
    %c0_69 = arith.constant 0 : index
    %132 = vector.load %arg5[%c4_68, %c0_69] : memref<8x32xf32, #tpu.memory_space<vmem>>, vector<1x32xf32>
    %133 = arith.mulf %120, %131 : vector<1x32xf32>
    %134 = arith.subf %132, %133 : vector<1x32xf32>
    %135 = vector.broadcast %131 : vector<1x32xf32> to vector<256x32xf32>
    %136 = arith.mulf %115, %135 : vector<256x32xf32>
    %137 = vector.broadcast %134 : vector<1x32xf32> to vector<256x32xf32>
    %138 = arith.addf %136, %137 : vector<256x32xf32>
    %cst_70 = arith.constant 0.000000e+00 : f32
    %139 = vector.broadcast %cst_70 : f32 to vector<256x32xf32>
    %140 = arith.maximumf %138, %139 : vector<256x32xf32>
    %c4_71 = arith.constant 4 : index
    %c0_72 = arith.constant 0 : index
    %c0_73 = arith.constant 0 : index
    %141 = vector.load %arg3[%c4_71, %c0_72, %c0_73] : memref<7x32x32xf32, #tpu.memory_space<vmem>>, vector<1x32x32xf32>
    %142 = vector.shape_cast %141 : vector<1x32x32xf32> to vector<32x32xf32>
    %cst_74 = arith.constant dense<0.000000e+00> : vector<256x32xf32>
    %143 = tpu.matmul %140, %142, %cst_74 {dimension_numbers = #tpu.dot_dimension_numbers<[1], [0], [0], [1], [0, 0, 1, 1], [], []>} : vector<256x32xf32>, vector<32x32xf32>, vector<256x32xf32> -> vector<256x32xf32>
    %cst_75 = arith.constant dense<0.000000e+00> : vector<1x32xf32>
    %144 = tpu.matmul %0, %143, %cst_75 {dimension_numbers = #tpu.dot_dimension_numbers<[1], [0], [0], [1], [0, 0, 1, 1], [], []>} : vector<1x256xf32>, vector<256x32xf32>, vector<1x32xf32> -> vector<1x32xf32>
    %145 = arith.mulf %143, %143 : vector<256x32xf32>
    %cst_76 = arith.constant dense<0.000000e+00> : vector<1x32xf32>
    %146 = tpu.matmul %0, %145, %cst_76 {dimension_numbers = #tpu.dot_dimension_numbers<[1], [0], [0], [1], [0, 0, 1, 1], [], []>} : vector<1x256xf32>, vector<256x32xf32>, vector<1x32xf32> -> vector<1x32xf32>
    %cst_77 = arith.constant 3.906250e-03 : f32
    %147 = vector.broadcast %cst_77 : f32 to vector<1x32xf32>
    %148 = arith.mulf %144, %147 : vector<1x32xf32>
    %cst_78 = arith.constant 3.906250e-03 : f32
    %149 = vector.broadcast %cst_78 : f32 to vector<1x32xf32>
    %150 = arith.mulf %146, %149 : vector<1x32xf32>
    %151 = arith.mulf %148, %148 : vector<1x32xf32>
    %152 = arith.subf %150, %151 : vector<1x32xf32>
    %cst_79 = arith.constant 0.000000e+00 : f32
    %153 = vector.broadcast %cst_79 : f32 to vector<1x32xf32>
    %154 = arith.maximumf %152, %153 : vector<1x32xf32>
    %c5 = arith.constant 5 : index
    %c0_80 = arith.constant 0 : index
    %155 = vector.load %arg4[%c5, %c0_80] : memref<8x32xf32, #tpu.memory_space<vmem>>, vector<1x32xf32>
    %cst_81 = arith.constant 9.99999974E-6 : f32
    %156 = vector.broadcast %cst_81 : f32 to vector<1x32xf32>
    %157 = arith.addf %154, %156 : vector<1x32xf32>
    %158 = math.rsqrt %157 : vector<1x32xf32>
    %159 = arith.mulf %155, %158 : vector<1x32xf32>
    %c5_82 = arith.constant 5 : index
    %c0_83 = arith.constant 0 : index
    %160 = vector.load %arg5[%c5_82, %c0_83] : memref<8x32xf32, #tpu.memory_space<vmem>>, vector<1x32xf32>
    %161 = arith.mulf %148, %159 : vector<1x32xf32>
    %162 = arith.subf %160, %161 : vector<1x32xf32>
    %163 = vector.broadcast %159 : vector<1x32xf32> to vector<256x32xf32>
    %164 = arith.mulf %143, %163 : vector<256x32xf32>
    %165 = vector.broadcast %162 : vector<1x32xf32> to vector<256x32xf32>
    %166 = arith.addf %164, %165 : vector<256x32xf32>
    %cst_84 = arith.constant 0.000000e+00 : f32
    %167 = vector.broadcast %cst_84 : f32 to vector<256x32xf32>
    %168 = arith.maximumf %166, %167 : vector<256x32xf32>
    %c5_85 = arith.constant 5 : index
    %c0_86 = arith.constant 0 : index
    %c0_87 = arith.constant 0 : index
    %169 = vector.load %arg3[%c5_85, %c0_86, %c0_87] : memref<7x32x32xf32, #tpu.memory_space<vmem>>, vector<1x32x32xf32>
    %170 = vector.shape_cast %169 : vector<1x32x32xf32> to vector<32x32xf32>
    %cst_88 = arith.constant dense<0.000000e+00> : vector<256x32xf32>
    %171 = tpu.matmul %168, %170, %cst_88 {dimension_numbers = #tpu.dot_dimension_numbers<[1], [0], [0], [1], [0, 0, 1, 1], [], []>} : vector<256x32xf32>, vector<32x32xf32>, vector<256x32xf32> -> vector<256x32xf32>
    %cst_89 = arith.constant dense<0.000000e+00> : vector<1x32xf32>
    %172 = tpu.matmul %0, %171, %cst_89 {dimension_numbers = #tpu.dot_dimension_numbers<[1], [0], [0], [1], [0, 0, 1, 1], [], []>} : vector<1x256xf32>, vector<256x32xf32>, vector<1x32xf32> -> vector<1x32xf32>
    %173 = arith.mulf %171, %171 : vector<256x32xf32>
    %cst_90 = arith.constant dense<0.000000e+00> : vector<1x32xf32>
    %174 = tpu.matmul %0, %173, %cst_90 {dimension_numbers = #tpu.dot_dimension_numbers<[1], [0], [0], [1], [0, 0, 1, 1], [], []>} : vector<1x256xf32>, vector<256x32xf32>, vector<1x32xf32> -> vector<1x32xf32>
    %cst_91 = arith.constant 3.906250e-03 : f32
    %175 = vector.broadcast %cst_91 : f32 to vector<1x32xf32>
    %176 = arith.mulf %172, %175 : vector<1x32xf32>
    %cst_92 = arith.constant 3.906250e-03 : f32
    %177 = vector.broadcast %cst_92 : f32 to vector<1x32xf32>
    %178 = arith.mulf %174, %177 : vector<1x32xf32>
    %179 = arith.mulf %176, %176 : vector<1x32xf32>
    %180 = arith.subf %178, %179 : vector<1x32xf32>
    %cst_93 = arith.constant 0.000000e+00 : f32
    %181 = vector.broadcast %cst_93 : f32 to vector<1x32xf32>
    %182 = arith.maximumf %180, %181 : vector<1x32xf32>
    %c6 = arith.constant 6 : index
    %c0_94 = arith.constant 0 : index
    %183 = vector.load %arg4[%c6, %c0_94] : memref<8x32xf32, #tpu.memory_space<vmem>>, vector<1x32xf32>
    %cst_95 = arith.constant 9.99999974E-6 : f32
    %184 = vector.broadcast %cst_95 : f32 to vector<1x32xf32>
    %185 = arith.addf %182, %184 : vector<1x32xf32>
    %186 = math.rsqrt %185 : vector<1x32xf32>
    %187 = arith.mulf %183, %186 : vector<1x32xf32>
    %c6_96 = arith.constant 6 : index
    %c0_97 = arith.constant 0 : index
    %188 = vector.load %arg5[%c6_96, %c0_97] : memref<8x32xf32, #tpu.memory_space<vmem>>, vector<1x32xf32>
    %189 = arith.mulf %176, %187 : vector<1x32xf32>
    %190 = arith.subf %188, %189 : vector<1x32xf32>
    %191 = vector.broadcast %187 : vector<1x32xf32> to vector<256x32xf32>
    %192 = arith.mulf %171, %191 : vector<256x32xf32>
    %193 = vector.broadcast %190 : vector<1x32xf32> to vector<256x32xf32>
    %194 = arith.addf %192, %193 : vector<256x32xf32>
    %cst_98 = arith.constant 0.000000e+00 : f32
    %195 = vector.broadcast %cst_98 : f32 to vector<256x32xf32>
    %196 = arith.maximumf %194, %195 : vector<256x32xf32>
    %c6_99 = arith.constant 6 : index
    %c0_100 = arith.constant 0 : index
    %c0_101 = arith.constant 0 : index
    %197 = vector.load %arg3[%c6_99, %c0_100, %c0_101] : memref<7x32x32xf32, #tpu.memory_space<vmem>>, vector<1x32x32xf32>
    %198 = vector.shape_cast %197 : vector<1x32x32xf32> to vector<32x32xf32>
    %cst_102 = arith.constant dense<0.000000e+00> : vector<256x32xf32>
    %199 = tpu.matmul %196, %198, %cst_102 {dimension_numbers = #tpu.dot_dimension_numbers<[1], [0], [0], [1], [0, 0, 1, 1], [], []>} : vector<256x32xf32>, vector<32x32xf32>, vector<256x32xf32> -> vector<256x32xf32>
    %cst_103 = arith.constant dense<0.000000e+00> : vector<1x32xf32>
    %200 = tpu.matmul %0, %199, %cst_103 {dimension_numbers = #tpu.dot_dimension_numbers<[1], [0], [0], [1], [0, 0, 1, 1], [], []>} : vector<1x256xf32>, vector<256x32xf32>, vector<1x32xf32> -> vector<1x32xf32>
    %201 = arith.mulf %199, %199 : vector<256x32xf32>
    %cst_104 = arith.constant dense<0.000000e+00> : vector<1x32xf32>
    %202 = tpu.matmul %0, %201, %cst_104 {dimension_numbers = #tpu.dot_dimension_numbers<[1], [0], [0], [1], [0, 0, 1, 1], [], []>} : vector<1x256xf32>, vector<256x32xf32>, vector<1x32xf32> -> vector<1x32xf32>
    %cst_105 = arith.constant 3.906250e-03 : f32
    %203 = vector.broadcast %cst_105 : f32 to vector<1x32xf32>
    %204 = arith.mulf %200, %203 : vector<1x32xf32>
    %cst_106 = arith.constant 3.906250e-03 : f32
    %205 = vector.broadcast %cst_106 : f32 to vector<1x32xf32>
    %206 = arith.mulf %202, %205 : vector<1x32xf32>
    %207 = arith.mulf %204, %204 : vector<1x32xf32>
    %208 = arith.subf %206, %207 : vector<1x32xf32>
    %cst_107 = arith.constant 0.000000e+00 : f32
    %209 = vector.broadcast %cst_107 : f32 to vector<1x32xf32>
    %210 = arith.maximumf %208, %209 : vector<1x32xf32>
    %c7 = arith.constant 7 : index
    %c0_108 = arith.constant 0 : index
    %211 = vector.load %arg4[%c7, %c0_108] : memref<8x32xf32, #tpu.memory_space<vmem>>, vector<1x32xf32>
    %cst_109 = arith.constant 9.99999974E-6 : f32
    %212 = vector.broadcast %cst_109 : f32 to vector<1x32xf32>
    %213 = arith.addf %210, %212 : vector<1x32xf32>
    %214 = math.rsqrt %213 : vector<1x32xf32>
    %215 = arith.mulf %211, %214 : vector<1x32xf32>
    %c7_110 = arith.constant 7 : index
    %c0_111 = arith.constant 0 : index
    %216 = vector.load %arg5[%c7_110, %c0_111] : memref<8x32xf32, #tpu.memory_space<vmem>>, vector<1x32xf32>
    %217 = arith.mulf %204, %215 : vector<1x32xf32>
    %218 = arith.subf %216, %217 : vector<1x32xf32>
    %219 = vector.broadcast %215 : vector<1x32xf32> to vector<256x32xf32>
    %220 = arith.mulf %199, %219 : vector<256x32xf32>
    %221 = vector.broadcast %218 : vector<1x32xf32> to vector<256x32xf32>
    %222 = arith.addf %220, %221 : vector<256x32xf32>
    %cst_112 = arith.constant 0.000000e+00 : f32
    %223 = vector.broadcast %cst_112 : f32 to vector<256x32xf32>
    %224 = arith.maximumf %222, %223 : vector<256x32xf32>
    %c0_113 = arith.constant 0 : index
    %c0_114 = arith.constant 0 : index
    %225 = vector.load %arg6[%c0_113, %c0_114] : memref<1x32xf32, #tpu.memory_space<vmem>>, vector<1x32xf32>
    %226 = vector.broadcast %225 : vector<1x32xf32> to vector<256x32xf32>
    %227 = arith.mulf %224, %226 : vector<256x32xf32>
    %cst_115 = arith.constant dense<0.000000e+00> : vector<256xf32>
    %228 = vector.multi_reduction <add>, %227, %cst_115 [1] : vector<256x32xf32> to vector<256xf32>
    %229 = vector.shape_cast %228 : vector<256xf32> to vector<256x1xf32>
    %c0_116 = arith.constant 0 : index
    %c0_117 = arith.constant 0 : index
    %230 = vector.load %arg7[%c0_116, %c0_117] : memref<1x1xf32, #tpu.memory_space<vmem>>, vector<1x1xf32>
    %231 = vector.broadcast %230 : vector<1x1xf32> to vector<256x1xf32>
    %232 = arith.addf %229, %231 : vector<256x1xf32>
    %c0_118 = arith.constant 0 : index
    %c0_119 = arith.constant 0 : index
    %233 = vector.load %arg8[%c0_118, %c0_119] : memref<256x1xf32, #tpu.memory_space<vmem>>, vector<256x1xf32>
    tpu.vector_store %arg8[%c0_118, %c0_119], %232 {strides = array<i32>} : memref<256x1xf32, #tpu.memory_space<vmem>>, vector<256x1xf32>,
    return
  }
  func.func @transform_0(%arg0: i32) -> (i32, i32) {
    %c0_i32 = arith.constant 0 : i32
    %c0_i32_0 = arith.constant 0 : i32
    %c0_i32_1 = arith.constant 0 : i32
    return %c0_i32, %c0_i32_0 : i32, i32
  }
  func.func @transform_1(%arg0: i32) -> (i32, i32) {
    %c0_i32 = arith.constant 0 : i32
    %c0_i32_0 = arith.constant 0 : i32
    %c0_i32_1 = arith.constant 0 : i32
    return %c0_i32, %c0_i32_0 : i32, i32
  }
  func.func @transform_2(%arg0: i32) -> (i32, i32, i32) {
    %c0_i32 = arith.constant 0 : i32
    %c0_i32_0 = arith.constant 0 : i32
    %c0_i32_1 = arith.constant 0 : i32
    %c0_i32_2 = arith.constant 0 : i32
    return %c0_i32, %c0_i32_0, %c0_i32_1 : i32, i32, i32
  }
  func.func @transform_3(%arg0: i32) -> (i32, i32) {
    %c0_i32 = arith.constant 0 : i32
    %c0_i32_0 = arith.constant 0 : i32
    %c0_i32_1 = arith.constant 0 : i32
    return %c0_i32, %c0_i32_0 : i32, i32
  }
  func.func @transform_4(%arg0: i32) -> (i32, i32) {
    %c0_i32 = arith.constant 0 : i32
    %c0_i32_0 = arith.constant 0 : i32
    %c0_i32_1 = arith.constant 0 : i32
    return %c0_i32, %c0_i32_0 : i32, i32
  }
  func.func @transform_5(%arg0: i32) -> (i32, i32) {
    %c0_i32 = arith.constant 0 : i32
    %c0_i32_0 = arith.constant 0 : i32
    %c0_i32_1 = arith.constant 0 : i32
    return %c0_i32, %c0_i32_0 : i32, i32
  }
  func.func @transform_6(%arg0: i32) -> (i32, i32) {
    %c0_i32 = arith.constant 0 : i32
    %c0_i32_0 = arith.constant 0 : i32
    %c0_i32_1 = arith.constant 0 : i32
    return %c0_i32, %c0_i32_0 : i32, i32
  }
  func.func @transform_7(%arg0: i32) -> (i32, i32) {
    %c0_i32 = arith.constant 0 : i32
    %c0_i32_0 = arith.constant 0 : i32
    %c0_i32_1 = arith.constant 0 : i32
    return %c0_i32, %c0_i32_0 : i32, i32
  }
}

</mosaic_0001>

<llo_original>
// kernel: tpu_custom_call.1
$region0: #{tpu_custom_call.1}
  #allocation0 [shape = 'u32[]', space=smem, size = 0x4, offset = 0x4, fixed_abs, tag = 'smem constant byte address 0x4 - core index']
  #allocation1 [shape = 'u32[144,128]{1,0:T(1,128)}', space=vmem, size = 0x12000, scoped, tag = 'internal scratch']
  #allocation2 [shape = 'f32[1,1]{1,0:T(1,128)S(1)}', space=vmem, size = 0x200, scoped, tag = 'scoped memory for tpu_custom_call.1']
  %s0 = inlined_call_operand.hbm [shape: f32[256,128], index: 0, kind: input, shape index: {}]
  %s1 = inlined_call_operand.vmem [shape: f32[128,32], index: 1, kind: input, shape index: {}]
  %s2 = inlined_call_operand.hbm [shape: f32[7,32,32], index: 2, kind: input, shape index: {}]
  %s3 = inlined_call_operand.vmem [shape: f32[8,32], index: 3, kind: input, shape index: {}]
  %s4 = inlined_call_operand.vmem [shape: f32[8,32], index: 4, kind: input, shape index: {}]
  %s5 = inlined_call_operand.vmem [shape: f32[1,32], index: 5, kind: input, shape index: {}]
  %s6 = inlined_call_operand.<no memory space> [shape: f32[1,1], index: 6, kind: input, shape index: {}]
  %s7 = inlined_call_operand.vmem [shape: f32[256,1], index: 7, kind: output, shape index: {}]
  %s8 = sld [smem:[#allocation0]]
  $region46: #{tpu_custom_call.1} parent=0
    _
  %s10 = ssub.s32 1, %s8
  %s11 = scalar_select 0, %s10, %s8
  %v12 = vstv %s6
  %13 = vst [vmem:[#allocation2] sm:$0x1] %v12
  $region1: #{tpu_custom_call.1} parent=0
    #allocation3 [shape = 'u8[131072]{0}', space=vmem, size = 0x20000, scoped, tag = 'input window, operand 0, single buffered']
    #allocation4 [shape = 's32[1]{0}', space=sflag, size = 0x4, scoped, tag = 'scoped memory for tpu_custom_call.1']
    #allocation5 [shape = 'u8[114688]{0}', space=vmem, size = 0x1c000, scoped, tag = 'input window, operand 2, single buffered']
    #allocation6 [shape = 's32[1]{0}', space=sflag, size = 0x4, scoped, tag = 'scoped memory for tpu_custom_call.1']
    %14 = vsyncpa [#allocation4], 0
    %15 = vsyncpa [#allocation6], 0
    // Predicated region
    $region2: #{tpu_custom_call.1} parent=1 // pred_check
      _
    $region3: #{tpu_custom_call.1} parent=1 // pred_check_branch
      %17 = sbr.rel (0) target = $region5
    $region4: #{tpu_custom_call.1} parent=1 // pred_region
      %s19 = ssub.s32 4096, 4096
      %20 = vsyncadd [#allocation4], %s19
      %s21 = sshll.u32 [#allocation3], 4
      %s22 = int_to_ptr.vmem [resolvable:$true] %s21
      %27 = dma.hbm_to_vmem [thread:$0]  %s0, 4096, %s22, [#allocation4], 128, 128, 8
    $region5: #{tpu_custom_call.1} parent=1 // pred_fallthru
      _
    // Predicated region
    $region6: #{tpu_custom_call.1} parent=1 // pred_check
      _
    $region7: #{tpu_custom_call.1} parent=1 // pred_check_branch
      %29 = sbr.rel (0) target = $region9
    $region8: #{tpu_custom_call.1} parent=1 // pred_region
      _
    $region9: #{tpu_custom_call.1} parent=1 // pred_fallthru
      _
    // Predicated region
    $region10: #{tpu_custom_call.1} parent=1 // pred_check
      _
    $region11: #{tpu_custom_call.1} parent=1 // pred_check_branch
      %31 = sbr.rel (0) target = $region13
    $region12: #{tpu_custom_call.1} parent=1 // pred_region
      %s33 = ssub.s32 3584, 3584
      %34 = vsyncadd [#allocation6], %s33
      %s35 = sshll.u32 [#allocation5], 4
      %s36 = int_to_ptr.vmem [resolvable:$true] %s35
      %41 = dma.hbm_to_vmem [thread:$0]  %s2, 3584, %s36, [#allocation6], 128, 128, 8
    $region13: #{tpu_custom_call.1} parent=1 // pred_fallthru
      _
    // Predicated region
    $region14: #{tpu_custom_call.1} parent=1 // pred_check
      _
    $region15: #{tpu_custom_call.1} parent=1 // pred_check_branch
      %43 = sbr.rel (0) target = $region17
    $region16: #{tpu_custom_call.1} parent=1 // pred_region
      _
    $region17: #{tpu_custom_call.1} parent=1 // pred_fallthru
      _
    // Predicated region
    $region18: #{tpu_custom_call.1} parent=1 // pred_check
      _
    $region19: #{tpu_custom_call.1} parent=1 // pred_check_branch
      %45 = sbr.rel (0) target = $region21
    $region20: #{tpu_custom_call.1} parent=1 // pred_region
      _
    $region21: #{tpu_custom_call.1} parent=1 // pred_fallthru
      _
    // Predicated region
    $region22: #{tpu_custom_call.1} parent=1 // pred_check
      _
    $region23: #{tpu_custom_call.1} parent=1 // pred_check_branch
      %47 = sbr.rel (0) target = $region25
    $region24: #{tpu_custom_call.1} parent=1 // pred_region
      _
    $region25: #{tpu_custom_call.1} parent=1 // pred_fallthru
      _
    // Predicated region
    $region26: #{tpu_custom_call.1} parent=1 // pred_check
      _
    $region27: #{tpu_custom_call.1} parent=1 // pred_check_branch
      %49 = sbr.rel (0) target = $region29
    $region28: #{tpu_custom_call.1} parent=1 // pred_region
      _
    $region29: #{tpu_custom_call.1} parent=1 // pred_fallthru
      _
    // Predicated region
    $region30: #{tpu_custom_call.1} parent=1 // pred_check
      _
    $region31: #{tpu_custom_call.1} parent=1 // pred_check_branch
      %51 = sbr.rel (0) target = $region33
    $region32: #{tpu_custom_call.1} parent=1 // pred_region
      %52 = dma.done [#allocation4], 4096
    $region33: #{tpu_custom_call.1} parent=1 // pred_fallthru
      _
    // Predicated region
    $region34: #{tpu_custom_call.1} parent=1 // pred_check
      _
    $region35: #{tpu_custom_call.1} parent=1 // pred_check_branch
      %54 = sbr.rel (0) target = $region37
    $region36: #{tpu_custom_call.1} parent=1 // pred_region
      %55 = dma.done [#allocation6], 3584
    $region37: #{tpu_custom_call.1} parent=1 // pred_fallthru
      _
    %v56 = vld [vmem:[#allocation3] sm:$0xff]
    %v57 = vld [vmem:[#allocation3 + $0x8] sm:$0xff]
    %v58 = vld [vmem:[#allocation3 + $0x10] sm:$0xff]
    %v59 = vld [vmem:[#allocation3 + $0x18] sm:$0xff]
    %v60 = vld [vmem:[#allocation3 + $0x20] sm:$0xff]
    %v61 = vld [vmem:[#allocation3 + $0x28] sm:$0xff]
    %v62 = vld [vmem:[#allocation3 + $0x30] sm:$0xff]
    %v63 = vld [vmem:[#allocation3 + $0x38] sm:$0xff]
    %v64 = vld [vmem:[#allocation3 + $0x40] sm:$0xff]
    %v65 = vld [vmem:[#allocation3 + $0x48] sm:$0xff]
    %v66 = vld [vmem:[#allocation3 + $0x50] sm:$0xff]
    %v67 = vld [vmem:[#allocation3 + $0x58] sm:$0xff]
    %v68 = vld [vmem:[#allocation3 + $0x60] sm:$0xff]
    %v69 = vld [vmem:[#allocation3 + $0x68] sm:$0xff]
    %v70 = vld [vmem:[#allocation3 + $0x70] sm:$0xff]
    %v71 = vld [vmem:[#allocation3 + $0x78] sm:$0xff]
    %v72 = vld [vmem:[#allocation3 + $0x80] sm:$0xff]
    %v73 = vld [vmem:[#allocation3 + $0x88] sm:$0xff]
    %v74 = vld [vmem:[#allocation3 + $0x90] sm:$0xff]
    %v75 = vld [vmem:[#allocation3 + $0x98] sm:$0xff]
    %v76 = vld [vmem:[#allocation3 + $0xa0] sm:$0xff]
    %v77 = vld [vmem:[#allocation3 + $0xa8] sm:$0xff]
    %v78 = vld [vmem:[#allocation3 + $0xb0] sm:$0xff]
    %v79 = vld [vmem:[#allocation3 + $0xb8] sm:$0xff]
    %v80 = vld [vmem:[#allocation3 + $0xc0] sm:$0xff]
    %v81 = vld [vmem:[#allocation3 + $0xc8] sm:$0xff]
    %v82 = vld [vmem:[#allocation3 + $0xd0] sm:$0xff]
    %v83 = vld [vmem:[#allocation3 + $0xd8] sm:$0xff]
    %v84 = vld [vmem:[#allocation3 + $0xe0] sm:$0xff]
    %v85 = vld [vmem:[#allocation3 + $0xe8] sm:$0xff]
    %v86 = vld [vmem:[#allocation3 + $0xf0] sm:$0xff]
    %v87 = vld [vmem:[#allocation3 + $0xf8] sm:$0xff]
    %v88 = vld [vmem:[%s1] sm:$0xff]
    %v89 = vld [vmem:[%s1 + $0x8] sm:$0xff]
    %v90 = vld [vmem:[%s1 + $0x10] sm:$0xff]
    %v91 = vld [vmem:[%s1 + $0x18] sm:$0xff]
    %v92 = vld [vmem:[%s1 + $0x20] sm:$0xff]
    %v93 = vld [vmem:[%s1 + $0x28] sm:$0xff]
    %v94 = vld [vmem:[%s1 + $0x30] sm:$0xff]
    %v95 = vld [vmem:[%s1 + $0x38] sm:$0xff]
    %v96 = vld [vmem:[%s1 + $0x40] sm:$0xff]
    %v97 = vld [vmem:[%s1 + $0x48] sm:$0xff]
    %v98 = vld [vmem:[%s1 + $0x50] sm:$0xff]
    %v99 = vld [vmem:[%s1 + $0x58] sm:$0xff]
    %v100 = vld [vmem:[%s1 + $0x60] sm:$0xff]
    %v101 = vld [vmem:[%s1 + $0x68] sm:$0xff]
    %v102 = vld [vmem:[%s1 + $0x70] sm:$0xff]
    %v103 = vld [vmem:[%s1 + $0x78] sm:$0xff]
    %104 = vmatprep.subr.mxu0 0.0
    %105 = vmatpush1.msra.mxu0 %v103
    %106 = vmatprep.subr.mxu0 0.0
    %107 = vmatpush1.msra.mxu0 %v102
    %108 = vmatprep.subr.mxu0 0.0
    %109 = vmatpush1.msra.mxu0 %v101
    %110 = vmatprep.subr.mxu0 0.0
    %111 = vmatpush1.msra.mxu0 %v100
    %112 = vmatprep.subr.mxu0 0.0
    %113 = vmatpush1.msra.mxu0 %v99
    %114 = vmatprep.subr.mxu0 0.0
    %115 = vmatpush1.msra.mxu0 %v98
    %116 = vmatprep.subr.mxu0 0.0
    %117 = vmatpush1.msra.mxu0 %v97
    %118 = vmatprep.subr.mxu0 0.0
    %119 = vmatpush1.msra.mxu0 %v96
    %120 = vmatprep.subr.mxu0 0.0
    %121 = vmatpush1.msra.mxu0 %v95
    %122 = vmatprep.subr.mxu0 0.0
    %123 = vmatpush1.msra.mxu0 %v94
    %124 = vmatprep.subr.mxu0 0.0
    %125 = vmatpush1.msra.mxu0 %v93
    %126 = vmatprep.subr.mxu0 0.0
    %127 = vmatpush1.msra.mxu0 %v92
    %128 = vmatprep.subr.mxu0 0.0
    %129 = vmatpush1.msra.mxu0 %v91
    %130 = vmatprep.subr.mxu0 0.0
    %131 = vmatpush1.msra.mxu0 %v90
    %132 = vmatprep.subr.mxu0 0.0
    %133 = vmatpush1.msra.mxu0 %v89
    %134 = vmatprep.subr.mxu0 0.0
    %135 = vmatpush1.msra.mxu0 %v88
    %136 = vmatprep.subr.mxu0 0.0
    %137 = vmatpush2.msra.mxu0 0.0
    %138 = vmatprep.subr.mxu0 0.0
    %139 = vmatpush2.msra.mxu0 0.0
    %140 = vmatprep.subr.mxu0 0.0
    %141 = vmatpush2.msra.mxu0 0.0
    %142 = vmatprep.subr.mxu0 0.0
    %143 = vmatpush2.msra.mxu0 0.0
    %144 = vmatprep.subr.mxu0 0.0
    %145 = vmatpush2.msra.mxu0 0.0
    %146 = vmatprep.subr.mxu0 0.0
    %147 = vmatpush2.msra.mxu0 0.0
    %148 = vmatprep.subr.mxu0 0.0
    %149 = vmatpush2.msra.mxu0 0.0
    %150 = vmatprep.subr.mxu0 0.0
    %151 = vmatpush2.msra.mxu0 0.0
    %152 = vmatprep.subr.mxu0 0.0
    %153 = vmatpush2.msra.mxu0 0.0
    %154 = vmatprep.subr.mxu0 0.0
    %155 = vmatpush2.msra.mxu0 0.0
    %156 = vmatprep.subr.mxu0 0.0
    %157 = vmatpush2.msra.mxu0 0.0
    %158 = vmatprep.subr.mxu0 0.0
    %159 = vmatpush2.msra.mxu0 0.0
    %160 = vmatprep.subr.mxu0 0.0
    %161 = vmatpush2.msra.mxu0 0.0
    %162 = vmatprep.subr.mxu0 0.0
    %163 = vmatpush2.msra.mxu0 0.0
    %164 = vmatprep.subr.mxu0 0.0
    %165 = vmatpush2.msra.mxu0 0.0
    %166 = vmatprep.subr.mxu0 0.0
    %167 = vmatpush2.msra.mxu0 0.0
    %168 = vmatprep.mubr.f32.mxu0 0.0
    %169 = vmatmul.mubr.f32.gmra.mxu0 %v56
    %v170 = vpop.f32.mrf.mxu0
    %v171 = vadd.f32 0.0, %v170
    %v172 = vpop.f32.mrf.mxu0
    %173 = vmatprep.mubr.f32.mxu0 0.0
    %174 = vmatmul.mubr.f32.gmra.mxu0 %v57
    %v175 = vpop.f32.mrf.mxu0
    %v176 = vadd.f32 0.0, %v175
    %v177 = vpop.f32.mrf.mxu0
    %178 = vmatprep.mubr.f32.mxu0 0.0
    %179 = vmatmul.mubr.f32.gmra.mxu0 %v58
    %v180 = vpop.f32.mrf.mxu0
    %v181 = vadd.f32 0.0, %v180
    %v182 = vpop.f32.mrf.mxu0
    %183 = vmatprep.mubr.f32.mxu0 0.0
    %184 = vmatmul.mubr.f32.gmra.mxu0 %v59
    %v185 = vpop.f32.mrf.mxu0
    %v186 = vadd.f32 0.0, %v185
    %v187 = vpop.f32.mrf.mxu0
    %188 = vmatprep.mubr.f32.mxu0 0.0
    %189 = vmatmul.mubr.f32.gmra.mxu0 %v60
    %v190 = vpop.f32.mrf.mxu0
    %v191 = vadd.f32 0.0, %v190
    %v192 = vpop.f32.mrf.mxu0
    %193 = vmatprep.mubr.f32.mxu0 0.0
    %194 = vmatmul.mubr.f32.gmra.mxu0 %v61
    %v195 = vpop.f32.mrf.mxu0
    %v196 = vadd.f32 0.0, %v195
    %v197 = vpop.f32.mrf.mxu0
    %198 = vmatprep.mubr.f32.mxu0 0.0
    %199 = vmatmul.mubr.f32.gmra.mxu0 %v62
    %v200 = vpop.f32.mrf.mxu0
    %v201 = vadd.f32 0.0, %v200
    %v202 = vpop.f32.mrf.mxu0
    %203 = vmatprep.mubr.f32.mxu0 0.0
    %204 = vmatmul.mubr.f32.gmra.mxu0 %v63
    %v205 = vpop.f32.mrf.mxu0
    %v206 = vadd.f32 0.0, %v205
    %v207 = vpop.f32.mrf.mxu0
    %208 = vmatprep.mubr.f32.mxu0 0.0
    %209 = vmatmul.mubr.f32.gmra.mxu0 %v64
    %v210 = vpop.f32.mrf.mxu0
    %v211 = vadd.f32 0.0, %v210
    %v212 = vpop.f32.mrf.mxu0
    %213 = vmatprep.mubr.f32.mxu0 0.0
    %214 = vmatmul.mubr.f32.gmra.mxu0 %v65
    %v215 = vpop.f32.mrf.mxu0
    %v216 = vadd.f32 0.0, %v215
    %v217 = vpop.f32.mrf.mxu0
    %218 = vmatprep.mubr.f32.mxu0 0.0
    %219 = vmatmul.mubr.f32.gmra.mxu0 %v66
    %v220 = vpop.f32.mrf.mxu0
    %v221 = vadd.f32 0.0, %v220
    %v222 = vpop.f32.mrf.mxu0
    %223 = vmatprep.mubr.f32.mxu0 0.0
    %224 = vmatmul.mubr.f32.gmra.mxu0 %v67
    %v225 = vpop.f32.mrf.mxu0
    %v226 = vadd.f32 0.0, %v225
    %v227 = vpop.f32.mrf.mxu0
    %228 = vmatprep.mubr.f32.mxu0 0.0
    %229 = vmatmul.mubr.f32.gmra.mxu0 %v68
    %v230 = vpop.f32.mrf.mxu0
    %v231 = vadd.f32 0.0, %v230
    %v232 = vpop.f32.mrf.mxu0
    %233 = vmatprep.mubr.f32.mxu0 0.0
    %234 = vmatmul.mubr.f32.gmra.mxu0 %v69
    %v235 = vpop.f32.mrf.mxu0
    %v236 = vadd.f32 0.0, %v235
    %v237 = vpop.f32.mrf.mxu0
    %238 = vmatprep.mubr.f32.mxu0 0.0
    %239 = vmatmul.mubr.f32.gmra.mxu0 %v70
    %v240 = vpop.f32.mrf.mxu0
    %v241 = vadd.f32 0.0, %v240
    %v242 = vpop.f32.mrf.mxu0
    %243 = vmatprep.mubr.f32.mxu0 0.0
    %244 = vmatmul.mubr.f32.gmra.mxu0 %v71
    %v245 = vpop.f32.mrf.mxu0
    %v246 = vadd.f32 0.0, %v245
    %v247 = vpop.f32.mrf.mxu0
    %248 = vmatprep.mubr.f32.mxu0 0.0
    %249 = vmatmul.mubr.f32.gmra.mxu0 %v72
    %v250 = vpop.f32.mrf.mxu0
    %v251 = vadd.f32 0.0, %v250
    %v252 = vpop.f32.mrf.mxu0
    %253 = vmatprep.mubr.f32.mxu0 0.0
    %254 = vmatmul.mubr.f32.gmra.mxu0 %v73
    %v255 = vpop.f32.mrf.mxu0
    %v256 = vadd.f32 0.0, %v255
    %v257 = vpop.f32.mrf.mxu0
    %258 = vmatprep.mubr.f32.mxu0 0.0
    %259 = vmatmul.mubr.f32.gmra.mxu0 %v74
    %v260 = vpop.f32.mrf.mxu0
    %v261 = vadd.f32 0.0, %v260
    %v262 = vpop.f32.mrf.mxu0
    %263 = vmatprep.mubr.f32.mxu0 0.0
    %264 = vmatmul.mubr.f32.gmra.mxu0 %v75
    %v265 = vpop.f32.mrf.mxu0
    %v266 = vadd.f32 0.0, %v265
    %v267 = vpop.f32.mrf.mxu0
    %268 = vmatprep.mubr.f32.mxu0 0.0
    %269 = vmatmul.mubr.f32.gmra.mxu0 %v76
    %v270 = vpop.f32.mrf.mxu0
    %v271 = vadd.f32 0.0, %v270
    %v272 = vpop.f32.mrf.mxu0
    %273 = vmatprep.mubr.f32.mxu0 0.0
    %274 = vmatmul.mubr.f32.gmra.mxu0 %v77
    %v275 = vpop.f32.mrf.mxu0
    %v276 = vadd.f32 0.0, %v275
    %v277 = vpop.f32.mrf.mxu0
    %278 = vmatprep.mubr.f32.mxu0 0.0
    %279 = vmatmul.mubr.f32.gmra.mxu0 %v78
    %v280 = vpop.f32.mrf.mxu0
    %v281 = vadd.f32 0.0, %v280
    %v282 = vpop.f32.mrf.mxu0
    %283 = vmatprep.mubr.f32.mxu0 0.0
    %284 = vmatmul.mubr.f32.gmra.mxu0 %v79
    %v285 = vpop.f32.mrf.mxu0
    %v286 = vadd.f32 0.0, %v285
    %v287 = vpop.f32.mrf.mxu0
    %288 = vmatprep.mubr.f32.mxu0 0.0
    %289 = vmatmul.mubr.f32.gmra.mxu0 %v80
    %v290 = vpop.f32.mrf.mxu0
    %v291 = vadd.f32 0.0, %v290
    %v292 = vpop.f32.mrf.mxu0
    %293 = vmatprep.mubr.f32.mxu0 0.0
    %294 = vmatmul.mubr.f32.gmra.mxu0 %v81
    %v295 = vpop.f32.mrf.mxu0
    %v296 = vadd.f32 0.0, %v295
    %v297 = vpop.f32.mrf.mxu0
    %298 = vmatprep.mubr.f32.mxu0 0.0
    %299 = vmatmul.mubr.f32.gmra.mxu0 %v82
    %v300 = vpop.f32.mrf.mxu0
    %v301 = vadd.f32 0.0, %v300
    %v302 = vpop.f32.mrf.mxu0
    %303 = vmatprep.mubr.f32.mxu0 0.0
    %304 = vmatmul.mubr.f32.gmra.mxu0 %v83
    %v305 = vpop.f32.mrf.mxu0
    %v306 = vadd.f32 0.0, %v305
    %v307 = vpop.f32.mrf.mxu0
    %308 = vmatprep.mubr.f32.mxu0 0.0
    %309 = vmatmul.mubr.f32.gmra.mxu0 %v84
    %v310 = vpop.f32.mrf.mxu0
    %v311 = vadd.f32 0.0, %v310
    %v312 = vpop.f32.mrf.mxu0
    %313 = vmatprep.mubr.f32.mxu0 0.0
    %314 = vmatmul.mubr.f32.gmra.mxu0 %v85
    %v315 = vpop.f32.mrf.mxu0
    %v316 = vadd.f32 0.0, %v315
    %v317 = vpop.f32.mrf.mxu0
    %318 = vmatprep.mubr.f32.mxu0 0.0
    %319 = vmatmul.mubr.f32.gmra.mxu0 %v86
    %v320 = vpop.f32.mrf.mxu0
    %v321 = vadd.f32 0.0, %v320
    %v322 = vpop.f32.mrf.mxu0
    %323 = vmatprep.mubr.f32.mxu0 0.0
    %324 = vmatmul.mubr.f32.gmra.mxu0 %v87
    %v325 = vpop.f32.mrf.mxu0
    %v326 = vadd.f32 0.0, %v325
    %v327 = vpop.f32.mrf.mxu0
    %328 = vdwg.mxu0
    %329 = vmatprep.subr.mxu0 0.0
    %330 = vmatpush1.msra.mxu0 %v246
    %331 = vmatprep.subr.mxu0 0.0
    %332 = vmatpush1.msra.mxu0 %v241
    %333 = vmatprep.subr.mxu0 0.0
    %334 = vmatpush1.msra.mxu0 %v236
    %335 = vmatprep.subr.mxu0 0.0
    %336 = vmatpush1.msra.mxu0 %v231
    %337 = vmatprep.subr.mxu0 0.0
    %338 = vmatpush1.msra.mxu0 %v226
    %339 = vmatprep.subr.mxu0 0.0
    %340 = vmatpush1.msra.mxu0 %v221
    %341 = vmatprep.subr.mxu0 0.0
    %342 = vmatpush1.msra.mxu0 %v216
    %343 = vmatprep.subr.mxu0 0.0
    %344 = vmatpush1.msra.mxu0 %v211
    %345 = vmatprep.subr.mxu0 0.0
    %346 = vmatpush1.msra.mxu0 %v206
    %347 = vmatprep.subr.mxu0 0.0
    %348 = vmatpush1.msra.mxu0 %v201
    %349 = vmatprep.subr.mxu0 0.0
    %350 = vmatpush1.msra.mxu0 %v196
    %351 = vmatprep.subr.mxu0 0.0
    %352 = vmatpush1.msra.mxu0 %v191
    %353 = vmatprep.subr.mxu0 0.0
    %354 = vmatpush1.msra.mxu0 %v186
    %355 = vmatprep.subr.mxu0 0.0
    %356 = vmatpush1.msra.mxu0 %v181
    %357 = vmatprep.subr.mxu0 0.0
    %358 = vmatpush1.msra.mxu0 %v176
    %359 = vmatprep.subr.mxu0 0.0
    %360 = vmatpush1.msra.mxu0 %v171
    %361 = vmatprep.subr.mxu0 0.0
    %362 = vmatpush2.msra.mxu0 %v326
    %363 = vmatprep.subr.mxu0 0.0
    %364 = vmatpush2.msra.mxu0 %v321
    %365 = vmatprep.subr.mxu0 0.0
    %366 = vmatpush2.msra.mxu0 %v316
    %367 = vmatprep.subr.mxu0 0.0
    %368 = vmatpush2.msra.mxu0 %v311
    %369 = vmatprep.subr.mxu0 0.0
    %370 = vmatpush2.msra.mxu0 %v306
    %371 = vmatprep.subr.mxu0 0.0
    %372 = vmatpush2.msra.mxu0 %v301
    %373 = vmatprep.subr.mxu0 0.0
    %374 = vmatpush2.msra.mxu0 %v296
    %375 = vmatprep.subr.mxu0 0.0
    %376 = vmatpush2.msra.mxu0 %v291
    %377 = vmatprep.subr.mxu0 0.0
    %378 = vmatpush2.msra.mxu0 %v286
    %379 = vmatprep.subr.mxu0 0.0
    %380 = vmatpush2.msra.mxu0 %v281
    %381 = vmatprep.subr.mxu0 0.0
    %382 = vmatpush2.msra.mxu0 %v276
    %383 = vmatprep.subr.mxu0 0.0
    %384 = vmatpush2.msra.mxu0 %v271
    %385 = vmatprep.subr.mxu0 0.0
    %386 = vmatpush2.msra.mxu0 %v266
    %387 = vmatprep.subr.mxu0 0.0
    %388 = vmatpush2.msra.mxu0 %v261
    %389 = vmatprep.subr.mxu0 0.0
    %390 = vmatpush2.msra.mxu0 %v256
    %391 = vmatprep.subr.mxu0 0.0
    %392 = vmatpush2.msra.mxu0 %v251
    %393 = vmatprep.mubr.f32.mxu0 1.0
    %394 = vmatmul.mubr.f32.gmra.mxu0 1.0
    %v395 = vpop.f32.mrf.mxu0
    %v396 = vadd.f32 0.0, %v395
    %v397 = vpop.f32.mrf.mxu0
    %398 = vdwg.mxu0
    %v399 = vmul.f32 %v171, %v171
    %v400 = vmul.f32 %v176, %v176
    %v401 = vmul.f32 %v181, %v181
    %v402 = vmul.f32 %v186, %v186
    %v403 = vmul.f32 %v191, %v191
    %v404 = vmul.f32 %v196, %v196
    %v405 = vmul.f32 %v201, %v201
    %v406 = vmul.f32 %v206, %v206
    %v407 = vmul.f32 %v211, %v211
    %v408 = vmul.f32 %v216, %v216
    %v409 = vmul.f32 %v221, %v221
    %v410 = vmul.f32 %v226, %v226
    %v411 = vmul.f32 %v231, %v231
    %v412 = vmul.f32 %v236, %v236
    %v413 = vmul.f32 %v241, %v241
    %v414 = vmul.f32 %v246, %v246
    %v415 = vmul.f32 %v251, %v251
    %v416 = vmul.f32 %v256, %v256
    %v417 = vmul.f32 %v261, %v261
    %v418 = vmul.f32 %v266, %v266
    %v419 = vmul.f32 %v271, %v271
    %v420 = vmul.f32 %v276, %v276
    %v421 = vmul.f32 %v281, %v281
    %v422 = vmul.f32 %v286, %v286
    %v423 = vmul.f32 %v291, %v291
    %v424 = vmul.f32 %v296, %v296
    %v425 = vmul.f32 %v301, %v301
    %v426 = vmul.f32 %v306, %v306
    %v427 = vmul.f32 %v311, %v311
    %v428 = vmul.f32 %v316, %v316
    %v429 = vmul.f32 %v321, %v321
    %v430 = vmul.f32 %v326, %v326
    %431 = vmatprep.subr.mxu0 0.0
    %432 = vmatpush1.msra.mxu0 %v414
    %433 = vmatprep.subr.mxu0 0.0
    %434 = vmatpush1.msra.mxu0 %v413
    %435 = vmatprep.subr.mxu0 0.0
    %436 = vmatpush1.msra.mxu0 %v412
    %437 = vmatprep.subr.mxu0 0.0
    %438 = vmatpush1.msra.mxu0 %v411
    %439 = vmatprep.subr.mxu0 0.0
    %440 = vmatpush1.msra.mxu0 %v410
    %441 = vmatprep.subr.mxu0 0.0
    %442 = vmatpush1.msra.mxu0 %v409
    %443 = vmatprep.subr.mxu0 0.0
    %444 = vmatpush1.msra.mxu0 %v408
    %445 = vmatprep.subr.mxu0 0.0
    %446 = vmatpush1.msra.mxu0 %v407
    %447 = vmatprep.subr.mxu0 0.0
    %448 = vmatpush1.msra.mxu0 %v406
    %449 = vmatprep.subr.mxu0 0.0
    %450 = vmatpush1.msra.mxu0 %v405
    %451 = vmatprep.subr.mxu0 0.0
    %452 = vmatpush1.msra.mxu0 %v404
    %453 = vmatprep.subr.mxu0 0.0
    %454 = vmatpush1.msra.mxu0 %v403
    %455 = vmatprep.subr.mxu0 0.0
    %456 = vmatpush1.msra.mxu0 %v402
    %457 = vmatprep.subr.mxu0 0.0
    %458 = vmatpush1.msra.mxu0 %v401
    %459 = vmatprep.subr.mxu0 0.0
    %460 = vmatpush1.msra.mxu0 %v400
    %461 = vmatprep.subr.mxu0 0.0
    %462 = vmatpush1.msra.mxu0 %v399
    %463 = vmatprep.subr.mxu0 0.0
    %464 = vmatpush2.msra.mxu0 %v430
    %465 = vmatprep.subr.mxu0 0.0
    %466 = vmatpush2.msra.mxu0 %v429
    %467 = vmatprep.subr.mxu0 0.0
    %468 = vmatpush2.msra.mxu0 %v428
    %469 = vmatprep.subr.mxu0 0.0
    %470 = vmatpush2.msra.mxu0 %v427
    %471 = vmatprep.subr.mxu0 0.0
    %472 = vmatpush2.msra.mxu0 %v426
    %473 = vmatprep.subr.mxu0 0.0
    %474 = vmatpush2.msra.mxu0 %v425
    %475 = vmatprep.subr.mxu0 0.0
    %476 = vmatpush2.msra.mxu0 %v424
    %477 = vmatprep.subr.mxu0 0.0
    %478 = vmatpush2.msra.mxu0 %v423
    %479 = vmatprep.subr.mxu0 0.0
    %480 = vmatpush2.msra.mxu0 %v422
    %481 = vmatprep.subr.mxu0 0.0
    %482 = vmatpush2.msra.mxu0 %v421
    %483 = vmatprep.subr.mxu0 0.0
    %484 = vmatpush2.msra.mxu0 %v420
    %485 = vmatprep.subr.mxu0 0.0
    %486 = vmatpush2.msra.mxu0 %v419
    %487 = vmatprep.subr.mxu0 0.0
    %488 = vmatpush2.msra.mxu0 %v418
    %489 = vmatprep.subr.mxu0 0.0
    %490 = vmatpush2.msra.mxu0 %v417
    %491 = vmatprep.subr.mxu0 0.0
    %492 = vmatpush2.msra.mxu0 %v416
    %493 = vmatprep.subr.mxu0 0.0
    %494 = vmatpush2.msra.mxu0 %v415
    %495 = vmatprep.mubr.f32.mxu0 1.0
    %496 = vmatmul.mubr.f32.gmra.mxu0 1.0
    %v497 = vpop.f32.mrf.mxu0
    %v498 = vadd.f32 0.0, %v497
    %v499 = vpop.f32.mrf.mxu0
    %500 = vdwg.mxu0
    %v501 = vmul.f32 %v396, 0.00390625
    %v502 = vmul.f32 %v498, 0.00390625
    %v503 = vmul.f32 %v501, %v501
    %v504 = vsub.f32 %v502, %v503
    %v505 = vmax.f32 %v504, 0.0
    %v506 = vld [vmem:[%s3] sm:$0x1]
    %v507 = vadd.f32 %v505, 1e-05
    %v508 = vrsqrt.pop %v507
    %v509 = vmul.f32 %v506, %v508
    %v510 = vld [vmem:[%s4] sm:$0x1]
    %v511 = vmul.f32 %v501, %v509
    %v512 = vsub.f32 %v510, %v511
    %v513 = vlaneseq
    %v514 = vshrl.u32 %v513, 7
    %v515 = vsub.s32 0, %v514
    %v516 = vrot.slane %v509, %v515
    %v517 = vmul.f32 %v171, %v516
    %v518 = vmul.f32 %v176, %v516
    %v519 = vmul.f32 %v181, %v516
    %v520 = vmul.f32 %v186, %v516
    %v521 = vmul.f32 %v191, %v516
    %v522 = vmul.f32 %v196, %v516
    %v523 = vmul.f32 %v201, %v516
    %v524 = vmul.f32 %v206, %v516
    %v525 = vmul.f32 %v211, %v516
    %v526 = vmul.f32 %v216, %v516
    %v527 = vmul.f32 %v221, %v516
    %v528 = vmul.f32 %v226, %v516
    %v529 = vmul.f32 %v231, %v516
    %v530 = vmul.f32 %v236, %v516
    %v531 = vmul.f32 %v241, %v516
    %v532 = vmul.f32 %v246, %v516
    %v533 = vmul.f32 %v251, %v516
    %v534 = vmul.f32 %v256, %v516
    %v535 = vmul.f32 %v261, %v516
    %v536 = vmul.f32 %v266, %v516
    %v537 = vmul.f32 %v271, %v516
    %v538 = vmul.f32 %v276, %v516
    %v539 = vmul.f32 %v281, %v516
    %v540 = vmul.f32 %v286, %v516
    %v541 = vmul.f32 %v291, %v516
    %v542 = vmul.f32 %v296, %v516
    %v543 = vmul.f32 %v301, %v516
    %v544 = vmul.f32 %v306, %v516
    %v545 = vmul.f32 %v311, %v516
    %v546 = vmul.f32 %v316, %v516
    %v547 = vmul.f32 %v321, %v516
    %v548 = vmul.f32 %v326, %v516
    %v549 = vlaneseq
    %v550 = vshrl.u32 %v549, 7
    %v551 = vsub.s32 0, %v550
    %v552 = vrot.slane %v512, %v551
    %v553 = vadd.f32 %v517, %v552
    %v554 = vadd.f32 %v518, %v552
    %v555 = vadd.f32 %v519, %v552
    %v556 = vadd.f32 %v520, %v552
    %v557 = vadd.f32 %v521, %v552
    %v558 = vadd.f32 %v522, %v552
    %v559 = vadd.f32 %v523, %v552
    %v560 = vadd.f32 %v524, %v552
    %v561 = vadd.f32 %v525, %v552
    %v562 = vadd.f32 %v526, %v552
    %v563 = vadd.f32 %v527, %v552
    %v564 = vadd.f32 %v528, %v552
    %v565 = vadd.f32 %v529, %v552
    %v566 = vadd.f32 %v530, %v552
    %v567 = vadd.f32 %v531, %v552
    %v568 = vadd.f32 %v532, %v552
    %v569 = vadd.f32 %v533, %v552
    %v570 = vadd.f32 %v534, %v552
    %v571 = vadd.f32 %v535, %v552
    %v572 = vadd.f32 %v536, %v552
    %v573 = vadd.f32 %v537, %v552
    %v574 = vadd.f32 %v538, %v552
    %v575 = vadd.f32 %v539, %v552
    %v576 = vadd.f32 %v540, %v552
    %v577 = vadd.f32 %v541, %v552
    %v578 = vadd.f32 %v542, %v552
    %v579 = vadd.f32 %v543, %v552
    %v580 = vadd.f32 %v544, %v552
    %v581 = vadd.f32 %v545, %v552
    %v582 = vadd.f32 %v546, %v552
    %v583 = vadd.f32 %v547, %v552
    %v584 = vadd.f32 %v548, %v552
    %v585 = vmax.f32 %v553, 0.0
    %v586 = vmax.f32 %v554, 0.0
    %v587 = vmax.f32 %v555, 0.0
    %v588 = vmax.f32 %v556, 0.0
    %v589 = vmax.f32 %v557, 0.0
    %v590 = vmax.f32 %v558, 0.0
    %v591 = vmax.f32 %v559, 0.0
    %v592 = vmax.f32 %v560, 0.0
    %v593 = vmax.f32 %v561, 0.0
    %v594 = vmax.f32 %v562, 0.0
    %v595 = vmax.f32 %v563, 0.0
    %v596 = vmax.f32 %v564, 0.0
    %v597 = vmax.f32 %v565, 0.0
    %v598 = vmax.f32 %v566, 0.0
    %v599 = vmax.f32 %v567, 0.0
    %v600 = vmax.f32 %v568, 0.0
    %v601 = vmax.f32 %v569, 0.0
    %v602 = vmax.f32 %v570, 0.0
    %v603 = vmax.f32 %v571, 0.0
    %v604 = vmax.f32 %v572, 0.0
    %v605 = vmax.f32 %v573, 0.0
    %v606 = vmax.f32 %v574, 0.0
    %v607 = vmax.f32 %v575, 0.0
    %v608 = vmax.f32 %v576, 0.0
    %v609 = vmax.f32 %v577, 0.0
    %v610 = vmax.f32 %v578, 0.0
    %v611 = vmax.f32 %v579, 0.0
    %v612 = vmax.f32 %v580, 0.0
    %v613 = vmax.f32 %v581, 0.0
    %v614 = vmax.f32 %v582, 0.0
    %v615 = vmax.f32 %v583, 0.0
    %v616 = vmax.f32 %v584, 0.0
    %v617 = vld [vmem:[#allocation5] sm:$0xff]
    %v618 = vld [vmem:[#allocation5 + $0x8] sm:$0xff]
    %v619 = vld [vmem:[#allocation5 + $0x10] sm:$0xff]
    %v620 = vld [vmem:[#allocation5 + $0x18] sm:$0xff]
    %vm621 = vcmask 261120
    %v623 = vsel %vm621, %v585, 0
    %v626 = vsel %vm621, %v586, 0
    %v629 = vsel %vm621, %v587, 0
    %v632 = vsel %vm621, %v588, 0
    %v635 = vsel %vm621, %v589, 0
    %v638 = vsel %vm621, %v590, 0
    %v641 = vsel %vm621, %v591, 0
    %v644 = vsel %vm621, %v592, 0
    %v647 = vsel %vm621, %v593, 0
    %v650 = vsel %vm621, %v594, 0
    %v653 = vsel %vm621, %v595, 0
    %v656 = vsel %vm621, %v596, 0
    %v659 = vsel %vm621, %v597, 0
    %v662 = vsel %vm621, %v598, 0
    %v665 = vsel %vm621, %v599, 0
    %v668 = vsel %vm621, %v600, 0
    %v671 = vsel %vm621, %v601, 0
    %v674 = vsel %vm621, %v602, 0
    %v677 = vsel %vm621, %v603, 0
    %v680 = vsel %vm621, %v604, 0
    %v683 = vsel %vm621, %v605, 0
    %v686 = vsel %vm621, %v606, 0
    %v689 = vsel %vm621, %v607, 0
    %v692 = vsel %vm621, %v608, 0
    %v695 = vsel %vm621, %v609, 0
    %v698 = vsel %vm621, %v610, 0
    %v701 = vsel %vm621, %v611, 0
    %v704 = vsel %vm621, %v612, 0
    %v707 = vsel %vm621, %v613, 0
    %v710 = vsel %vm621, %v614, 0
    %v713 = vsel %vm621, %v615, 0
    %v716 = vsel %vm621, %v616, 0
    %718 = vmatprep.subr.mxu0 0.0
    %719 = vmatpush1.msra.mxu0 0.0
    %720 = vmatprep.subr.mxu0 0.0
    %721 = vmatpush1.msra.mxu0 0.0
    %722 = vmatprep.subr.mxu0 0.0
    %723 = vmatpush1.msra.mxu0 0.0
    %724 = vmatprep.subr.mxu0 0.0
    %725 = vmatpush1.msra.mxu0 0.0
    %726 = vmatprep.subr.mxu0 0.0
    %727 = vmatpush1.msra.mxu0 0.0
    %728 = vmatprep.subr.mxu0 0.0
    %729 = vmatpush1.msra.mxu0 0.0
    %730 = vmatprep.subr.mxu0 0.0
    %731 = vmatpush1.msra.mxu0 0.0
    %732 = vmatprep.subr.mxu0 0.0
    %733 = vmatpush1.msra.mxu0 0.0
    %734 = vmatprep.subr.mxu0 0.0
    %735 = vmatpush1.msra.mxu0 0.0
    %736 = vmatprep.subr.mxu0 0.0
    %737 = vmatpush1.msra.mxu0 0.0
    %738 = vmatprep.subr.mxu0 0.0
    %739 = vmatpush1.msra.mxu0 0.0
    %740 = vmatprep.subr.mxu0 0.0
    %741 = vmatpush1.msra.mxu0 0.0
    %742 = vmatprep.subr.mxu0 0.0
    %743 = vmatpush1.msra.mxu0 %v620
    %744 = vmatprep.subr.mxu0 0.0
    %745 = vmatpush1.msra.mxu0 %v619
    %746 = vmatprep.subr.mxu0 0.0
    %747 = vmatpush1.msra.mxu0 %v618
    %748 = vmatprep.subr.mxu0 0.0
    %749 = vmatpush1.msra.mxu0 %v617
    %750 = vmatprep.subr.mxu0 0.0
    %751 = vmatpush2.msra.mxu0 0.0
    %752 = vmatprep.subr.mxu0 0.0
    %753 = vmatpush2.msra.mxu0 0.0
    %754 = vmatprep.subr.mxu0 0.0
    %755 = vmatpush2.msra.mxu0 0.0
    %756 = vmatprep.subr.mxu0 0.0
    %757 = vmatpush2.msra.mxu0 0.0
    %758 = vmatprep.subr.mxu0 0.0
    %759 = vmatpush2.msra.mxu0 0.0
    %760 = vmatprep.subr.mxu0 0.0
    %761 = vmatpush2.msra.mxu0 0.0
    %762 = vmatprep.subr.mxu0 0.0
    %763 = vmatpush2.msra.mxu0 0.0
    %764 = vmatprep.subr.mxu0 0.0
    %765 = vmatpush2.msra.mxu0 0.0
    %766 = vmatprep.subr.mxu0 0.0
    %767 = vmatpush2.msra.mxu0 0.0
    %768 = vmatprep.subr.mxu0 0.0
    %769 = vmatpush2.msra.mxu0 0.0
    %770 = vmatprep.subr.mxu0 0.0
    %771 = vmatpush2.msra.mxu0 0.0
    %772 = vmatprep.subr.mxu0 0.0
    %773 = vmatpush2.msra.mxu0 0.0
    %774 = vmatprep.subr.mxu0 0.0
    %775 = vmatpush2.msra.mxu0 0.0
    %776 = vmatprep.subr.mxu0 0.0
    %777 = vmatpush2.msra.mxu0 0.0
    %778 = vmatprep.subr.mxu0 0.0
    %779 = vmatpush2.msra.mxu0 0.0
    %780 = vmatprep.subr.mxu0 0.0
    %781 = vmatpush2.msra.mxu0 0.0
    %782 = vmatprep.mubr.f32.mxu0 0.0
    %783 = vmatmul.mubr.f32.gmra.mxu0 %v623
    %v784 = vpop.f32.mrf.mxu0
    %v785 = vadd.f32 0.0, %v784
    %v786 = vpop.f32.mrf.mxu0
    %787 = vmatprep.mubr.f32.mxu0 0.0
    %788 = vmatmul.mubr.f32.gmra.mxu0 %v626
    %v789 = vpop.f32.mrf.mxu0
    %v790 = vadd.f32 0.0, %v789
    %v791 = vpop.f32.mrf.mxu0
    %792 = vmatprep.mubr.f32.mxu0 0.0
    %793 = vmatmul.mubr.f32.gmra.mxu0 %v629
    %v794 = vpop.f32.mrf.mxu0
    %v795 = vadd.f32 0.0, %v794
    %v796 = vpop.f32.mrf.mxu0
    %797 = vmatprep.mubr.f32.mxu0 0.0
    %798 = vmatmul.mubr.f32.gmra.mxu0 %v632
    %v799 = vpop.f32.mrf.mxu0
    %v800 = vadd.f32 0.0, %v799
    %v801 = vpop.f32.mrf.mxu0
    %802 = vmatprep.mubr.f32.mxu0 0.0
    %803 = vmatmul.mubr.f32.gmra.mxu0 %v635
    %v804 = vpop.f32.mrf.mxu0
    %v805 = vadd.f32 0.0, %v804
    %v806 = vpop.f32.mrf.mxu0
    %807 = vmatprep.mubr.f32.mxu0 0.0
    %808 = vmatmul.mubr.f32.gmra.mxu0 %v638
    %v809 = vpop.f32.mrf.mxu0
    %v810 = vadd.f32 0.0, %v809
    %v811 = vpop.f32.mrf.mxu0
    %812 = vmatprep.mubr.f32.mxu0 0.0
    %813 = vmatmul.mubr.f32.gmra.mxu0 %v641
    %v814 = vpop.f32.mrf.mxu0
    %v815 = vadd.f32 0.0, %v814
    %v816 = vpop.f32.mrf.mxu0
    %817 = vmatprep.mubr.f32.mxu0 0.0
    %818 = vmatmul.mubr.f32.gmra.mxu0 %v644
    %v819 = vpop.f32.mrf.mxu0
    %v820 = vadd.f32 0.0, %v819
    %v821 = vpop.f32.mrf.mxu0
    %822 = vmatprep.mubr.f32.mxu0 0.0
    %823 = vmatmul.mubr.f32.gmra.mxu0 %v647
    %v824 = vpop.f32.mrf.mxu0
    %v825 = vadd.f32 0.0, %v824
    %v826 = vpop.f32.mrf.mxu0
    %827 = vmatprep.mubr.f32.mxu0 0.0
    %828 = vmatmul.mubr.f32.gmra.mxu0 %v650
    %v829 = vpop.f32.mrf.mxu0
    %v830 = vadd.f32 0.0, %v829
    %v831 = vpop.f32.mrf.mxu0
    %832 = vmatprep.mubr.f32.mxu0 0.0
    %833 = vmatmul.mubr.f32.gmra.mxu0 %v653
    %v834 = vpop.f32.mrf.mxu0
    %v835 = vadd.f32 0.0, %v834
    %v836 = vpop.f32.mrf.mxu0
    %837 = vmatprep.mubr.f32.mxu0 0.0
    %838 = vmatmul.mubr.f32.gmra.mxu0 %v656
    %v839 = vpop.f32.mrf.mxu0
    %v840 = vadd.f32 0.0, %v839
    %v841 = vpop.f32.mrf.mxu0
    %842 = vmatprep.mubr.f32.mxu0 0.0
    %843 = vmatmul.mubr.f32.gmra.mxu0 %v659
    %v844 = vpop.f32.mrf.mxu0
    %v845 = vadd.f32 0.0, %v844
    %v846 = vpop.f32.mrf.mxu0
    %847 = vmatprep.mubr.f32.mxu0 0.0
    %848 = vmatmul.mubr.f32.gmra.mxu0 %v662
    %v849 = vpop.f32.mrf.mxu0
    %v850 = vadd.f32 0.0, %v849
    %v851 = vpop.f32.mrf.mxu0
    %852 = vmatprep.mubr.f32.mxu0 0.0
    %853 = vmatmul.mubr.f32.gmra.mxu0 %v665
    %v854 = vpop.f32.mrf.mxu0
    %v855 = vadd.f32 0.0, %v854
    %v856 = vpop.f32.mrf.mxu0
    %857 = vmatprep.mubr.f32.mxu0 0.0
    %858 = vmatmul.mubr.f32.gmra.mxu0 %v668
    %v859 = vpop.f32.mrf.mxu0
    %v860 = vadd.f32 0.0, %v859
    %v861 = vpop.f32.mrf.mxu0
    %862 = vmatprep.mubr.f32.mxu0 0.0
    %863 = vmatmul.mubr.f32.gmra.mxu0 %v671
    %v864 = vpop.f32.mrf.mxu0
    %v865 = vadd.f32 0.0, %v864
    %v866 = vpop.f32.mrf.mxu0
    %867 = vmatprep.mubr.f32.mxu0 0.0
    %868 = vmatmul.mubr.f32.gmra.mxu0 %v674
    %v869 = vpop.f32.mrf.mxu0
    %v870 = vadd.f32 0.0, %v869
    %v871 = vpop.f32.mrf.mxu0
    %872 = vmatprep.mubr.f32.mxu0 0.0
    %873 = vmatmul.mubr.f32.gmra.mxu0 %v677
    %v874 = vpop.f32.mrf.mxu0
    %v875 = vadd.f32 0.0, %v874
    %v876 = vpop.f32.mrf.mxu0
    %877 = vmatprep.mubr.f32.mxu0 0.0
    %878 = vmatmul.mubr.f32.gmra.mxu0 %v680
    %v879 = vpop.f32.mrf.mxu0
    %v880 = vadd.f32 0.0, %v879
    %v881 = vpop.f32.mrf.mxu0
    %882 = vmatprep.mubr.f32.mxu0 0.0
    %883 = vmatmul.mubr.f32.gmra.mxu0 %v683
    %v884 = vpop.f32.mrf.mxu0
    %v885 = vadd.f32 0.0, %v884
    %v886 = vpop.f32.mrf.mxu0
    %887 = vmatprep.mubr.f32.mxu0 0.0
    %888 = vmatmul.mubr.f32.gmra.mxu0 %v686
    %v889 = vpop.f32.mrf.mxu0
    %v890 = vadd.f32 0.0, %v889
    %v891 = vpop.f32.mrf.mxu0
    %892 = vmatprep.mubr.f32.mxu0 0.0
    %893 = vmatmul.mubr.f32.gmra.mxu0 %v689
    %v894 = vpop.f32.mrf.mxu0
    %v895 = vadd.f32 0.0, %v894
    %v896 = vpop.f32.mrf.mxu0
    %897 = vmatprep.mubr.f32.mxu0 0.0
    %898 = vmatmul.mubr.f32.gmra.mxu0 %v692
    %v899 = vpop.f32.mrf.mxu0
    %v900 = vadd.f32 0.0, %v899
    %v901 = vpop.f32.mrf.mxu0
    %902 = vmatprep.mubr.f32.mxu0 0.0
    %903 = vmatmul.mubr.f32.gmra.mxu0 %v695
    %v904 = vpop.f32.mrf.mxu0
    %v905 = vadd.f32 0.0, %v904
    %v906 = vpop.f32.mrf.mxu0
    %907 = vmatprep.mubr.f32.mxu0 0.0
    %908 = vmatmul.mubr.f32.gmra.mxu0 %v698
    %v909 = vpop.f32.mrf.mxu0
    %v910 = vadd.f32 0.0, %v909
    %v911 = vpop.f32.mrf.mxu0
    %912 = vmatprep.mubr.f32.mxu0 0.0
    %913 = vmatmul.mubr.f32.gmra.mxu0 %v701
    %v914 = vpop.f32.mrf.mxu0
    %v915 = vadd.f32 0.0, %v914
    %v916 = vpop.f32.mrf.mxu0
    %917 = vmatprep.mubr.f32.mxu0 0.0
    %918 = vmatmul.mubr.f32.gmra.mxu0 %v704
    %v919 = vpop.f32.mrf.mxu0
    %v920 = vadd.f32 0.0, %v919
    %v921 = vpop.f32.mrf.mxu0
    %922 = vmatprep.mubr.f32.mxu0 0.0
    %923 = vmatmul.mubr.f32.gmra.mxu0 %v707
    %v924 = vpop.f32.mrf.mxu0
    %v925 = vadd.f32 0.0, %v924
    %v926 = vpop.f32.mrf.mxu0
    %927 = vmatprep.mubr.f32.mxu0 0.0
    %928 = vmatmul.mubr.f32.gmra.mxu0 %v710
    %v929 = vpop.f32.mrf.mxu0
    %v930 = vadd.f32 0.0, %v929
    %v931 = vpop.f32.mrf.mxu0
    %932 = vmatprep.mubr.f32.mxu0 0.0
    %933 = vmatmul.mubr.f32.gmra.mxu0 %v713
    %v934 = vpop.f32.mrf.mxu0
    %v935 = vadd.f32 0.0, %v934
    %v936 = vpop.f32.mrf.mxu0
    %937 = vmatprep.mubr.f32.mxu0 0.0
    %938 = vmatmul.mubr.f32.gmra.mxu0 %v716
    %v939 = vpop.f32.mrf.mxu0
    %v940 = vadd.f32 0.0, %v939
    %v941 = vpop.f32.mrf.mxu0
    %942 = vdwg.mxu0
    %943 = vmatprep.subr.mxu0 0.0
    %944 = vmatpush1.msra.mxu0 %v860
    %945 = vmatprep.subr.mxu0 0.0
    %946 = vmatpush1.msra.mxu0 %v855
    %947 = vmatprep.subr.mxu0 0.0
    %948 = vmatpush1.msra.mxu0 %v850
    %949 = vmatprep.subr.mxu0 0.0
    %950 = vmatpush1.msra.mxu0 %v845
    %951 = vmatprep.subr.mxu0 0.0
    %952 = vmatpush1.msra.mxu0 %v840
    %953 = vmatprep.subr.mxu0 0.0
    %954 = vmatpush1.msra.mxu0 %v835
    %955 = vmatprep.subr.mxu0 0.0
    %956 = vmatpush1.msra.mxu0 %v830
    %957 = vmatprep.subr.mxu0 0.0
    %958 = vmatpush1.msra.mxu0 %v825
    %959 = vmatprep.subr.mxu0 0.0
    %960 = vmatpush1.msra.mxu0 %v820
    %961 = vmatprep.subr.mxu0 0.0
    %962 = vmatpush1.msra.mxu0 %v815
    %963 = vmatprep.subr.mxu0 0.0
    %964 = vmatpush1.msra.mxu0 %v810
    %965 = vmatprep.subr.mxu0 0.0
    %966 = vmatpush1.msra.mxu0 %v805
    %967 = vmatprep.subr.mxu0 0.0
    %968 = vmatpush1.msra.mxu0 %v800
    %969 = vmatprep.subr.mxu0 0.0
    %970 = vmatpush1.msra.mxu0 %v795
    %971 = vmatprep.subr.mxu0 0.0
    %972 = vmatpush1.msra.mxu0 %v790
    %973 = vmatprep.subr.mxu0 0.0
    %974 = vmatpush1.msra.mxu0 %v785
    %975 = vmatprep.subr.mxu0 0.0
    %976 = vmatpush2.msra.mxu0 %v940
    %977 = vmatprep.subr.mxu0 0.0
    %978 = vmatpush2.msra.mxu0 %v935
    %979 = vmatprep.subr.mxu0 0.0
    %980 = vmatpush2.msra.mxu0 %v930
    %981 = vmatprep.subr.mxu0 0.0
    %982 = vmatpush2.msra.mxu0 %v925
    %983 = vmatprep.subr.mxu0 0.0
    %984 = vmatpush2.msra.mxu0 %v920
    %985 = vmatprep.subr.mxu0 0.0
    %986 = vmatpush2.msra.mxu0 %v915
    %987 = vmatprep.subr.mxu0 0.0
    %988 = vmatpush2.msra.mxu0 %v910
    %989 = vmatprep.subr.mxu0 0.0
    %990 = vmatpush2.msra.mxu0 %v905
    %991 = vmatprep.subr.mxu0 0.0
    %992 = vmatpush2.msra.mxu0 %v900
    %993 = vmatprep.subr.mxu0 0.0
    %994 = vmatpush2.msra.mxu0 %v895
    %995 = vmatprep.subr.mxu0 0.0
    %996 = vmatpush2.msra.mxu0 %v890
    %997 = vmatprep.subr.mxu0 0.0
    %998 = vmatpush2.msra.mxu0 %v885
    %999 = vmatprep.subr.mxu0 0.0
    %1000 = vmatpush2.msra.mxu0 %v880
    %1001 = vmatprep.subr.mxu0 0.0
    %1002 = vmatpush2.msra.mxu0 %v875
    %1003 = vmatprep.subr.mxu0 0.0
    %1004 = vmatpush2.msra.mxu0 %v870
    %1005 = vmatprep.subr.mxu0 0.0
    %1006 = vmatpush2.msra.mxu0 %v865
    %1007 = vmatprep.mubr.f32.mxu0 1.0
    %1008 = vmatmul.mubr.f32.gmra.mxu0 1.0
    %v1009 = vpop.f32.mrf.mxu0
    %v1010 = vadd.f32 0.0, %v1009
    %v1011 = vpop.f32.mrf.mxu0
    %1012 = vdwg.mxu0
    %v1013 = vmul.f32 %v785, %v785
    %v1014 = vmul.f32 %v790, %v790
    %v1015 = vmul.f32 %v795, %v795
    %v1016 = vmul.f32 %v800, %v800
    %v1017 = vmul.f32 %v805, %v805
    %v1018 = vmul.f32 %v810, %v810
    %v1019 = vmul.f32 %v815, %v815
    %v1020 = vmul.f32 %v820, %v820
    %v1021 = vmul.f32 %v825, %v825
    %v1022 = vmul.f32 %v830, %v830
    %v1023 = vmul.f32 %v835, %v835
    %v1024 = vmul.f32 %v840, %v840
    %v1025 = vmul.f32 %v845, %v845
    %v1026 = vmul.f32 %v850, %v850
    %v1027 = vmul.f32 %v855, %v855
    %v1028 = vmul.f32 %v860, %v860
    %v1029 = vmul.f32 %v865, %v865
    %v1030 = vmul.f32 %v870, %v870
    %v1031 = vmul.f32 %v875, %v875
    %v1032 = vmul.f32 %v880, %v880
    %v1033 = vmul.f32 %v885, %v885
    %v1034 = vmul.f32 %v890, %v890
    %v1035 = vmul.f32 %v895, %v895
    %v1036 = vmul.f32 %v900, %v900
    %v1037 = vmul.f32 %v905, %v905
    %v1038 = vmul.f32 %v910, %v910
    %v1039 = vmul.f32 %v915, %v915
    %v1040 = vmul.f32 %v920, %v920
    %v1041 = vmul.f32 %v925, %v925
    %v1042 = vmul.f32 %v930, %v930
    %v1043 = vmul.f32 %v935, %v935
    %v1044 = vmul.f32 %v940, %v940
    %1045 = vmatprep.subr.mxu0 0.0
    %1046 = vmatpush1.msra.mxu0 %v1028
    %1047 = vmatprep.subr.mxu0 0.0
    %1048 = vmatpush1.msra.mxu0 %v1027
    %1049 = vmatprep.subr.mxu0 0.0
    %1050 = vmatpush1.msra.mxu0 %v1026
    %1051 = vmatprep.subr.mxu0 0.0
    %1052 = vmatpush1.msra.mxu0 %v1025
    %1053 = vmatprep.subr.mxu0 0.0
    %1054 = vmatpush1.msra.mxu0 %v1024
    %1055 = vmatprep.subr.mxu0 0.0
    %1056 = vmatpush1.msra.mxu0 %v1023
    %1057 = vmatprep.subr.mxu0 0.0
    %1058 = vmatpush1.msra.mxu0 %v1022
    %1059 = vmatprep.subr.mxu0 0.0
    %1060 = vmatpush1.msra.mxu0 %v1021
    %1061 = vmatprep.subr.mxu0 0.0
    %1062 = vmatpush1.msra.mxu0 %v1020
    %1063 = vmatprep.subr.mxu0 0.0
    %1064 = vmatpush1.msra.mxu0 %v1019
    %1065 = vmatprep.subr.mxu0 0.0
    %1066 = vmatpush1.msra.mxu0 %v1018
    %1067 = vmatprep.subr.mxu0 0.0
    %1068 = vmatpush1.msra.mxu0 %v1017
    %1069 = vmatprep.subr.mxu0 0.0
    %1070 = vmatpush1.msra.mxu0 %v1016
    %1071 = vmatprep.subr.mxu0 0.0
    %1072 = vmatpush1.msra.mxu0 %v1015
    %1073 = vmatprep.subr.mxu0 0.0
    %1074 = vmatpush1.msra.mxu0 %v1014
    %1075 = vmatprep.subr.mxu0 0.0
    %1076 = vmatpush1.msra.mxu0 %v1013
    %1077 = vmatprep.subr.mxu0 0.0
    %1078 = vmatpush2.msra.mxu0 %v1044
    %1079 = vmatprep.subr.mxu0 0.0
    %1080 = vmatpush2.msra.mxu0 %v1043
    %1081 = vmatprep.subr.mxu0 0.0
    %1082 = vmatpush2.msra.mxu0 %v1042
    %1083 = vmatprep.subr.mxu0 0.0
    %1084 = vmatpush2.msra.mxu0 %v1041
    %1085 = vmatprep.subr.mxu0 0.0
    %1086 = vmatpush2.msra.mxu0 %v1040
    %1087 = vmatprep.subr.mxu0 0.0
    %1088 = vmatpush2.msra.mxu0 %v1039
    %1089 = vmatprep.subr.mxu0 0.0
    %1090 = vmatpush2.msra.mxu0 %v1038
    %1091 = vmatprep.subr.mxu0 0.0
    %1092 = vmatpush2.msra.mxu0 %v1037
    %1093 = vmatprep.subr.mxu0 0.0
    %1094 = vmatpush2.msra.mxu0 %v1036
    %1095 = vmatprep.subr.mxu0 0.0
    %1096 = vmatpush2.msra.mxu0 %v1035
    %1097 = vmatprep.subr.mxu0 0.0
    %1098 = vmatpush2.msra.mxu0 %v1034
    %1099 = vmatprep.subr.mxu0 0.0
    %1100 = vmatpush2.msra.mxu0 %v1033
    %1101 = vmatprep.subr.mxu0 0.0
    %1102 = vmatpush2.msra.mxu0 %v1032
    %1103 = vmatprep.subr.mxu0 0.0
    %1104 = vmatpush2.msra.mxu0 %v1031
    %1105 = vmatprep.subr.mxu0 0.0
    %1106 = vmatpush2.msra.mxu0 %v1030
    %1107 = vmatprep.subr.mxu0 0.0
    %1108 = vmatpush2.msra.mxu0 %v1029
    %1109 = vmatprep.mubr.f32.mxu0 1.0
    %1110 = vmatmul.mubr.f32.gmra.mxu0 1.0
    %v1111 = vpop.f32.mrf.mxu0
    %v1112 = vadd.f32 0.0, %v1111
    %v1113 = vpop.f32.mrf.mxu0
    %1114 = vdwg.mxu0
    %v1115 = vmul.f32 %v1010, 0.00390625
    %v1116 = vmul.f32 %v1112, 0.00390625
    %v1117 = vmul.f32 %v1115, %v1115
    %v1118 = vsub.f32 %v1116, %v1117
    %v1119 = vmax.f32 %v1118, 0.0
    %v1120 = vld [vmem:[%s3 + $0x1] sm:$0x1]
    %v1121 = vadd.f32 %v1119, 1e-05
    %v1122 = vrsqrt.pop %v1121
    %v1123 = vmul.f32 %v1120, %v1122
    %v1124 = vld [vmem:[%s4 + $0x1] sm:$0x1]
    %v1125 = vmul.f32 %v1115, %v1123
    %v1126 = vsub.f32 %v1124, %v1125
    %v1127 = vlaneseq
    %v1128 = vshrl.u32 %v1127, 7
    %v1129 = vsub.s32 0, %v1128
    %v1130 = vrot.slane %v1123, %v1129
    %v1131 = vmul.f32 %v785, %v1130
    %v1132 = vmul.f32 %v790, %v1130
    %v1133 = vmul.f32 %v795, %v1130
    %v1134 = vmul.f32 %v800, %v1130
    %v1135 = vmul.f32 %v805, %v1130
    %v1136 = vmul.f32 %v810, %v1130
    %v1137 = vmul.f32 %v815, %v1130
    %v1138 = vmul.f32 %v820, %v1130
    %v1139 = vmul.f32 %v825, %v1130
    %v1140 = vmul.f32 %v830, %v1130
    %v1141 = vmul.f32 %v835, %v1130
    %v1142 = vmul.f32 %v840, %v1130
    %v1143 = vmul.f32 %v845, %v1130
    %v1144 = vmul.f32 %v850, %v1130
    %v1145 = vmul.f32 %v855, %v1130
    %v1146 = vmul.f32 %v860, %v1130
    %v1147 = vmul.f32 %v865, %v1130
    %v1148 = vmul.f32 %v870, %v1130
    %v1149 = vmul.f32 %v875, %v1130
    %v1150 = vmul.f32 %v880, %v1130
    %v1151 = vmul.f32 %v885, %v1130
    %v1152 = vmul.f32 %v890, %v1130
    %v1153 = vmul.f32 %v895, %v1130
    %v1154 = vmul.f32 %v900, %v1130
    %v1155 = vmul.f32 %v905, %v1130
    %v1156 = vmul.f32 %v910, %v1130
    %v1157 = vmul.f32 %v915, %v1130
    %v1158 = vmul.f32 %v920, %v1130
    %v1159 = vmul.f32 %v925, %v1130
    %v1160 = vmul.f32 %v930, %v1130
    %v1161 = vmul.f32 %v935, %v1130
    %v1162 = vmul.f32 %v940, %v1130
    %v1163 = vlaneseq
    %v1164 = vshrl.u32 %v1163, 7
    %v1165 = vsub.s32 0, %v1164
    %v1166 = vrot.slane %v1126, %v1165
    %v1167 = vadd.f32 %v1131, %v1166
    %v1168 = vadd.f32 %v1132, %v1166
    %v1169 = vadd.f32 %v1133, %v1166
    %v1170 = vadd.f32 %v1134, %v1166
    %v1171 = vadd.f32 %v1135, %v1166
    %v1172 = vadd.f32 %v1136, %v1166
    %v1173 = vadd.f32 %v1137, %v1166
    %v1174 = vadd.f32 %v1138, %v1166
    %v1175 = vadd.f32 %v1139, %v1166
    %v1176 = vadd.f32 %v1140, %v1166
    %v1177 = vadd.f32 %v1141, %v1166
    %v1178 = vadd.f32 %v1142, %v1166
    %v1179 = vadd.f32 %v1143, %v1166
    %v1180 = vadd.f32 %v1144, %v1166
    %v1181 = vadd.f32 %v1145, %v1166
    %v1182 = vadd.f32 %v1146, %v1166
    %v1183 = vadd.f32 %v1147, %v1166
    %v1184 = vadd.f32 %v1148, %v1166
    %v1185 = vadd.f32 %v1149, %v1166
    %v1186 = vadd.f32 %v1150, %v1166
    %v1187 = vadd.f32 %v1151, %v1166
    %v1188 = vadd.f32 %v1152, %v1166
    %v1189 = vadd.f32 %v1153, %v1166
    %v1190 = vadd.f32 %v1154, %v1166
    %v1191 = vadd.f32 %v1155, %v1166
    %v1192 = vadd.f32 %v1156, %v1166
    %v1193 = vadd.f32 %v1157, %v1166
    %v1194 = vadd.f32 %v1158, %v1166
    %v1195 = vadd.f32 %v1159, %v1166
    %v1196 = vadd.f32 %v1160, %v1166
    %v1197 = vadd.f32 %v1161, %v1166
    %v1198 = vadd.f32 %v1162, %v1166
    %v1199 = vmax.f32 %v1167, 0.0
    %v1200 = vmax.f32 %v1168, 0.0
    %v1201 = vmax.f32 %v1169, 0.0
    %v1202 = vmax.f32 %v1170, 0.0
    %v1203 = vmax.f32 %v1171, 0.0
    %v1204 = vmax.f32 %v1172, 0.0
    %v1205 = vmax.f32 %v1173, 0.0
    %v1206 = vmax.f32 %v1174, 0.0
    %v1207 = vmax.f32 %v1175, 0.0
    %v1208 = vmax.f32 %v1176, 0.0
    %v1209 = vmax.f32 %v1177, 0.0
    %v1210 = vmax.f32 %v1178, 0.0
    %v1211 = vmax.f32 %v1179, 0.0
    %v1212 = vmax.f32 %v1180, 0.0
    %v1213 = vmax.f32 %v1181, 0.0
    %v1214 = vmax.f32 %v1182, 0.0
    %v1215 = vmax.f32 %v1183, 0.0
    %v1216 = vmax.f32 %v1184, 0.0
    %v1217 = vmax.f32 %v1185, 0.0
    %v1218 = vmax.f32 %v1186, 0.0
    %v1219 = vmax.f32 %v1187, 0.0
    %v1220 = vmax.f32 %v1188, 0.0
    %v1221 = vmax.f32 %v1189, 0.0
    %v1222 = vmax.f32 %v1190, 0.0
    %v1223 = vmax.f32 %v1191, 0.0
    %v1224 = vmax.f32 %v1192, 0.0
    %v1225 = vmax.f32 %v1193, 0.0
    %v1226 = vmax.f32 %v1194, 0.0
    %v1227 = vmax.f32 %v1195, 0.0
    %v1228 = vmax.f32 %v1196, 0.0
    %v1229 = vmax.f32 %v1197, 0.0
    %v1230 = vmax.f32 %v1198, 0.0
    %s1231 = scalar_lea.vmem [#allocation5], 32
    %v1232 = vld [vmem:[%s1231] sm:$0xff]
    %v1233 = vld [vmem:[%s1231 + $0x8] sm:$0xff]
    %v1234 = vld [vmem:[%s1231 + $0x10] sm:$0xff]
    %v1235 = vld [vmem:[%s1231 + $0x18] sm:$0xff]
    %v1237 = vsel %vm621, %v1199, 0
    %v1240 = vsel %vm621, %v1200, 0
    %v1243 = vsel %vm621, %v1201, 0
    %v1246 = vsel %vm621, %v1202, 0
    %v1249 = vsel %vm621, %v1203, 0
    %v1252 = vsel %vm621, %v1204, 0
    %v1255 = vsel %vm621, %v1205, 0
    %v1258 = vsel %vm621, %v1206, 0
    %v1261 = vsel %vm621, %v1207, 0
    %v1264 = vsel %vm621, %v1208, 0
    %v1267 = vsel %vm621, %v1209, 0
    %v1270 = vsel %vm621, %v1210, 0
    %v1273 = vsel %vm621, %v1211, 0
    %v1276 = vsel %vm621, %v1212, 0
    %v1279 = vsel %vm621, %v1213, 0
    %v1282 = vsel %vm621, %v1214, 0
    %v1285 = vsel %vm621, %v1215, 0
    %v1288 = vsel %vm621, %v1216, 0
    %v1291 = vsel %vm621, %v1217, 0
    %v1294 = vsel %vm621, %v1218, 0
    %v1297 = vsel %vm621, %v1219, 0
    %v1300 = vsel %vm621, %v1220, 0
    %v1303 = vsel %vm621, %v1221, 0
    %v1306 = vsel %vm621, %v1222, 0
    %v1309 = vsel %vm621, %v1223, 0
    %v1312 = vsel %vm621, %v1224, 0
    %v1315 = vsel %vm621, %v1225, 0
    %v1318 = vsel %vm621, %v1226, 0
    %v1321 = vsel %vm621, %v1227, 0
    %v1324 = vsel %vm621, %v1228, 0
    %v1327 = vsel %vm621, %v1229, 0
    %v1330 = vsel %vm621, %v1230, 0
    %1332 = vmatprep.subr.mxu0 0.0
    %1333 = vmatpush1.msra.mxu0 0.0
    %1334 = vmatprep.subr.mxu0 0.0
    %1335 = vmatpush1.msra.mxu0 0.0
    %1336 = vmatprep.subr.mxu0 0.0
    %1337 = vmatpush1.msra.mxu0 0.0
    %1338 = vmatprep.subr.mxu0 0.0
    %1339 = vmatpush1.msra.mxu0 0.0
    %1340 = vmatprep.subr.mxu0 0.0
    %1341 = vmatpush1.msra.mxu0 0.0
    %1342 = vmatprep.subr.mxu0 0.0
    %1343 = vmatpush1.msra.mxu0 0.0
    %1344 = vmatprep.subr.mxu0 0.0
    %1345 = vmatpush1.msra.mxu0 0.0
    %1346 = vmatprep.subr.mxu0 0.0
    %1347 = vmatpush1.msra.mxu0 0.0
    %1348 = vmatprep.subr.mxu0 0.0
    %1349 = vmatpush1.msra.mxu0 0.0
    %1350 = vmatprep.subr.mxu0 0.0
    %1351 = vmatpush1.msra.mxu0 0.0
    %1352 = vmatprep.subr.mxu0 0.0
    %1353 = vmatpush1.msra.mxu0 0.0
    %1354 = vmatprep.subr.mxu0 0.0
    %1355 = vmatpush1.msra.mxu0 0.0
    %1356 = vmatprep.subr.mxu0 0.0
    %1357 = vmatpush1.msra.mxu0 %v1235
    %1358 = vmatprep.subr.mxu0 0.0
    %1359 = vmatpush1.msra.mxu0 %v1234
    %1360 = vmatprep.subr.mxu0 0.0
    %1361 = vmatpush1.msra.mxu0 %v1233
    %1362 = vmatprep.subr.mxu0 0.0
    %1363 = vmatpush1.msra.mxu0 %v1232
    %1364 = vmatprep.subr.mxu0 0.0
    %1365 = vmatpush2.msra.mxu0 0.0
    %1366 = vmatprep.subr.mxu0 0.0
    %1367 = vmatpush2.msra.mxu0 0.0
    %1368 = vmatprep.subr.mxu0 0.0
    %1369 = vmatpush2.msra.mxu0 0.0
    %1370 = vmatprep.subr.mxu0 0.0
    %1371 = vmatpush2.msra.mxu0 0.0
    %1372 = vmatprep.subr.mxu0 0.0
    %1373 = vmatpush2.msra.mxu0 0.0
    %1374 = vmatprep.subr.mxu0 0.0
    %1375 = vmatpush2.msra.mxu0 0.0
    %1376 = vmatprep.subr.mxu0 0.0
    %1377 = vmatpush2.msra.mxu0 0.0
    %1378 = vmatprep.subr.mxu0 0.0
    %1379 = vmatpush2.msra.mxu0 0.0
    %1380 = vmatprep.subr.mxu0 0.0
    %1381 = vmatpush2.msra.mxu0 0.0
    %1382 = vmatprep.subr.mxu0 0.0
    %1383 = vmatpush2.msra.mxu0 0.0
    %1384 = vmatprep.subr.mxu0 0.0
    %1385 = vmatpush2.msra.mxu0 0.0
    %1386 = vmatprep.subr.mxu0 0.0
    %1387 = vmatpush2.msra.mxu0 0.0
    %1388 = vmatprep.subr.mxu0 0.0
    %1389 = vmatpush2.msra.mxu0 0.0
    %1390 = vmatprep.subr.mxu0 0.0
    %1391 = vmatpush2.msra.mxu0 0.0
    %1392 = vmatprep.subr.mxu0 0.0
    %1393 = vmatpush2.msra.mxu0 0.0
    %1394 = vmatprep.subr.mxu0 0.0
    %1395 = vmatpush2.msra.mxu0 0.0
    %1396 = vmatprep.mubr.f32.mxu0 0.0
    %1397 = vmatmul.mubr.f32.gmra.mxu0 %v1237
    %v1398 = vpop.f32.mrf.mxu0
    %v1399 = vadd.f32 0.0, %v1398
    %v1400 = vpop.f32.mrf.mxu0
    %1401 = vmatprep.mubr.f32.mxu0 0.0
    %1402 = vmatmul.mubr.f32.gmra.mxu0 %v1240
    %v1403 = vpop.f32.mrf.mxu0
    %v1404 = vadd.f32 0.0, %v1403
    %v1405 = vpop.f32.mrf.mxu0
    %1406 = vmatprep.mubr.f32.mxu0 0.0
    %1407 = vmatmul.mubr.f32.gmra.mxu0 %v1243
    %v1408 = vpop.f32.mrf.mxu0
    %v1409 = vadd.f32 0.0, %v1408
    %v1410 = vpop.f32.mrf.mxu0
    %1411 = vmatprep.mubr.f32.mxu0 0.0
    %1412 = vmatmul.mubr.f32.gmra.mxu0 %v1246
    %v1413 = vpop.f32.mrf.mxu0
    %v1414 = vadd.f32 0.0, %v1413
    %v1415 = vpop.f32.mrf.mxu0
    %1416 = vmatprep.mubr.f32.mxu0 0.0
    %1417 = vmatmul.mubr.f32.gmra.mxu0 %v1249
    %v1418 = vpop.f32.mrf.mxu0
    %v1419 = vadd.f32 0.0, %v1418
    %v1420 = vpop.f32.mrf.mxu0
    %1421 = vmatprep.mubr.f32.mxu0 0.0
    %1422 = vmatmul.mubr.f32.gmra.mxu0 %v1252
    %v1423 = vpop.f32.mrf.mxu0
    %v1424 = vadd.f32 0.0, %v1423
    %v1425 = vpop.f32.mrf.mxu0
    %1426 = vmatprep.mubr.f32.mxu0 0.0
    %1427 = vmatmul.mubr.f32.gmra.mxu0 %v1255
    %v1428 = vpop.f32.mrf.mxu0
    %v1429 = vadd.f32 0.0, %v1428
    %v1430 = vpop.f32.mrf.mxu0
    %1431 = vmatprep.mubr.f32.mxu0 0.0
    %1432 = vmatmul.mubr.f32.gmra.mxu0 %v1258
    %v1433 = vpop.f32.mrf.mxu0
    %v1434 = vadd.f32 0.0, %v1433
    %v1435 = vpop.f32.mrf.mxu0
    %1436 = vmatprep.mubr.f32.mxu0 0.0
    %1437 = vmatmul.mubr.f32.gmra.mxu0 %v1261
    %v1438 = vpop.f32.mrf.mxu0
    %v1439 = vadd.f32 0.0, %v1438
    %v1440 = vpop.f32.mrf.mxu0
    %1441 = vmatprep.mubr.f32.mxu0 0.0
    %1442 = vmatmul.mubr.f32.gmra.mxu0 %v1264
    %v1443 = vpop.f32.mrf.mxu0
    %v1444 = vadd.f32 0.0, %v1443
    %v1445 = vpop.f32.mrf.mxu0
    %1446 = vmatprep.mubr.f32.mxu0 0.0
    %1447 = vmatmul.mubr.f32.gmra.mxu0 %v1267
    %v1448 = vpop.f32.mrf.mxu0
    %v1449 = vadd.f32 0.0, %v1448
    %v1450 = vpop.f32.mrf.mxu0
    %1451 = vmatprep.mubr.f32.mxu0 0.0
    %1452 = vmatmul.mubr.f32.gmra.mxu0 %v1270
    %v1453 = vpop.f32.mrf.mxu0
    %v1454 = vadd.f32 0.0, %v1453
    %v1455 = vpop.f32.mrf.mxu0
    %1456 = vmatprep.mubr.f32.mxu0 0.0
    %1457 = vmatmul.mubr.f32.gmra.mxu0 %v1273
    %v1458 = vpop.f32.mrf.mxu0
    %v1459 = vadd.f32 0.0, %v1458
    %v1460 = vpop.f32.mrf.mxu0
    %1461 = vmatprep.mubr.f32.mxu0 0.0
    %1462 = vmatmul.mubr.f32.gmra.mxu0 %v1276
    %v1463 = vpop.f32.mrf.mxu0
    %v1464 = vadd.f32 0.0, %v1463
    %v1465 = vpop.f32.mrf.mxu0
    %1466 = vmatprep.mubr.f32.mxu0 0.0
    %1467 = vmatmul.mubr.f32.gmra.mxu0 %v1279
    %v1468 = vpop.f32.mrf.mxu0
    %v1469 = vadd.f32 0.0, %v1468
    %v1470 = vpop.f32.mrf.mxu0
    %1471 = vmatprep.mubr.f32.mxu0 0.0
    %1472 = vmatmul.mubr.f32.gmra.mxu0 %v1282
    %v1473 = vpop.f32.mrf.mxu0
    %v1474 = vadd.f32 0.0, %v1473
    %v1475 = vpop.f32.mrf.mxu0
    %1476 = vmatprep.mubr.f32.mxu0 0.0
    %1477 = vmatmul.mubr.f32.gmra.mxu0 %v1285
    %v1478 = vpop.f32.mrf.mxu0
    %v1479 = vadd.f32 0.0, %v1478
    %v1480 = vpop.f32.mrf.mxu0
    %1481 = vmatprep.mubr.f32.mxu0 0.0
    %1482 = vmatmul.mubr.f32.gmra.mxu0 %v1288
    %v1483 = vpop.f32.mrf.mxu0
    %v1484 = vadd.f32 0.0, %v1483
    %v1485 = vpop.f32.mrf.mxu0
    %1486 = vmatprep.mubr.f32.mxu0 0.0
    %1487 = vmatmul.mubr.f32.gmra.mxu0 %v1291
    %v1488 = vpop.f32.mrf.mxu0
    %v1489 = vadd.f32 0.0, %v1488
    %v1490 = vpop.f32.mrf.mxu0
    %1491 = vmatprep.mubr.f32.mxu0 0.0
    %1492 = vmatmul.mubr.f32.gmra.mxu0 %v1294
    %v1493 = vpop.f32.mrf.mxu0
    %v1494 = vadd.f32 0.0, %v1493
    %v1495 = vpop.f32.mrf.mxu0
    %1496 = vmatprep.mubr.f32.mxu0 0.0
    %1497 = vmatmul.mubr.f32.gmra.mxu0 %v1297
    %v1498 = vpop.f32.mrf.mxu0
    %v1499 = vadd.f32 0.0, %v1498
    %v1500 = vpop.f32.mrf.mxu0
    %1501 = vmatprep.mubr.f32.mxu0 0.0
    %1502 = vmatmul.mubr.f32.gmra.mxu0 %v1300
    %v1503 = vpop.f32.mrf.mxu0
    %v1504 = vadd.f32 0.0, %v1503
    %v1505 = vpop.f32.mrf.mxu0
    %1506 = vmatprep.mubr.f32.mxu0 0.0
    %1507 = vmatmul.mubr.f32.gmra.mxu0 %v1303
    %v1508 = vpop.f32.mrf.mxu0
    %v1509 = vadd.f32 0.0, %v1508
    %v1510 = vpop.f32.mrf.mxu0
    %1511 = vmatprep.mubr.f32.mxu0 0.0
    %1512 = vmatmul.mubr.f32.gmra.mxu0 %v1306
    %v1513 = vpop.f32.mrf.mxu0
    %v1514 = vadd.f32 0.0, %v1513
    %v1515 = vpop.f32.mrf.mxu0
    %1516 = vmatprep.mubr.f32.mxu0 0.0
    %1517 = vmatmul.mubr.f32.gmra.mxu0 %v1309
    %v1518 = vpop.f32.mrf.mxu0
    %v1519 = vadd.f32 0.0, %v1518
    %v1520 = vpop.f32.mrf.mxu0
    %1521 = vmatprep.mubr.f32.mxu0 0.0
    %1522 = vmatmul.mubr.f32.gmra.mxu0 %v1312
    %v1523 = vpop.f32.mrf.mxu0
    %v1524 = vadd.f32 0.0, %v1523
    %v1525 = vpop.f32.mrf.mxu0
    %1526 = vmatprep.mubr.f32.mxu0 0.0
    %1527 = vmatmul.mubr.f32.gmra.mxu0 %v1315
    %v1528 = vpop.f32.mrf.mxu0
    %v1529 = vadd.f32 0.0, %v1528
    %v1530 = vpop.f32.mrf.mxu0
    %1531 = vmatprep.mubr.f32.mxu0 0.0
    %1532 = vmatmul.mubr.f32.gmra.mxu0 %v1318
    %v1533 = vpop.f32.mrf.mxu0
    %v1534 = vadd.f32 0.0, %v1533
    %v1535 = vpop.f32.mrf.mxu0
    %1536 = vmatprep.mubr.f32.mxu0 0.0
    %1537 = vmatmul.mubr.f32.gmra.mxu0 %v1321
    %v1538 = vpop.f32.mrf.mxu0
    %v1539 = vadd.f32 0.0, %v1538
    %v1540 = vpop.f32.mrf.mxu0
    %1541 = vmatprep.mubr.f32.mxu0 0.0
    %1542 = vmatmul.mubr.f32.gmra.mxu0 %v1324
    %v1543 = vpop.f32.mrf.mxu0
    %v1544 = vadd.f32 0.0, %v1543
    %v1545 = vpop.f32.mrf.mxu0
    %1546 = vmatprep.mubr.f32.mxu0 0.0
    %1547 = vmatmul.mubr.f32.gmra.mxu0 %v1327
    %v1548 = vpop.f32.mrf.mxu0
    %v1549 = vadd.f32 0.0, %v1548
    %v1550 = vpop.f32.mrf.mxu0
    %1551 = vmatprep.mubr.f32.mxu0 0.0
    %1552 = vmatmul.mubr.f32.gmra.mxu0 %v1330
    %v1553 = vpop.f32.mrf.mxu0
    %v1554 = vadd.f32 0.0, %v1553
    %v1555 = vpop.f32.mrf.mxu0
    %1556 = vdwg.mxu0
    %1557 = vmatprep.subr.mxu0 0.0
    %1558 = vmatpush1.msra.mxu0 %v1474
    %1559 = vmatprep.subr.mxu0 0.0
    %1560 = vmatpush1.msra.mxu0 %v1469
    %1561 = vmatprep.subr.mxu0 0.0
    %1562 = vmatpush1.msra.mxu0 %v1464
    %1563 = vmatprep.subr.mxu0 0.0
    %1564 = vmatpush1.msra.mxu0 %v1459
    %1565 = vmatprep.subr.mxu0 0.0
    %1566 = vmatpush1.msra.mxu0 %v1454
    %1567 = vmatprep.subr.mxu0 0.0
    %1568 = vmatpush1.msra.mxu0 %v1449
    %1569 = vmatprep.subr.mxu0 0.0
    %1570 = vmatpush1.msra.mxu0 %v1444
    %1571 = vmatprep.subr.mxu0 0.0
    %1572 = vmatpush1.msra.mxu0 %v1439
    %1573 = vmatprep.subr.mxu0 0.0
    %1574 = vmatpush1.msra.mxu0 %v1434
    %1575 = vmatprep.subr.mxu0 0.0
    %1576 = vmatpush1.msra.mxu0 %v1429
    %1577 = vmatprep.subr.mxu0 0.0
    %1578 = vmatpush1.msra.mxu0 %v1424
    %1579 = vmatprep.subr.mxu0 0.0
    %1580 = vmatpush1.msra.mxu0 %v1419
    %1581 = vmatprep.subr.mxu0 0.0
    %1582 = vmatpush1.msra.mxu0 %v1414
    %1583 = vmatprep.subr.mxu0 0.0
    %1584 = vmatpush1.msra.mxu0 %v1409
    %1585 = vmatprep.subr.mxu0 0.0
    %1586 = vmatpush1.msra.mxu0 %v1404
    %1587 = vmatprep.subr.mxu0 0.0
    %1588 = vmatpush1.msra.mxu0 %v1399
    %1589 = vmatprep.subr.mxu0 0.0
    %1590 = vmatpush2.msra.mxu0 %v1554
    %1591 = vmatprep.subr.mxu0 0.0
    %1592 = vmatpush2.msra.mxu0 %v1549
    %1593 = vmatprep.subr.mxu0 0.0
    %1594 = vmatpush2.msra.mxu0 %v1544
    %1595 = vmatprep.subr.mxu0 0.0
    %1596 = vmatpush2.msra.mxu0 %v1539
    %1597 = vmatprep.subr.mxu0 0.0
    %1598 = vmatpush2.msra.mxu0 %v1534
    %1599 = vmatprep.subr.mxu0 0.0
    %1600 = vmatpush2.msra.mxu0 %v1529
    %1601 = vmatprep.subr.mxu0 0.0
    %1602 = vmatpush2.msra.mxu0 %v1524
    %1603 = vmatprep.subr.mxu0 0.0
    %1604 = vmatpush2.msra.mxu0 %v1519
    %1605 = vmatprep.subr.mxu0 0.0
    %1606 = vmatpush2.msra.mxu0 %v1514
    %1607 = vmatprep.subr.mxu0 0.0
    %1608 = vmatpush2.msra.mxu0 %v1509
    %1609 = vmatprep.subr.mxu0 0.0
    %1610 = vmatpush2.msra.mxu0 %v1504
    %1611 = vmatprep.subr.mxu0 0.0
    %1612 = vmatpush2.msra.mxu0 %v1499
    %1613 = vmatprep.subr.mxu0 0.0
    %1614 = vmatpush2.msra.mxu0 %v1494
    %1615 = vmatprep.subr.mxu0 0.0
    %1616 = vmatpush2.msra.mxu0 %v1489
    %1617 = vmatprep.subr.mxu0 0.0
    %1618 = vmatpush2.msra.mxu0 %v1484
    %1619 = vmatprep.subr.mxu0 0.0
    %1620 = vmatpush2.msra.mxu0 %v1479
    %1621 = vmatprep.mubr.f32.mxu0 1.0
    %1622 = vmatmul.mubr.f32.gmra.mxu0 1.0
    %v1623 = vpop.f32.mrf.mxu0
    %v1624 = vadd.f32 0.0, %v1623
    %v1625 = vpop.f32.mrf.mxu0
    %1626 = vdwg.mxu0
    %v1627 = vmul.f32 %v1399, %v1399
    %v1628 = vmul.f32 %v1404, %v1404
    %v1629 = vmul.f32 %v1409, %v1409
    %v1630 = vmul.f32 %v1414, %v1414
    %v1631 = vmul.f32 %v1419, %v1419
    %v1632 = vmul.f32 %v1424, %v1424
    %v1633 = vmul.f32 %v1429, %v1429
    %v1634 = vmul.f32 %v1434, %v1434
    %v1635 = vmul.f32 %v1439, %v1439
    %v1636 = vmul.f32 %v1444, %v1444
    %v1637 = vmul.f32 %v1449, %v1449
    %v1638 = vmul.f32 %v1454, %v1454
    %v1639 = vmul.f32 %v1459, %v1459
    %v1640 = vmul.f32 %v1464, %v1464
    %v1641 = vmul.f32 %v1469, %v1469
    %v1642 = vmul.f32 %v1474, %v1474
    %v1643 = vmul.f32 %v1479, %v1479
    %v1644 = vmul.f32 %v1484, %v1484
    %v1645 = vmul.f32 %v1489, %v1489
    %v1646 = vmul.f32 %v1494, %v1494
    %v1647 = vmul.f32 %v1499, %v1499
    %v1648 = vmul.f32 %v1504, %v1504
    %v1649 = vmul.f32 %v1509, %v1509
    %v1650 = vmul.f32 %v1514, %v1514
    %v1651 = vmul.f32 %v1519, %v1519
    %v1652 = vmul.f32 %v1524, %v1524
    %v1653 = vmul.f32 %v1529, %v1529
    %v1654 = vmul.f32 %v1534, %v1534
    %v1655 = vmul.f32 %v1539, %v1539
    %v1656 = vmul.f32 %v1544, %v1544
    %v1657 = vmul.f32 %v1549, %v1549
    %v1658 = vmul.f32 %v1554, %v1554
    %1659 = vmatprep.subr.mxu0 0.0
    %1660 = vmatpush1.msra.mxu0 %v1642
    %1661 = vmatprep.subr.mxu0 0.0
    %1662 = vmatpush1.msra.mxu0 %v1641
    %1663 = vmatprep.subr.mxu0 0.0
    %1664 = vmatpush1.msra.mxu0 %v1640
    %1665 = vmatprep.subr.mxu0 0.0
    %1666 = vmatpush1.msra.mxu0 %v1639
    %1667 = vmatprep.subr.mxu0 0.0
    %1668 = vmatpush1.msra.mxu0 %v1638
    %1669 = vmatprep.subr.mxu0 0.0
    %1670 = vmatpush1.msra.mxu0 %v1637
    %1671 = vmatprep.subr.mxu0 0.0
    %1672 = vmatpush1.msra.mxu0 %v1636
    %1673 = vmatprep.subr.mxu0 0.0
    %1674 = vmatpush1.msra.mxu0 %v1635
    %1675 = vmatprep.subr.mxu0 0.0
    %1676 = vmatpush1.msra.mxu0 %v1634
    %1677 = vmatprep.subr.mxu0 0.0
    %1678 = vmatpush1.msra.mxu0 %v1633
    %1679 = vmatprep.subr.mxu0 0.0
    %1680 = vmatpush1.msra.mxu0 %v1632
    %1681 = vmatprep.subr.mxu0 0.0
    %1682 = vmatpush1.msra.mxu0 %v1631
    %1683 = vmatprep.subr.mxu0 0.0
    %1684 = vmatpush1.msra.mxu0 %v1630
    %1685 = vmatprep.subr.mxu0 0.0
    %1686 = vmatpush1.msra.mxu0 %v1629
    %1687 = vmatprep.subr.mxu0 0.0
    %1688 = vmatpush1.msra.mxu0 %v1628
    %1689 = vmatprep.subr.mxu0 0.0
    %1690 = vmatpush1.msra.mxu0 %v1627
    %1691 = vmatprep.subr.mxu0 0.0
    %1692 = vmatpush2.msra.mxu0 %v1658
    %1693 = vmatprep.subr.mxu0 0.0
    %1694 = vmatpush2.msra.mxu0 %v1657
    %1695 = vmatprep.subr.mxu0 0.0
    %1696 = vmatpush2.msra.mxu0 %v1656
    %1697 = vmatprep.subr.mxu0 0.0
    %1698 = vmatpush2.msra.mxu0 %v1655
    %1699 = vmatprep.subr.mxu0 0.0
    %1700 = vmatpush2.msra.mxu0 %v1654
    %1701 = vmatprep.subr.mxu0 0.0
    %1702 = vmatpush2.msra.mxu0 %v1653
    %1703 = vmatprep.subr.mxu0 0.0
    %1704 = vmatpush2.msra.mxu0 %v1652
    %1705 = vmatprep.subr.mxu0 0.0
    %1706 = vmatpush2.msra.mxu0 %v1651
    %1707 = vmatprep.subr.mxu0 0.0
    %1708 = vmatpush2.msra.mxu0 %v1650
    %1709 = vmatprep.subr.mxu0 0.0
    %1710 = vmatpush2.msra.mxu0 %v1649
    %1711 = vmatprep.subr.mxu0 0.0
    %1712 = vmatpush2.msra.mxu0 %v1648
    %1713 = vmatprep.subr.mxu0 0.0
    %1714 = vmatpush2.msra.mxu0 %v1647
    %1715 = vmatprep.subr.mxu0 0.0
    %1716 = vmatpush2.msra.mxu0 %v1646
    %1717 = vmatprep.subr.mxu0 0.0
    %1718 = vmatpush2.msra.mxu0 %v1645
    %1719 = vmatprep.subr.mxu0 0.0
    %1720 = vmatpush2.msra.mxu0 %v1644
    %1721 = vmatprep.subr.mxu0 0.0
    %1722 = vmatpush2.msra.mxu0 %v1643
    %1723 = vmatprep.mubr.f32.mxu0 1.0
    %1724 = vmatmul.mubr.f32.gmra.mxu0 1.0
    %v1725 = vpop.f32.mrf.mxu0
    %v1726 = vadd.f32 0.0, %v1725
    %v1727 = vpop.f32.mrf.mxu0
    %1728 = vdwg.mxu0
    %v1729 = vmul.f32 %v1624, 0.00390625
    %v1730 = vmul.f32 %v1726, 0.00390625
    %v1731 = vmul.f32 %v1729, %v1729
    %v1732 = vsub.f32 %v1730, %v1731
    %v1733 = vmax.f32 %v1732, 0.0
    %v1734 = vld [vmem:[%s3 + $0x2] sm:$0x1]
    %v1735 = vadd.f32 %v1733, 1e-05
    %v1736 = vrsqrt.pop %v1735
    %v1737 = vmul.f32 %v1734, %v1736
    %v1738 = vld [vmem:[%s4 + $0x2] sm:$0x1]
    %v1739 = vmul.f32 %v1729, %v1737
    %v1740 = vsub.f32 %v1738, %v1739
    %v1741 = vlaneseq
    %v1742 = vshrl.u32 %v1741, 7
    %v1743 = vsub.s32 0, %v1742
    %v1744 = vrot.slane %v1737, %v1743
    %v1745 = vmul.f32 %v1399, %v1744
    %v1746 = vmul.f32 %v1404, %v1744
    %v1747 = vmul.f32 %v1409, %v1744
    %v1748 = vmul.f32 %v1414, %v1744
    %v1749 = vmul.f32 %v1419, %v1744
    %v1750 = vmul.f32 %v1424, %v1744
    %v1751 = vmul.f32 %v1429, %v1744
    %v1752 = vmul.f32 %v1434, %v1744
    %v1753 = vmul.f32 %v1439, %v1744
    %v1754 = vmul.f32 %v1444, %v1744
    %v1755 = vmul.f32 %v1449, %v1744
    %v1756 = vmul.f32 %v1454, %v1744
    %v1757 = vmul.f32 %v1459, %v1744
    %v1758 = vmul.f32 %v1464, %v1744
    %v1759 = vmul.f32 %v1469, %v1744
    %v1760 = vmul.f32 %v1474, %v1744
    %v1761 = vmul.f32 %v1479, %v1744
    %v1762 = vmul.f32 %v1484, %v1744
    %v1763 = vmul.f32 %v1489, %v1744
    %v1764 = vmul.f32 %v1494, %v1744
    %v1765 = vmul.f32 %v1499, %v1744
    %v1766 = vmul.f32 %v1504, %v1744
    %v1767 = vmul.f32 %v1509, %v1744
    %v1768 = vmul.f32 %v1514, %v1744
    %v1769 = vmul.f32 %v1519, %v1744
    %v1770 = vmul.f32 %v1524, %v1744
    %v1771 = vmul.f32 %v1529, %v1744
    %v1772 = vmul.f32 %v1534, %v1744
    %v1773 = vmul.f32 %v1539, %v1744
    %v1774 = vmul.f32 %v1544, %v1744
    %v1775 = vmul.f32 %v1549, %v1744
    %v1776 = vmul.f32 %v1554, %v1744
    %v1777 = vlaneseq
    %v1778 = vshrl.u32 %v1777, 7
    %v1779 = vsub.s32 0, %v1778
    %v1780 = vrot.slane %v1740, %v1779
    %v1781 = vadd.f32 %v1745, %v1780
    %v1782 = vadd.f32 %v1746, %v1780
    %v1783 = vadd.f32 %v1747, %v1780
    %v1784 = vadd.f32 %v1748, %v1780
    %v1785 = vadd.f32 %v1749, %v1780
    %v1786 = vadd.f32 %v1750, %v1780
    %v1787 = vadd.f32 %v1751, %v1780
    %v1788 = vadd.f32 %v1752, %v1780
    %v1789 = vadd.f32 %v1753, %v1780
    %v1790 = vadd.f32 %v1754, %v1780
    %v1791 = vadd.f32 %v1755, %v1780
    %v1792 = vadd.f32 %v1756, %v1780
    %v1793 = vadd.f32 %v1757, %v1780
    %v1794 = vadd.f32 %v1758, %v1780
    %v1795 = vadd.f32 %v1759, %v1780
    %v1796 = vadd.f32 %v1760, %v1780
    %v1797 = vadd.f32 %v1761, %v1780
    %v1798 = vadd.f32 %v1762, %v1780
    %v1799 = vadd.f32 %v1763, %v1780
    %v1800 = vadd.f32 %v1764, %v1780
    %v1801 = vadd.f32 %v1765, %v1780
    %v1802 = vadd.f32 %v1766, %v1780
    %v1803 = vadd.f32 %v1767, %v1780
    %v1804 = vadd.f32 %v1768, %v1780
    %v1805 = vadd.f32 %v1769, %v1780
    %v1806 = vadd.f32 %v1770, %v1780
    %v1807 = vadd.f32 %v1771, %v1780
    %v1808 = vadd.f32 %v1772, %v1780
    %v1809 = vadd.f32 %v1773, %v1780
    %v1810 = vadd.f32 %v1774, %v1780
    %v1811 = vadd.f32 %v1775, %v1780
    %v1812 = vadd.f32 %v1776, %v1780
    %v1813 = vmax.f32 %v1781, 0.0
    %v1814 = vmax.f32 %v1782, 0.0
    %v1815 = vmax.f32 %v1783, 0.0
    %v1816 = vmax.f32 %v1784, 0.0
    %v1817 = vmax.f32 %v1785, 0.0
    %v1818 = vmax.f32 %v1786, 0.0
    %v1819 = vmax.f32 %v1787, 0.0
    %v1820 = vmax.f32 %v1788, 0.0
    %v1821 = vmax.f32 %v1789, 0.0
    %v1822 = vmax.f32 %v1790, 0.0
    %v1823 = vmax.f32 %v1791, 0.0
    %v1824 = vmax.f32 %v1792, 0.0
    %v1825 = vmax.f32 %v1793, 0.0
    %v1826 = vmax.f32 %v1794, 0.0
    %v1827 = vmax.f32 %v1795, 0.0
    %v1828 = vmax.f32 %v1796, 0.0
    %v1829 = vmax.f32 %v1797, 0.0
    %v1830 = vmax.f32 %v1798, 0.0
    %v1831 = vmax.f32 %v1799, 0.0
    %v1832 = vmax.f32 %v1800, 0.0
    %v1833 = vmax.f32 %v1801, 0.0
    %v1834 = vmax.f32 %v1802, 0.0
    %v1835 = vmax.f32 %v1803, 0.0
    %v1836 = vmax.f32 %v1804, 0.0
    %v1837 = vmax.f32 %v1805, 0.0
    %v1838 = vmax.f32 %v1806, 0.0
    %v1839 = vmax.f32 %v1807, 0.0
    %v1840 = vmax.f32 %v1808, 0.0
    %v1841 = vmax.f32 %v1809, 0.0
    %v1842 = vmax.f32 %v1810, 0.0
    %v1843 = vmax.f32 %v1811, 0.0
    %v1844 = vmax.f32 %v1812, 0.0
    %s1845 = scalar_lea.vmem [#allocation5], 64
    %v1846 = vld [vmem:[%s1845] sm:$0xff]
    %v1847 = vld [vmem:[%s1845 + $0x8] sm:$0xff]
    %v1848 = vld [vmem:[%s1845 + $0x10] sm:$0xff]
    %v1849 = vld [vmem:[%s1845 + $0x18] sm:$0xff]
    %v1851 = vsel %vm621, %v1813, 0
    %v1854 = vsel %vm621, %v1814, 0
    %v1857 = vsel %vm621, %v1815, 0
    %v1860 = vsel %vm621, %v1816, 0
    %v1863 = vsel %vm621, %v1817, 0
    %v1866 = vsel %vm621, %v1818, 0
    %v1869 = vsel %vm621, %v1819, 0
    %v1872 = vsel %vm621, %v1820, 0
    %v1875 = vsel %vm621, %v1821, 0
    %v1878 = vsel %vm621, %v1822, 0
    %v1881 = vsel %vm621, %v1823, 0
    %v1884 = vsel %vm621, %v1824, 0
    %v1887 = vsel %vm621, %v1825, 0
    %v1890 = vsel %vm621, %v1826, 0
    %v1893 = vsel %vm621, %v1827, 0
    %v1896 = vsel %vm621, %v1828, 0
    %v1899 = vsel %vm621, %v1829, 0
    %v1902 = vsel %vm621, %v1830, 0
    %v1905 = vsel %vm621, %v1831, 0
    %v1908 = vsel %vm621, %v1832, 0
    %v1911 = vsel %vm621, %v1833, 0
    %v1914 = vsel %vm621, %v1834, 0
    %v1917 = vsel %vm621, %v1835, 0
    %v1920 = vsel %vm621, %v1836, 0
    %v1923 = vsel %vm621, %v1837, 0
    %v1926 = vsel %vm621, %v1838, 0
    %v1929 = vsel %vm621, %v1839, 0
    %v1932 = vsel %vm621, %v1840, 0
    %v1935 = vsel %vm621, %v1841, 0
    %v1938 = vsel %vm621, %v1842, 0
    %v1941 = vsel %vm621, %v1843, 0
    %v1944 = vsel %vm621, %v1844, 0
    %1946 = vmatprep.subr.mxu0 0.0
    %1947 = vmatpush1.msra.mxu0 0.0
    %1948 = vmatprep.subr.mxu0 0.0
    %1949 = vmatpush1.msra.mxu0 0.0
    %1950 = vmatprep.subr.mxu0 0.0
    %1951 = vmatpush1.msra.mxu0 0.0
    %1952 = vmatprep.subr.mxu0 0.0
    %1953 = vmatpush1.msra.mxu0 0.0
    %1954 = vmatprep.subr.mxu0 0.0
    %1955 = vmatpush1.msra.mxu0 0.0
    %1956 = vmatprep.subr.mxu0 0.0
    %1957 = vmatpush1.msra.mxu0 0.0
    %1958 = vmatprep.subr.mxu0 0.0
    %1959 = vmatpush1.msra.mxu0 0.0
    %1960 = vmatprep.subr.mxu0 0.0
    %1961 = vmatpush1.msra.mxu0 0.0
    %1962 = vmatprep.subr.mxu0 0.0
    %1963 = vmatpush1.msra.mxu0 0.0
    %1964 = vmatprep.subr.mxu0 0.0
    %1965 = vmatpush1.msra.mxu0 0.0
    %1966 = vmatprep.subr.mxu0 0.0
    %1967 = vmatpush1.msra.mxu0 0.0
    %1968 = vmatprep.subr.mxu0 0.0
    %1969 = vmatpush1.msra.mxu0 0.0
    %1970 = vmatprep.subr.mxu0 0.0
    %1971 = vmatpush1.msra.mxu0 %v1849
    %1972 = vmatprep.subr.mxu0 0.0
    %1973 = vmatpush1.msra.mxu0 %v1848
    %1974 = vmatprep.subr.mxu0 0.0
    %1975 = vmatpush1.msra.mxu0 %v1847
    %1976 = vmatprep.subr.mxu0 0.0
    %1977 = vmatpush1.msra.mxu0 %v1846
    %1978 = vmatprep.subr.mxu0 0.0
    %1979 = vmatpush2.msra.mxu0 0.0
    %1980 = vmatprep.subr.mxu0 0.0
    %1981 = vmatpush2.msra.mxu0 0.0
    %1982 = vmatprep.subr.mxu0 0.0
    %1983 = vmatpush2.msra.mxu0 0.0
    %1984 = vmatprep.subr.mxu0 0.0
    %1985 = vmatpush2.msra.mxu0 0.0
    %1986 = vmatprep.subr.mxu0 0.0
    %1987 = vmatpush2.msra.mxu0 0.0
    %1988 = vmatprep.subr.mxu0 0.0
    %1989 = vmatpush2.msra.mxu0 0.0
    %1990 = vmatprep.subr.mxu0 0.0
    %1991 = vmatpush2.msra.mxu0 0.0
    %1992 = vmatprep.subr.mxu0 0.0
    %1993 = vmatpush2.msra.mxu0 0.0
    %1994 = vmatprep.subr.mxu0 0.0
    %1995 = vmatpush2.msra.mxu0 0.0
    %1996 = vmatprep.subr.mxu0 0.0
    %1997 = vmatpush2.msra.mxu0 0.0
    %1998 = vmatprep.subr.mxu0 0.0
    %1999 = vmatpush2.msra.mxu0 0.0
    %2000 = vmatprep.subr.mxu0 0.0
    %2001 = vmatpush2.msra.mxu0 0.0
    %2002 = vmatprep.subr.mxu0 0.0
    %2003 = vmatpush2.msra.mxu0 0.0
    %2004 = vmatprep.subr.mxu0 0.0
    %2005 = vmatpush2.msra.mxu0 0.0
    %2006 = vmatprep.subr.mxu0 0.0
    %2007 = vmatpush2.msra.mxu0 0.0
    %2008 = vmatprep.subr.mxu0 0.0
    %2009 = vmatpush2.msra.mxu0 0.0
    %2010 = vmatprep.mubr.f32.mxu0 0.0
    %2011 = vmatmul.mubr.f32.gmra.mxu0 %v1851
    %v2012 = vpop.f32.mrf.mxu0
    %v2013 = vadd.f32 0.0, %v2012
    %v2014 = vpop.f32.mrf.mxu0
    %2015 = vmatprep.mubr.f32.mxu0 0.0
    %2016 = vmatmul.mubr.f32.gmra.mxu0 %v1854
    %v2017 = vpop.f32.mrf.mxu0
    %v2018 = vadd.f32 0.0, %v2017
    %v2019 = vpop.f32.mrf.mxu0
    %2020 = vmatprep.mubr.f32.mxu0 0.0
    %2021 = vmatmul.mubr.f32.gmra.mxu0 %v1857
    %v2022 = vpop.f32.mrf.mxu0
    %v2023 = vadd.f32 0.0, %v2022
    %v2024 = vpop.f32.mrf.mxu0
    %2025 = vmatprep.mubr.f32.mxu0 0.0
    %2026 = vmatmul.mubr.f32.gmra.mxu0 %v1860
    %v2027 = vpop.f32.mrf.mxu0
    %v2028 = vadd.f32 0.0, %v2027
    %v2029 = vpop.f32.mrf.mxu0
    %2030 = vmatprep.mubr.f32.mxu0 0.0
    %2031 = vmatmul.mubr.f32.gmra.mxu0 %v1863
    %v2032 = vpop.f32.mrf.mxu0
    %v2033 = vadd.f32 0.0, %v2032
    %v2034 = vpop.f32.mrf.mxu0
    %2035 = vmatprep.mubr.f32.mxu0 0.0
    %2036 = vmatmul.mubr.f32.gmra.mxu0 %v1866
    %v2037 = vpop.f32.mrf.mxu0
    %v2038 = vadd.f32 0.0, %v2037
    %v2039 = vpop.f32.mrf.mxu0
    %2040 = vmatprep.mubr.f32.mxu0 0.0
    %2041 = vmatmul.mubr.f32.gmra.mxu0 %v1869
    %v2042 = vpop.f32.mrf.mxu0
    %v2043 = vadd.f32 0.0, %v2042
    %v2044 = vpop.f32.mrf.mxu0
    %2045 = vmatprep.mubr.f32.mxu0 0.0
    %2046 = vmatmul.mubr.f32.gmra.mxu0 %v1872
    %v2047 = vpop.f32.mrf.mxu0
    %v2048 = vadd.f32 0.0, %v2047
    %v2049 = vpop.f32.mrf.mxu0
    %2050 = vmatprep.mubr.f32.mxu0 0.0
    %2051 = vmatmul.mubr.f32.gmra.mxu0 %v1875
    %v2052 = vpop.f32.mrf.mxu0
    %v2053 = vadd.f32 0.0, %v2052
    %v2054 = vpop.f32.mrf.mxu0
    %2055 = vmatprep.mubr.f32.mxu0 0.0
    %2056 = vmatmul.mubr.f32.gmra.mxu0 %v1878
    %v2057 = vpop.f32.mrf.mxu0
    %v2058 = vadd.f32 0.0, %v2057
    %v2059 = vpop.f32.mrf.mxu0
    %2060 = vmatprep.mubr.f32.mxu0 0.0
    %2061 = vmatmul.mubr.f32.gmra.mxu0 %v1881
    %v2062 = vpop.f32.mrf.mxu0
    %v2063 = vadd.f32 0.0, %v2062
    %v2064 = vpop.f32.mrf.mxu0
    %2065 = vmatprep.mubr.f32.mxu0 0.0
    %2066 = vmatmul.mubr.f32.gmra.mxu0 %v1884
    %v2067 = vpop.f32.mrf.mxu0
    %v2068 = vadd.f32 0.0, %v2067
    %v2069 = vpop.f32.mrf.mxu0
    %2070 = vmatprep.mubr.f32.mxu0 0.0
    %2071 = vmatmul.mubr.f32.gmra.mxu0 %v1887
    %v2072 = vpop.f32.mrf.mxu0
    %v2073 = vadd.f32 0.0, %v2072
    %v2074 = vpop.f32.mrf.mxu0
    %2075 = vmatprep.mubr.f32.mxu0 0.0
    %2076 = vmatmul.mubr.f32.gmra.mxu0 %v1890
    %v2077 = vpop.f32.mrf.mxu0
    %v2078 = vadd.f32 0.0, %v2077
    %v2079 = vpop.f32.mrf.mxu0
    %2080 = vmatprep.mubr.f32.mxu0 0.0
    %2081 = vmatmul.mubr.f32.gmra.mxu0 %v1893
    %v2082 = vpop.f32.mrf.mxu0
    %v2083 = vadd.f32 0.0, %v2082
    %v2084 = vpop.f32.mrf.mxu0
    %2085 = vmatprep.mubr.f32.mxu0 0.0
    %2086 = vmatmul.mubr.f32.gmra.mxu0 %v1896
    %v2087 = vpop.f32.mrf.mxu0
    %v2088 = vadd.f32 0.0, %v2087
    %v2089 = vpop.f32.mrf.mxu0
    %2090 = vmatprep.mubr.f32.mxu0 0.0
    %2091 = vmatmul.mubr.f32.gmra.mxu0 %v1899
    %v2092 = vpop.f32.mrf.mxu0
    %v2093 = vadd.f32 0.0, %v2092
    %v2094 = vpop.f32.mrf.mxu0
    %2095 = vmatprep.mubr.f32.mxu0 0.0
    %2096 = vmatmul.mubr.f32.gmra.mxu0 %v1902
    %v2097 = vpop.f32.mrf.mxu0
    %v2098 = vadd.f32 0.0, %v2097
    %v2099 = vpop.f32.mrf.mxu0
    %2100 = vmatprep.mubr.f32.mxu0 0.0
    %2101 = vmatmul.mubr.f32.gmra.mxu0 %v1905
    %v2102 = vpop.f32.mrf.mxu0
    %v2103 = vadd.f32 0.0, %v2102
    %v2104 = vpop.f32.mrf.mxu0
    %2105 = vmatprep.mubr.f32.mxu0 0.0
    %2106 = vmatmul.mubr.f32.gmra.mxu0 %v1908
    %v2107 = vpop.f32.mrf.mxu0
    %v2108 = vadd.f32 0.0, %v2107
    %v2109 = vpop.f32.mrf.mxu0
    %2110 = vmatprep.mubr.f32.mxu0 0.0
    %2111 = vmatmul.mubr.f32.gmra.mxu0 %v1911
    %v2112 = vpop.f32.mrf.mxu0
    %v2113 = vadd.f32 0.0, %v2112
    %v2114 = vpop.f32.mrf.mxu0
    %2115 = vmatprep.mubr.f32.mxu0 0.0
    %2116 = vmatmul.mubr.f32.gmra.mxu0 %v1914
    %v2117 = vpop.f32.mrf.mxu0
    %v2118 = vadd.f32 0.0, %v2117
    %v2119 = vpop.f32.mrf.mxu0
    %2120 = vmatprep.mubr.f32.mxu0 0.0
    %2121 = vmatmul.mubr.f32.gmra.mxu0 %v1917
    %v2122 = vpop.f32.mrf.mxu0
    %v2123 = vadd.f32 0.0, %v2122
    %v2124 = vpop.f32.mrf.mxu0
    %2125 = vmatprep.mubr.f32.mxu0 0.0
    %2126 = vmatmul.mubr.f32.gmra.mxu0 %v1920
    %v2127 = vpop.f32.mrf.mxu0
    %v2128 = vadd.f32 0.0, %v2127
    %v2129 = vpop.f32.mrf.mxu0
    %2130 = vmatprep.mubr.f32.mxu0 0.0
    %2131 = vmatmul.mubr.f32.gmra.mxu0 %v1923
    %v2132 = vpop.f32.mrf.mxu0
    %v2133 = vadd.f32 0.0, %v2132
    %v2134 = vpop.f32.mrf.mxu0
    %2135 = vmatprep.mubr.f32.mxu0 0.0
    %2136 = vmatmul.mubr.f32.gmra.mxu0 %v1926
    %v2137 = vpop.f32.mrf.mxu0
    %v2138 = vadd.f32 0.0, %v2137
    %v2139 = vpop.f32.mrf.mxu0
    %2140 = vmatprep.mubr.f32.mxu0 0.0
    %2141 = vmatmul.mubr.f32.gmra.mxu0 %v1929
    %v2142 = vpop.f32.mrf.mxu0
    %v2143 = vadd.f32 0.0, %v2142
    %v2144 = vpop.f32.mrf.mxu0
    %2145 = vmatprep.mubr.f32.mxu0 0.0
    %2146 = vmatmul.mubr.f32.gmra.mxu0 %v1932
    %v2147 = vpop.f32.mrf.mxu0
    %v2148 = vadd.f32 0.0, %v2147
    %v2149 = vpop.f32.mrf.mxu0
    %2150 = vmatprep.mubr.f32.mxu0 0.0
    %2151 = vmatmul.mubr.f32.gmra.mxu0 %v1935
    %v2152 = vpop.f32.mrf.mxu0
    %v2153 = vadd.f32 0.0, %v2152
    %v2154 = vpop.f32.mrf.mxu0
    %2155 = vmatprep.mubr.f32.mxu0 0.0
    %2156 = vmatmul.mubr.f32.gmra.mxu0 %v1938
    %v2157 = vpop.f32.mrf.mxu0
    %v2158 = vadd.f32 0.0, %v2157
    %v2159 = vpop.f32.mrf.mxu0
    %2160 = vmatprep.mubr.f32.mxu0 0.0
    %2161 = vmatmul.mubr.f32.gmra.mxu0 %v1941
    %v2162 = vpop.f32.mrf.mxu0
    %v2163 = vadd.f32 0.0, %v2162
    %v2164 = vpop.f32.mrf.mxu0
    %2165 = vmatprep.mubr.f32.mxu0 0.0
    %2166 = vmatmul.mubr.f32.gmra.mxu0 %v1944
    %v2167 = vpop.f32.mrf.mxu0
    %v2168 = vadd.f32 0.0, %v2167
    %v2169 = vpop.f32.mrf.mxu0
    %2170 = vdwg.mxu0
    %2171 = vmatprep.subr.mxu0 0.0
    %2172 = vmatpush1.msra.mxu0 %v2088
    %2173 = vmatprep.subr.mxu0 0.0
    %2174 = vmatpush1.msra.mxu0 %v2083
    %2175 = vmatprep.subr.mxu0 0.0
    %2176 = vmatpush1.msra.mxu0 %v2078
    %2177 = vmatprep.subr.mxu0 0.0
    %2178 = vmatpush1.msra.mxu0 %v2073
    %2179 = vmatprep.subr.mxu0 0.0
    %2180 = vmatpush1.msra.mxu0 %v2068
    %2181 = vmatprep.subr.mxu0 0.0
    %2182 = vmatpush1.msra.mxu0 %v2063
    %2183 = vmatprep.subr.mxu0 0.0
    %2184 = vmatpush1.msra.mxu0 %v2058
    %2185 = vmatprep.subr.mxu0 0.0
    %2186 = vmatpush1.msra.mxu0 %v2053
    %2187 = vmatprep.subr.mxu0 0.0
    %2188 = vmatpush1.msra.mxu0 %v2048
    %2189 = vmatprep.subr.mxu0 0.0
    %2190 = vmatpush1.msra.mxu0 %v2043
    %2191 = vmatprep.subr.mxu0 0.0
    %2192 = vmatpush1.msra.mxu0 %v2038
    %2193 = vmatprep.subr.mxu0 0.0
    %2194 = vmatpush1.msra.mxu0 %v2033
    %2195 = vmatprep.subr.mxu0 0.0
    %2196 = vmatpush1.msra.mxu0 %v2028
    %2197 = vmatprep.subr.mxu0 0.0
    %2198 = vmatpush1.msra.mxu0 %v2023
    %2199 = vmatprep.subr.mxu0 0.0
    %2200 = vmatpush1.msra.mxu0 %v2018
    %2201 = vmatprep.subr.mxu0 0.0
    %2202 = vmatpush1.msra.mxu0 %v2013
    %2203 = vmatprep.subr.mxu0 0.0
    %2204 = vmatpush2.msra.mxu0 %v2168
    %2205 = vmatprep.subr.mxu0 0.0
    %2206 = vmatpush2.msra.mxu0 %v2163
    %2207 = vmatprep.subr.mxu0 0.0
    %2208 = vmatpush2.msra.mxu0 %v2158
    %2209 = vmatprep.subr.mxu0 0.0
    %2210 = vmatpush2.msra.mxu0 %v2153
    %2211 = vmatprep.subr.mxu0 0.0
    %2212 = vmatpush2.msra.mxu0 %v2148
    %2213 = vmatprep.subr.mxu0 0.0
    %2214 = vmatpush2.msra.mxu0 %v2143
    %2215 = vmatprep.subr.mxu0 0.0
    %2216 = vmatpush2.msra.mxu0 %v2138
    %2217 = vmatprep.subr.mxu0 0.0
    %2218 = vmatpush2.msra.mxu0 %v2133
    %2219 = vmatprep.subr.mxu0 0.0
    %2220 = vmatpush2.msra.mxu0 %v2128
    %2221 = vmatprep.subr.mxu0 0.0
    %2222 = vmatpush2.msra.mxu0 %v2123
    %2223 = vmatprep.subr.mxu0 0.0
    %2224 = vmatpush2.msra.mxu0 %v2118
    %2225 = vmatprep.subr.mxu0 0.0
    %2226 = vmatpush2.msra.mxu0 %v2113
    %2227 = vmatprep.subr.mxu0 0.0
    %2228 = vmatpush2.msra.mxu0 %v2108
    %2229 = vmatprep.subr.mxu0 0.0
    %2230 = vmatpush2.msra.mxu0 %v2103
    %2231 = vmatprep.subr.mxu0 0.0
    %2232 = vmatpush2.msra.mxu0 %v2098
    %2233 = vmatprep.subr.mxu0 0.0
    %2234 = vmatpush2.msra.mxu0 %v2093
    %2235 = vmatprep.mubr.f32.mxu0 1.0
    %2236 = vmatmul.mubr.f32.gmra.mxu0 1.0
    %v2237 = vpop.f32.mrf.mxu0
    %v2238 = vadd.f32 0.0, %v2237
    %v2239 = vpop.f32.mrf.mxu0
    %2240 = vdwg.mxu0
    %v2241 = vmul.f32 %v2013, %v2013
    %v2242 = vmul.f32 %v2018, %v2018
    %v2243 = vmul.f32 %v2023, %v2023
    %v2244 = vmul.f32 %v2028, %v2028
    %v2245 = vmul.f32 %v2033, %v2033
    %v2246 = vmul.f32 %v2038, %v2038
    %v2247 = vmul.f32 %v2043, %v2043
    %v2248 = vmul.f32 %v2048, %v2048
    %v2249 = vmul.f32 %v2053, %v2053
    %v2250 = vmul.f32 %v2058, %v2058
    %v2251 = vmul.f32 %v2063, %v2063
    %v2252 = vmul.f32 %v2068, %v2068
    %v2253 = vmul.f32 %v2073, %v2073
    %v2254 = vmul.f32 %v2078, %v2078
    %v2255 = vmul.f32 %v2083, %v2083
    %v2256 = vmul.f32 %v2088, %v2088
    %v2257 = vmul.f32 %v2093, %v2093
    %v2258 = vmul.f32 %v2098, %v2098
    %v2259 = vmul.f32 %v2103, %v2103
    %v2260 = vmul.f32 %v2108, %v2108
    %v2261 = vmul.f32 %v2113, %v2113
    %v2262 = vmul.f32 %v2118, %v2118
    %v2263 = vmul.f32 %v2123, %v2123
    %v2264 = vmul.f32 %v2128, %v2128
    %v2265 = vmul.f32 %v2133, %v2133
    %v2266 = vmul.f32 %v2138, %v2138
    %v2267 = vmul.f32 %v2143, %v2143
    %v2268 = vmul.f32 %v2148, %v2148
    %v2269 = vmul.f32 %v2153, %v2153
    %v2270 = vmul.f32 %v2158, %v2158
    %v2271 = vmul.f32 %v2163, %v2163
    %v2272 = vmul.f32 %v2168, %v2168
    %2273 = vmatprep.subr.mxu0 0.0
    %2274 = vmatpush1.msra.mxu0 %v2256
    %2275 = vmatprep.subr.mxu0 0.0
    %2276 = vmatpush1.msra.mxu0 %v2255
    %2277 = vmatprep.subr.mxu0 0.0
    %2278 = vmatpush1.msra.mxu0 %v2254
    %2279 = vmatprep.subr.mxu0 0.0
    %2280 = vmatpush1.msra.mxu0 %v2253
    %2281 = vmatprep.subr.mxu0 0.0
    %2282 = vmatpush1.msra.mxu0 %v2252
    %2283 = vmatprep.subr.mxu0 0.0
    %2284 = vmatpush1.msra.mxu0 %v2251
    %2285 = vmatprep.subr.mxu0 0.0
    %2286 = vmatpush1.msra.mxu0 %v2250
    %2287 = vmatprep.subr.mxu0 0.0
    %2288 = vmatpush1.msra.mxu0 %v2249
    %2289 = vmatprep.subr.mxu0 0.0
    %2290 = vmatpush1.msra.mxu0 %v2248
    %2291 = vmatprep.subr.mxu0 0.0
    %2292 = vmatpush1.msra.mxu0 %v2247
    %2293 = vmatprep.subr.mxu0 0.0
    %2294 = vmatpush1.msra.mxu0 %v2246
    %2295 = vmatprep.subr.mxu0 0.0
    %2296 = vmatpush1.msra.mxu0 %v2245
    %2297 = vmatprep.subr.mxu0 0.0
    %2298 = vmatpush1.msra.mxu0 %v2244
    %2299 = vmatprep.subr.mxu0 0.0
    %2300 = vmatpush1.msra.mxu0 %v2243
    %2301 = vmatprep.subr.mxu0 0.0
    %2302 = vmatpush1.msra.mxu0 %v2242
    %2303 = vmatprep.subr.mxu0 0.0
    %2304 = vmatpush1.msra.mxu0 %v2241
    %2305 = vmatprep.subr.mxu0 0.0
    %2306 = vmatpush2.msra.mxu0 %v2272
    %2307 = vmatprep.subr.mxu0 0.0
    %2308 = vmatpush2.msra.mxu0 %v2271
    %2309 = vmatprep.subr.mxu0 0.0
    %2310 = vmatpush2.msra.mxu0 %v2270
    %2311 = vmatprep.subr.mxu0 0.0
    %2312 = vmatpush2.msra.mxu0 %v2269
    %2313 = vmatprep.subr.mxu0 0.0
    %2314 = vmatpush2.msra.mxu0 %v2268
    %2315 = vmatprep.subr.mxu0 0.0
    %2316 = vmatpush2.msra.mxu0 %v2267
    %2317 = vmatprep.subr.mxu0 0.0
    %2318 = vmatpush2.msra.mxu0 %v2266
    %2319 = vmatprep.subr.mxu0 0.0
    %2320 = vmatpush2.msra.mxu0 %v2265
    %2321 = vmatprep.subr.mxu0 0.0
    %2322 = vmatpush2.msra.mxu0 %v2264
    %2323 = vmatprep.subr.mxu0 0.0
    %2324 = vmatpush2.msra.mxu0 %v2263
    %2325 = vmatprep.subr.mxu0 0.0
    %2326 = vmatpush2.msra.mxu0 %v2262
    %2327 = vmatprep.subr.mxu0 0.0
    %2328 = vmatpush2.msra.mxu0 %v2261
    %2329 = vmatprep.subr.mxu0 0.0
    %2330 = vmatpush2.msra.mxu0 %v2260
    %2331 = vmatprep.subr.mxu0 0.0
    %2332 = vmatpush2.msra.mxu0 %v2259
    %2333 = vmatprep.subr.mxu0 0.0
    %2334 = vmatpush2.msra.mxu0 %v2258
    %2335 = vmatprep.subr.mxu0 0.0
    %2336 = vmatpush2.msra.mxu0 %v2257
    %2337 = vmatprep.mubr.f32.mxu0 1.0
    %2338 = vmatmul.mubr.f32.gmra.mxu0 1.0
    %v2339 = vpop.f32.mrf.mxu0
    %v2340 = vadd.f32 0.0, %v2339
    %v2341 = vpop.f32.mrf.mxu0
    %2342 = vdwg.mxu0
    %v2343 = vmul.f32 %v2238, 0.00390625
    %v2344 = vmul.f32 %v2340, 0.00390625
    %v2345 = vmul.f32 %v2343, %v2343
    %v2346 = vsub.f32 %v2344, %v2345
    %v2347 = vmax.f32 %v2346, 0.0
    %v2348 = vld [vmem:[%s3 + $0x3] sm:$0x1]
    %v2349 = vadd.f32 %v2347, 1e-05
    %v2350 = vrsqrt.pop %v2349
    %v2351 = vmul.f32 %v2348, %v2350
    %v2352 = vld [vmem:[%s4 + $0x3] sm:$0x1]
    %v2353 = vmul.f32 %v2343, %v2351
    %v2354 = vsub.f32 %v2352, %v2353
    %v2355 = vlaneseq
    %v2356 = vshrl.u32 %v2355, 7
    %v2357 = vsub.s32 0, %v2356
    %v2358 = vrot.slane %v2351, %v2357
    %v2359 = vmul.f32 %v2013, %v2358
    %v2360 = vmul.f32 %v2018, %v2358
    %v2361 = vmul.f32 %v2023, %v2358
    %v2362 = vmul.f32 %v2028, %v2358
    %v2363 = vmul.f32 %v2033, %v2358
    %v2364 = vmul.f32 %v2038, %v2358
    %v2365 = vmul.f32 %v2043, %v2358
    %v2366 = vmul.f32 %v2048, %v2358
    %v2367 = vmul.f32 %v2053, %v2358
    %v2368 = vmul.f32 %v2058, %v2358
    %v2369 = vmul.f32 %v2063, %v2358
    %v2370 = vmul.f32 %v2068, %v2358
    %v2371 = vmul.f32 %v2073, %v2358
    %v2372 = vmul.f32 %v2078, %v2358
    %v2373 = vmul.f32 %v2083, %v2358
    %v2374 = vmul.f32 %v2088, %v2358
    %v2375 = vmul.f32 %v2093, %v2358
    %v2376 = vmul.f32 %v2098, %v2358
    %v2377 = vmul.f32 %v2103, %v2358
    %v2378 = vmul.f32 %v2108, %v2358
    %v2379 = vmul.f32 %v2113, %v2358
    %v2380 = vmul.f32 %v2118, %v2358
    %v2381 = vmul.f32 %v2123, %v2358
    %v2382 = vmul.f32 %v2128, %v2358
    %v2383 = vmul.f32 %v2133, %v2358
    %v2384 = vmul.f32 %v2138, %v2358
    %v2385 = vmul.f32 %v2143, %v2358
    %v2386 = vmul.f32 %v2148, %v2358
    %v2387 = vmul.f32 %v2153, %v2358
    %v2388 = vmul.f32 %v2158, %v2358
    %v2389 = vmul.f32 %v2163, %v2358
    %v2390 = vmul.f32 %v2168, %v2358
    %v2391 = vlaneseq
    %v2392 = vshrl.u32 %v2391, 7
    %v2393 = vsub.s32 0, %v2392
    %v2394 = vrot.slane %v2354, %v2393
    %v2395 = vadd.f32 %v2359, %v2394
    %v2396 = vadd.f32 %v2360, %v2394
    %v2397 = vadd.f32 %v2361, %v2394
    %v2398 = vadd.f32 %v2362, %v2394
    %v2399 = vadd.f32 %v2363, %v2394
    %v2400 = vadd.f32 %v2364, %v2394
    %v2401 = vadd.f32 %v2365, %v2394
    %v2402 = vadd.f32 %v2366, %v2394
    %v2403 = vadd.f32 %v2367, %v2394
    %v2404 = vadd.f32 %v2368, %v2394
    %v2405 = vadd.f32 %v2369, %v2394
    %v2406 = vadd.f32 %v2370, %v2394
    %v2407 = vadd.f32 %v2371, %v2394
    %v2408 = vadd.f32 %v2372, %v2394
    %v2409 = vadd.f32 %v2373, %v2394
    %v2410 = vadd.f32 %v2374, %v2394
    %v2411 = vadd.f32 %v2375, %v2394
    %v2412 = vadd.f32 %v2376, %v2394
    %v2413 = vadd.f32 %v2377, %v2394
    %v2414 = vadd.f32 %v2378, %v2394
    %v2415 = vadd.f32 %v2379, %v2394
    %v2416 = vadd.f32 %v2380, %v2394
    %v2417 = vadd.f32 %v2381, %v2394
    %v2418 = vadd.f32 %v2382, %v2394
    %v2419 = vadd.f32 %v2383, %v2394
    %v2420 = vadd.f32 %v2384, %v2394
    %v2421 = vadd.f32 %v2385, %v2394
    %v2422 = vadd.f32 %v2386, %v2394
    %v2423 = vadd.f32 %v2387, %v2394
    %v2424 = vadd.f32 %v2388, %v2394
    %v2425 = vadd.f32 %v2389, %v2394
    %v2426 = vadd.f32 %v2390, %v2394
    %v2427 = vmax.f32 %v2395, 0.0
    %v2428 = vmax.f32 %v2396, 0.0
    %v2429 = vmax.f32 %v2397, 0.0
    %v2430 = vmax.f32 %v2398, 0.0
    %v2431 = vmax.f32 %v2399, 0.0
    %v2432 = vmax.f32 %v2400, 0.0
    %v2433 = vmax.f32 %v2401, 0.0
    %v2434 = vmax.f32 %v2402, 0.0
    %v2435 = vmax.f32 %v2403, 0.0
    %v2436 = vmax.f32 %v2404, 0.0
    %v2437 = vmax.f32 %v2405, 0.0
    %v2438 = vmax.f32 %v2406, 0.0
    %v2439 = vmax.f32 %v2407, 0.0
    %v2440 = vmax.f32 %v2408, 0.0
    %v2441 = vmax.f32 %v2409, 0.0
    %v2442 = vmax.f32 %v2410, 0.0
    %v2443 = vmax.f32 %v2411, 0.0
    %v2444 = vmax.f32 %v2412, 0.0
    %v2445 = vmax.f32 %v2413, 0.0
    %v2446 = vmax.f32 %v2414, 0.0
    %v2447 = vmax.f32 %v2415, 0.0
    %v2448 = vmax.f32 %v2416, 0.0
    %v2449 = vmax.f32 %v2417, 0.0
    %v2450 = vmax.f32 %v2418, 0.0
    %v2451 = vmax.f32 %v2419, 0.0
    %v2452 = vmax.f32 %v2420, 0.0
    %v2453 = vmax.f32 %v2421, 0.0
    %v2454 = vmax.f32 %v2422, 0.0
    %v2455 = vmax.f32 %v2423, 0.0
    %v2456 = vmax.f32 %v2424, 0.0
    %v2457 = vmax.f32 %v2425, 0.0
    %v2458 = vmax.f32 %v2426, 0.0
    %s2459 = scalar_lea.vmem [#allocation5], 96
    %v2460 = vld [vmem:[%s2459] sm:$0xff]
    %v2461 = vld [vmem:[%s2459 + $0x8] sm:$0xff]
    %v2462 = vld [vmem:[%s2459 + $0x10] sm:$0xff]
    %v2463 = vld [vmem:[%s2459 + $0x18] sm:$0xff]
    %v2465 = vsel %vm621, %v2427, 0
    %v2468 = vsel %vm621, %v2428, 0
    %v2471 = vsel %vm621, %v2429, 0
    %v2474 = vsel %vm621, %v2430, 0
    %v2477 = vsel %vm621, %v2431, 0
    %v2480 = vsel %vm621, %v2432, 0
    %v2483 = vsel %vm621, %v2433, 0
    %v2486 = vsel %vm621, %v2434, 0
    %v2489 = vsel %vm621, %v2435, 0
    %v2492 = vsel %vm621, %v2436, 0
    %v2495 = vsel %vm621, %v2437, 0
    %v2498 = vsel %vm621, %v2438, 0
    %v2501 = vsel %vm621, %v2439, 0
    %v2504 = vsel %vm621, %v2440, 0
    %v2507 = vsel %vm621, %v2441, 0
    %v2510 = vsel %vm621, %v2442, 0
    %v2513 = vsel %vm621, %v2443, 0
    %v2516 = vsel %vm621, %v2444, 0
    %v2519 = vsel %vm621, %v2445, 0
    %v2522 = vsel %vm621, %v2446, 0
    %v2525 = vsel %vm621, %v2447, 0
    %v2528 = vsel %vm621, %v2448, 0
    %v2531 = vsel %vm621, %v2449, 0
    %v2534 = vsel %vm621, %v2450, 0
    %v2537 = vsel %vm621, %v2451, 0
    %v2540 = vsel %vm621, %v2452, 0
    %v2543 = vsel %vm621, %v2453, 0
    %v2546 = vsel %vm621, %v2454, 0
    %v2549 = vsel %vm621, %v2455, 0
    %v2552 = vsel %vm621, %v2456, 0
    %v2555 = vsel %vm621, %v2457, 0
    %v2558 = vsel %vm621, %v2458, 0
    %2560 = vmatprep.subr.mxu0 0.0
    %2561 = vmatpush1.msra.mxu0 0.0
    %2562 = vmatprep.subr.mxu0 0.0
    %2563 = vmatpush1.msra.mxu0 0.0
    %2564 = vmatprep.subr.mxu0 0.0
    %2565 = vmatpush1.msra.mxu0 0.0
    %2566 = vmatprep.subr.mxu0 0.0
    %2567 = vmatpush1.msra.mxu0 0.0
    %2568 = vmatprep.subr.mxu0 0.0
    %2569 = vmatpush1.msra.mxu0 0.0
    %2570 = vmatprep.subr.mxu0 0.0
    %2571 = vmatpush1.msra.mxu0 0.0
    %2572 = vmatprep.subr.mxu0 0.0
    %2573 = vmatpush1.msra.mxu0 0.0
    %2574 = vmatprep.subr.mxu0 0.0
    %2575 = vmatpush1.msra.mxu0 0.0
    %2576 = vmatprep.subr.mxu0 0.0
    %2577 = vmatpush1.msra.mxu0 0.0
    %2578 = vmatprep.subr.mxu0 0.0
    %2579 = vmatpush1.msra.mxu0 0.0
    %2580 = vmatprep.subr.mxu0 0.0
    %2581 = vmatpush1.msra.mxu0 0.0
    %2582 = vmatprep.subr.mxu0 0.0
    %2583 = vmatpush1.msra.mxu0 0.0
    %2584 = vmatprep.subr.mxu0 0.0
    %2585 = vmatpush1.msra.mxu0 %v2463
    %2586 = vmatprep.subr.mxu0 0.0
    %2587 = vmatpush1.msra.mxu0 %v2462
    %2588 = vmatprep.subr.mxu0 0.0
    %2589 = vmatpush1.msra.mxu0 %v2461
    %2590 = vmatprep.subr.mxu0 0.0
    %2591 = vmatpush1.msra.mxu0 %v2460
    %2592 = vmatprep.subr.mxu0 0.0
    %2593 = vmatpush2.msra.mxu0 0.0
    %2594 = vmatprep.subr.mxu0 0.0
    %2595 = vmatpush2.msra.mxu0 0.0
    %2596 = vmatprep.subr.mxu0 0.0
    %2597 = vmatpush2.msra.mxu0 0.0
    %2598 = vmatprep.subr.mxu0 0.0
    %2599 = vmatpush2.msra.mxu0 0.0
    %2600 = vmatprep.subr.mxu0 0.0
    %2601 = vmatpush2.msra.mxu0 0.0
    %2602 = vmatprep.subr.mxu0 0.0
    %2603 = vmatpush2.msra.mxu0 0.0
    %2604 = vmatprep.subr.mxu0 0.0
    %2605 = vmatpush2.msra.mxu0 0.0
    %2606 = vmatprep.subr.mxu0 0.0
    %2607 = vmatpush2.msra.mxu0 0.0
    %2608 = vmatprep.subr.mxu0 0.0
    %2609 = vmatpush2.msra.mxu0 0.0
    %2610 = vmatprep.subr.mxu0 0.0
    %2611 = vmatpush2.msra.mxu0 0.0
    %2612 = vmatprep.subr.mxu0 0.0
    %2613 = vmatpush2.msra.mxu0 0.0
    %2614 = vmatprep.subr.mxu0 0.0
    %2615 = vmatpush2.msra.mxu0 0.0
    %2616 = vmatprep.subr.mxu0 0.0
    %2617 = vmatpush2.msra.mxu0 0.0
    %2618 = vmatprep.subr.mxu0 0.0
    %2619 = vmatpush2.msra.mxu0 0.0
    %2620 = vmatprep.subr.mxu0 0.0
    %2621 = vmatpush2.msra.mxu0 0.0
    %2622 = vmatprep.subr.mxu0 0.0
    %2623 = vmatpush2.msra.mxu0 0.0
    %2624 = vmatprep.mubr.f32.mxu0 0.0
    %2625 = vmatmul.mubr.f32.gmra.mxu0 %v2465
    %v2626 = vpop.f32.mrf.mxu0
    %v2627 = vadd.f32 0.0, %v2626
    %v2628 = vpop.f32.mrf.mxu0
    %2629 = vmatprep.mubr.f32.mxu0 0.0
    %2630 = vmatmul.mubr.f32.gmra.mxu0 %v2468
    %v2631 = vpop.f32.mrf.mxu0
    %v2632 = vadd.f32 0.0, %v2631
    %v2633 = vpop.f32.mrf.mxu0
    %2634 = vmatprep.mubr.f32.mxu0 0.0
    %2635 = vmatmul.mubr.f32.gmra.mxu0 %v2471
    %v2636 = vpop.f32.mrf.mxu0
    %v2637 = vadd.f32 0.0, %v2636
    %v2638 = vpop.f32.mrf.mxu0
    %2639 = vmatprep.mubr.f32.mxu0 0.0
    %2640 = vmatmul.mubr.f32.gmra.mxu0 %v2474
    %v2641 = vpop.f32.mrf.mxu0
    %v2642 = vadd.f32 0.0, %v2641
    %v2643 = vpop.f32.mrf.mxu0
    %2644 = vmatprep.mubr.f32.mxu0 0.0
    %2645 = vmatmul.mubr.f32.gmra.mxu0 %v2477
    %v2646 = vpop.f32.mrf.mxu0
    %v2647 = vadd.f32 0.0, %v2646
    %v2648 = vpop.f32.mrf.mxu0
    %2649 = vmatprep.mubr.f32.mxu0 0.0
    %2650 = vmatmul.mubr.f32.gmra.mxu0 %v2480
    %v2651 = vpop.f32.mrf.mxu0
    %v2652 = vadd.f32 0.0, %v2651
    %v2653 = vpop.f32.mrf.mxu0
    %2654 = vmatprep.mubr.f32.mxu0 0.0
    %2655 = vmatmul.mubr.f32.gmra.mxu0 %v2483
    %v2656 = vpop.f32.mrf.mxu0
    %v2657 = vadd.f32 0.0, %v2656
    %v2658 = vpop.f32.mrf.mxu0
    %2659 = vmatprep.mubr.f32.mxu0 0.0
    %2660 = vmatmul.mubr.f32.gmra.mxu0 %v2486
    %v2661 = vpop.f32.mrf.mxu0
    %v2662 = vadd.f32 0.0, %v2661
    %v2663 = vpop.f32.mrf.mxu0
    %2664 = vmatprep.mubr.f32.mxu0 0.0
    %2665 = vmatmul.mubr.f32.gmra.mxu0 %v2489
    %v2666 = vpop.f32.mrf.mxu0
    %v2667 = vadd.f32 0.0, %v2666
    %v2668 = vpop.f32.mrf.mxu0
    %2669 = vmatprep.mubr.f32.mxu0 0.0
    %2670 = vmatmul.mubr.f32.gmra.mxu0 %v2492
    %v2671 = vpop.f32.mrf.mxu0
    %v2672 = vadd.f32 0.0, %v2671
    %v2673 = vpop.f32.mrf.mxu0
    %2674 = vmatprep.mubr.f32.mxu0 0.0
    %2675 = vmatmul.mubr.f32.gmra.mxu0 %v2495
    %v2676 = vpop.f32.mrf.mxu0
    %v2677 = vadd.f32 0.0, %v2676
    %v2678 = vpop.f32.mrf.mxu0
    %2679 = vmatprep.mubr.f32.mxu0 0.0
    %2680 = vmatmul.mubr.f32.gmra.mxu0 %v2498
    %v2681 = vpop.f32.mrf.mxu0
    %v2682 = vadd.f32 0.0, %v2681
    %v2683 = vpop.f32.mrf.mxu0
    %2684 = vmatprep.mubr.f32.mxu0 0.0
    %2685 = vmatmul.mubr.f32.gmra.mxu0 %v2501
    %v2686 = vpop.f32.mrf.mxu0
    %v2687 = vadd.f32 0.0, %v2686
    %v2688 = vpop.f32.mrf.mxu0
    %2689 = vmatprep.mubr.f32.mxu0 0.0
    %2690 = vmatmul.mubr.f32.gmra.mxu0 %v2504
    %v2691 = vpop.f32.mrf.mxu0
    %v2692 = vadd.f32 0.0, %v2691
    %v2693 = vpop.f32.mrf.mxu0
    %2694 = vmatprep.mubr.f32.mxu0 0.0
    %2695 = vmatmul.mubr.f32.gmra.mxu0 %v2507
    %v2696 = vpop.f32.mrf.mxu0
    %v2697 = vadd.f32 0.0, %v2696
    %v2698 = vpop.f32.mrf.mxu0
    %2699 = vmatprep.mubr.f32.mxu0 0.0
    %2700 = vmatmul.mubr.f32.gmra.mxu0 %v2510
    %v2701 = vpop.f32.mrf.mxu0
    %v2702 = vadd.f32 0.0, %v2701
    %v2703 = vpop.f32.mrf.mxu0
    %2704 = vmatprep.mubr.f32.mxu0 0.0
    %2705 = vmatmul.mubr.f32.gmra.mxu0 %v2513
    %v2706 = vpop.f32.mrf.mxu0
    %v2707 = vadd.f32 0.0, %v2706
    %v2708 = vpop.f32.mrf.mxu0
    %2709 = vmatprep.mubr.f32.mxu0 0.0
    %2710 = vmatmul.mubr.f32.gmra.mxu0 %v2516
    %v2711 = vpop.f32.mrf.mxu0
    %v2712 = vadd.f32 0.0, %v2711
    %v2713 = vpop.f32.mrf.mxu0
    %2714 = vmatprep.mubr.f32.mxu0 0.0
    %2715 = vmatmul.mubr.f32.gmra.mxu0 %v2519
    %v2716 = vpop.f32.mrf.mxu0
    %v2717 = vadd.f32 0.0, %v2716
    %v2718 = vpop.f32.mrf.mxu0
    %2719 = vmatprep.mubr.f32.mxu0 0.0
    %2720 = vmatmul.mubr.f32.gmra.mxu0 %v2522
    %v2721 = vpop.f32.mrf.mxu0
    %v2722 = vadd.f32 0.0, %v2721
    %v2723 = vpop.f32.mrf.mxu0
    %2724 = vmatprep.mubr.f32.mxu0 0.0
    %2725 = vmatmul.mubr.f32.gmra.mxu0 %v2525
    %v2726 = vpop.f32.mrf.mxu0
    %v2727 = vadd.f32 0.0, %v2726
    %v2728 = vpop.f32.mrf.mxu0
    %2729 = vmatprep.mubr.f32.mxu0 0.0
    %2730 = vmatmul.mubr.f32.gmra.mxu0 %v2528
    %v2731 = vpop.f32.mrf.mxu0
    %v2732 = vadd.f32 0.0, %v2731
    %v2733 = vpop.f32.mrf.mxu0
    %2734 = vmatprep.mubr.f32.mxu0 0.0
    %2735 = vmatmul.mubr.f32.gmra.mxu0 %v2531
    %v2736 = vpop.f32.mrf.mxu0
    %v2737 = vadd.f32 0.0, %v2736
    %v2738 = vpop.f32.mrf.mxu0
    %2739 = vmatprep.mubr.f32.mxu0 0.0
    %2740 = vmatmul.mubr.f32.gmra.mxu0 %v2534
    %v2741 = vpop.f32.mrf.mxu0
    %v2742 = vadd.f32 0.0, %v2741
    %v2743 = vpop.f32.mrf.mxu0
    %2744 = vmatprep.mubr.f32.mxu0 0.0
    %2745 = vmatmul.mubr.f32.gmra.mxu0 %v2537
    %v2746 = vpop.f32.mrf.mxu0
    %v2747 = vadd.f32 0.0, %v2746
    %v2748 = vpop.f32.mrf.mxu0
    %2749 = vmatprep.mubr.f32.mxu0 0.0
    %2750 = vmatmul.mubr.f32.gmra.mxu0 %v2540
    %v2751 = vpop.f32.mrf.mxu0
    %v2752 = vadd.f32 0.0, %v2751
    %v2753 = vpop.f32.mrf.mxu0
    %2754 = vmatprep.mubr.f32.mxu0 0.0
    %2755 = vmatmul.mubr.f32.gmra.mxu0 %v2543
    %v2756 = vpop.f32.mrf.mxu0
    %v2757 = vadd.f32 0.0, %v2756
    %v2758 = vpop.f32.mrf.mxu0
    %2759 = vmatprep.mubr.f32.mxu0 0.0
    %2760 = vmatmul.mubr.f32.gmra.mxu0 %v2546
    %v2761 = vpop.f32.mrf.mxu0
    %v2762 = vadd.f32 0.0, %v2761
    %v2763 = vpop.f32.mrf.mxu0
    %2764 = vmatprep.mubr.f32.mxu0 0.0
    %2765 = vmatmul.mubr.f32.gmra.mxu0 %v2549
    %v2766 = vpop.f32.mrf.mxu0
    %v2767 = vadd.f32 0.0, %v2766
    %v2768 = vpop.f32.mrf.mxu0
    %2769 = vmatprep.mubr.f32.mxu0 0.0
    %2770 = vmatmul.mubr.f32.gmra.mxu0 %v2552
    %v2771 = vpop.f32.mrf.mxu0
    %v2772 = vadd.f32 0.0, %v2771
    %v2773 = vpop.f32.mrf.mxu0
    %2774 = vmatprep.mubr.f32.mxu0 0.0
    %2775 = vmatmul.mubr.f32.gmra.mxu0 %v2555
    %v2776 = vpop.f32.mrf.mxu0
    %v2777 = vadd.f32 0.0, %v2776
    %v2778 = vpop.f32.mrf.mxu0
    %2779 = vmatprep.mubr.f32.mxu0 0.0
    %2780 = vmatmul.mubr.f32.gmra.mxu0 %v2558
    %v2781 = vpop.f32.mrf.mxu0
    %v2782 = vadd.f32 0.0, %v2781
    %v2783 = vpop.f32.mrf.mxu0
    %2784 = vdwg.mxu0
    %2785 = vmatprep.subr.mxu0 0.0
    %2786 = vmatpush1.msra.mxu0 %v2702
    %2787 = vmatprep.subr.mxu0 0.0
    %2788 = vmatpush1.msra.mxu0 %v2697
    %2789 = vmatprep.subr.mxu0 0.0
    %2790 = vmatpush1.msra.mxu0 %v2692
    %2791 = vmatprep.subr.mxu0 0.0
    %2792 = vmatpush1.msra.mxu0 %v2687
    %2793 = vmatprep.subr.mxu0 0.0
    %2794 = vmatpush1.msra.mxu0 %v2682
    %2795 = vmatprep.subr.mxu0 0.0
    %2796 = vmatpush1.msra.mxu0 %v2677
    %2797 = vmatprep.subr.mxu0 0.0
    %2798 = vmatpush1.msra.mxu0 %v2672
    %2799 = vmatprep.subr.mxu0 0.0
    %2800 = vmatpush1.msra.mxu0 %v2667
    %2801 = vmatprep.subr.mxu0 0.0
    %2802 = vmatpush1.msra.mxu0 %v2662
    %2803 = vmatprep.subr.mxu0 0.0
    %2804 = vmatpush1.msra.mxu0 %v2657
    %2805 = vmatprep.subr.mxu0 0.0
    %2806 = vmatpush1.msra.mxu0 %v2652
    %2807 = vmatprep.subr.mxu0 0.0
    %2808 = vmatpush1.msra.mxu0 %v2647
    %2809 = vmatprep.subr.mxu0 0.0
    %2810 = vmatpush1.msra.mxu0 %v2642
    %2811 = vmatprep.subr.mxu0 0.0
    %2812 = vmatpush1.msra.mxu0 %v2637
    %2813 = vmatprep.subr.mxu0 0.0
    %2814 = vmatpush1.msra.mxu0 %v2632
    %2815 = vmatprep.subr.mxu0 0.0
    %2816 = vmatpush1.msra.mxu0 %v2627
    %2817 = vmatprep.subr.mxu0 0.0
    %2818 = vmatpush2.msra.mxu0 %v2782
    %2819 = vmatprep.subr.mxu0 0.0
    %2820 = vmatpush2.msra.mxu0 %v2777
    %2821 = vmatprep.subr.mxu0 0.0
    %2822 = vmatpush2.msra.mxu0 %v2772
    %2823 = vmatprep.subr.mxu0 0.0
    %2824 = vmatpush2.msra.mxu0 %v2767
    %2825 = vmatprep.subr.mxu0 0.0
    %2826 = vmatpush2.msra.mxu0 %v2762
    %2827 = vmatprep.subr.mxu0 0.0
    %2828 = vmatpush2.msra.mxu0 %v2757
    %2829 = vmatprep.subr.mxu0 0.0
    %2830 = vmatpush2.msra.mxu0 %v2752
    %2831 = vmatprep.subr.mxu0 0.0
    %2832 = vmatpush2.msra.mxu0 %v2747
    %2833 = vmatprep.subr.mxu0 0.0
    %2834 = vmatpush2.msra.mxu0 %v2742
    %2835 = vmatprep.subr.mxu0 0.0
    %2836 = vmatpush2.msra.mxu0 %v2737
    %2837 = vmatprep.subr.mxu0 0.0
    %2838 = vmatpush2.msra.mxu0 %v2732
    %2839 = vmatprep.subr.mxu0 0.0
    %2840 = vmatpush2.msra.mxu0 %v2727
    %2841 = vmatprep.subr.mxu0 0.0
    %2842 = vmatpush2.msra.mxu0 %v2722
    %2843 = vmatprep.subr.mxu0 0.0
    %2844 = vmatpush2.msra.mxu0 %v2717
    %2845 = vmatprep.subr.mxu0 0.0
    %2846 = vmatpush2.msra.mxu0 %v2712
    %2847 = vmatprep.subr.mxu0 0.0
    %2848 = vmatpush2.msra.mxu0 %v2707
    %2849 = vmatprep.mubr.f32.mxu0 1.0
    %2850 = vmatmul.mubr.f32.gmra.mxu0 1.0
    %v2851 = vpop.f32.mrf.mxu0
    %v2852 = vadd.f32 0.0, %v2851
    %v2853 = vpop.f32.mrf.mxu0
    %2854 = vdwg.mxu0
    %v2855 = vmul.f32 %v2627, %v2627
    %v2856 = vmul.f32 %v2632, %v2632
    %v2857 = vmul.f32 %v2637, %v2637
    %v2858 = vmul.f32 %v2642, %v2642
    %v2859 = vmul.f32 %v2647, %v2647
    %v2860 = vmul.f32 %v2652, %v2652
    %v2861 = vmul.f32 %v2657, %v2657
    %v2862 = vmul.f32 %v2662, %v2662
    %v2863 = vmul.f32 %v2667, %v2667
    %v2864 = vmul.f32 %v2672, %v2672
    %v2865 = vmul.f32 %v2677, %v2677
    %v2866 = vmul.f32 %v2682, %v2682
    %v2867 = vmul.f32 %v2687, %v2687
    %v2868 = vmul.f32 %v2692, %v2692
    %v2869 = vmul.f32 %v2697, %v2697
    %v2870 = vmul.f32 %v2702, %v2702
    %v2871 = vmul.f32 %v2707, %v2707
    %v2872 = vmul.f32 %v2712, %v2712
    %v2873 = vmul.f32 %v2717, %v2717
    %v2874 = vmul.f32 %v2722, %v2722
    %v2875 = vmul.f32 %v2727, %v2727
    %v2876 = vmul.f32 %v2732, %v2732
    %v2877 = vmul.f32 %v2737, %v2737
    %v2878 = vmul.f32 %v2742, %v2742
    %v2879 = vmul.f32 %v2747, %v2747
    %v2880 = vmul.f32 %v2752, %v2752
    %v2881 = vmul.f32 %v2757, %v2757
    %v2882 = vmul.f32 %v2762, %v2762
    %v2883 = vmul.f32 %v2767, %v2767
    %v2884 = vmul.f32 %v2772, %v2772
    %v2885 = vmul.f32 %v2777, %v2777
    %v2886 = vmul.f32 %v2782, %v2782
    %2887 = vmatprep.subr.mxu0 0.0
    %2888 = vmatpush1.msra.mxu0 %v2870
    %2889 = vmatprep.subr.mxu0 0.0
    %2890 = vmatpush1.msra.mxu0 %v2869
    %2891 = vmatprep.subr.mxu0 0.0
    %2892 = vmatpush1.msra.mxu0 %v2868
    %2893 = vmatprep.subr.mxu0 0.0
    %2894 = vmatpush1.msra.mxu0 %v2867
    %2895 = vmatprep.subr.mxu0 0.0
    %2896 = vmatpush1.msra.mxu0 %v2866
    %2897 = vmatprep.subr.mxu0 0.0
    %2898 = vmatpush1.msra.mxu0 %v2865
    %2899 = vmatprep.subr.mxu0 0.0
    %2900 = vmatpush1.msra.mxu0 %v2864
    %2901 = vmatprep.subr.mxu0 0.0
    %2902 = vmatpush1.msra.mxu0 %v2863
    %2903 = vmatprep.subr.mxu0 0.0
    %2904 = vmatpush1.msra.mxu0 %v2862
    %2905 = vmatprep.subr.mxu0 0.0
    %2906 = vmatpush1.msra.mxu0 %v2861
    %2907 = vmatprep.subr.mxu0 0.0
    %2908 = vmatpush1.msra.mxu0 %v2860
    %2909 = vmatprep.subr.mxu0 0.0
    %2910 = vmatpush1.msra.mxu0 %v2859
    %2911 = vmatprep.subr.mxu0 0.0
    %2912 = vmatpush1.msra.mxu0 %v2858
    %2913 = vmatprep.subr.mxu0 0.0
    %2914 = vmatpush1.msra.mxu0 %v2857
    %2915 = vmatprep.subr.mxu0 0.0
    %2916 = vmatpush1.msra.mxu0 %v2856
    %2917 = vmatprep.subr.mxu0 0.0
    %2918 = vmatpush1.msra.mxu0 %v2855
    %2919 = vmatprep.subr.mxu0 0.0
    %2920 = vmatpush2.msra.mxu0 %v2886
    %2921 = vmatprep.subr.mxu0 0.0
    %2922 = vmatpush2.msra.mxu0 %v2885
    %2923 = vmatprep.subr.mxu0 0.0
    %2924 = vmatpush2.msra.mxu0 %v2884
    %2925 = vmatprep.subr.mxu0 0.0
    %2926 = vmatpush2.msra.mxu0 %v2883
    %2927 = vmatprep.subr.mxu0 0.0
    %2928 = vmatpush2.msra.mxu0 %v2882
    %2929 = vmatprep.subr.mxu0 0.0
    %2930 = vmatpush2.msra.mxu0 %v2881
    %2931 = vmatprep.subr.mxu0 0.0
    %2932 = vmatpush2.msra.mxu0 %v2880
    %2933 = vmatprep.subr.mxu0 0.0
    %2934 = vmatpush2.msra.mxu0 %v2879
    %2935 = vmatprep.subr.mxu0 0.0
    %2936 = vmatpush2.msra.mxu0 %v2878
    %2937 = vmatprep.subr.mxu0 0.0
    %2938 = vmatpush2.msra.mxu0 %v2877
    %2939 = vmatprep.subr.mxu0 0.0
    %2940 = vmatpush2.msra.mxu0 %v2876
    %2941 = vmatprep.subr.mxu0 0.0
    %2942 = vmatpush2.msra.mxu0 %v2875
    %2943 = vmatprep.subr.mxu0 0.0
    %2944 = vmatpush2.msra.mxu0 %v2874
    %2945 = vmatprep.subr.mxu0 0.0
    %2946 = vmatpush2.msra.mxu0 %v2873
    %2947 = vmatprep.subr.mxu0 0.0
    %2948 = vmatpush2.msra.mxu0 %v2872
    %2949 = vmatprep.subr.mxu0 0.0
    %2950 = vmatpush2.msra.mxu0 %v2871
    %2951 = vmatprep.mubr.f32.mxu0 1.0
    %2952 = vmatmul.mubr.f32.gmra.mxu0 1.0
    %v2953 = vpop.f32.mrf.mxu0
    %v2954 = vadd.f32 0.0, %v2953
    %v2955 = vpop.f32.mrf.mxu0
    %2956 = vdwg.mxu0
    %v2957 = vmul.f32 %v2852, 0.00390625
    %v2958 = vmul.f32 %v2954, 0.00390625
    %v2959 = vmul.f32 %v2957, %v2957
    %v2960 = vsub.f32 %v2958, %v2959
    %v2961 = vmax.f32 %v2960, 0.0
    %v2962 = vld [vmem:[%s3 + $0x4] sm:$0x1]
    %v2963 = vadd.f32 %v2961, 1e-05
    %v2964 = vrsqrt.pop %v2963
    %v2965 = vmul.f32 %v2962, %v2964
    %v2966 = vld [vmem:[%s4 + $0x4] sm:$0x1]
    %v2967 = vmul.f32 %v2957, %v2965
    %v2968 = vsub.f32 %v2966, %v2967
    %v2969 = vlaneseq
    %v2970 = vshrl.u32 %v2969, 7
    %v2971 = vsub.s32 0, %v2970
    %v2972 = vrot.slane %v2965, %v2971
    %v2973 = vmul.f32 %v2627, %v2972
    %v2974 = vmul.f32 %v2632, %v2972
    %v2975 = vmul.f32 %v2637, %v2972
    %v2976 = vmul.f32 %v2642, %v2972
    %v2977 = vmul.f32 %v2647, %v2972
    %v2978 = vmul.f32 %v2652, %v2972
    %v2979 = vmul.f32 %v2657, %v2972
    %v2980 = vmul.f32 %v2662, %v2972
    %v2981 = vmul.f32 %v2667, %v2972
    %v2982 = vmul.f32 %v2672, %v2972
    %v2983 = vmul.f32 %v2677, %v2972
    %v2984 = vmul.f32 %v2682, %v2972
    %v2985 = vmul.f32 %v2687, %v2972
    %v2986 = vmul.f32 %v2692, %v2972
    %v2987 = vmul.f32 %v2697, %v2972
    %v2988 = vmul.f32 %v2702, %v2972
    %v2989 = vmul.f32 %v2707, %v2972
    %v2990 = vmul.f32 %v2712, %v2972
    %v2991 = vmul.f32 %v2717, %v2972
    %v2992 = vmul.f32 %v2722, %v2972
    %v2993 = vmul.f32 %v2727, %v2972
    %v2994 = vmul.f32 %v2732, %v2972
    %v2995 = vmul.f32 %v2737, %v2972
    %v2996 = vmul.f32 %v2742, %v2972
    %v2997 = vmul.f32 %v2747, %v2972
    %v2998 = vmul.f32 %v2752, %v2972
    %v2999 = vmul.f32 %v2757, %v2972
    %v3000 = vmul.f32 %v2762, %v2972
    %v3001 = vmul.f32 %v2767, %v2972
    %v3002 = vmul.f32 %v2772, %v2972
    %v3003 = vmul.f32 %v2777, %v2972
    %v3004 = vmul.f32 %v2782, %v2972
    %v3005 = vlaneseq
    %v3006 = vshrl.u32 %v3005, 7
    %v3007 = vsub.s32 0, %v3006
    %v3008 = vrot.slane %v2968, %v3007
    %v3009 = vadd.f32 %v2973, %v3008
    %v3010 = vadd.f32 %v2974, %v3008
    %v3011 = vadd.f32 %v2975, %v3008
    %v3012 = vadd.f32 %v2976, %v3008
    %v3013 = vadd.f32 %v2977, %v3008
    %v3014 = vadd.f32 %v2978, %v3008
    %v3015 = vadd.f32 %v2979, %v3008
    %v3016 = vadd.f32 %v2980, %v3008
    %v3017 = vadd.f32 %v2981, %v3008
    %v3018 = vadd.f32 %v2982, %v3008
    %v3019 = vadd.f32 %v2983, %v3008
    %v3020 = vadd.f32 %v2984, %v3008
    %v3021 = vadd.f32 %v2985, %v3008
    %v3022 = vadd.f32 %v2986, %v3008
    %v3023 = vadd.f32 %v2987, %v3008
    %v3024 = vadd.f32 %v2988, %v3008
    %v3025 = vadd.f32 %v2989, %v3008
    %v3026 = vadd.f32 %v2990, %v3008
    %v3027 = vadd.f32 %v2991, %v3008
    %v3028 = vadd.f32 %v2992, %v3008
    %v3029 = vadd.f32 %v2993, %v3008
    %v3030 = vadd.f32 %v2994, %v3008
    %v3031 = vadd.f32 %v2995, %v3008
    %v3032 = vadd.f32 %v2996, %v3008
    %v3033 = vadd.f32 %v2997, %v3008
    %v3034 = vadd.f32 %v2998, %v3008
    %v3035 = vadd.f32 %v2999, %v3008
    %v3036 = vadd.f32 %v3000, %v3008
    %v3037 = vadd.f32 %v3001, %v3008
    %v3038 = vadd.f32 %v3002, %v3008
    %v3039 = vadd.f32 %v3003, %v3008
    %v3040 = vadd.f32 %v3004, %v3008
    %v3041 = vmax.f32 %v3009, 0.0
    %v3042 = vmax.f32 %v3010, 0.0
    %v3043 = vmax.f32 %v3011, 0.0
    %v3044 = vmax.f32 %v3012, 0.0
    %v3045 = vmax.f32 %v3013, 0.0
    %v3046 = vmax.f32 %v3014, 0.0
    %v3047 = vmax.f32 %v3015, 0.0
    %v3048 = vmax.f32 %v3016, 0.0
    %v3049 = vmax.f32 %v3017, 0.0
    %v3050 = vmax.f32 %v3018, 0.0
    %v3051 = vmax.f32 %v3019, 0.0
    %v3052 = vmax.f32 %v3020, 0.0
    %v3053 = vmax.f32 %v3021, 0.0
    %v3054 = vmax.f32 %v3022, 0.0
    %v3055 = vmax.f32 %v3023, 0.0
    %v3056 = vmax.f32 %v3024, 0.0
    %v3057 = vmax.f32 %v3025, 0.0
    %v3058 = vmax.f32 %v3026, 0.0
    %v3059 = vmax.f32 %v3027, 0.0
    %v3060 = vmax.f32 %v3028, 0.0
    %v3061 = vmax.f32 %v3029, 0.0
    %v3062 = vmax.f32 %v3030, 0.0
    %v3063 = vmax.f32 %v3031, 0.0
    %v3064 = vmax.f32 %v3032, 0.0
    %v3065 = vmax.f32 %v3033, 0.0
    %v3066 = vmax.f32 %v3034, 0.0
    %v3067 = vmax.f32 %v3035, 0.0
    %v3068 = vmax.f32 %v3036, 0.0
    %v3069 = vmax.f32 %v3037, 0.0
    %v3070 = vmax.f32 %v3038, 0.0
    %v3071 = vmax.f32 %v3039, 0.0
    %v3072 = vmax.f32 %v3040, 0.0
    %s3073 = scalar_lea.vmem [#allocation5], 128
    %v3074 = vld [vmem:[%s3073] sm:$0xff]
    %v3075 = vld [vmem:[%s3073 + $0x8] sm:$0xff]
    %v3076 = vld [vmem:[%s3073 + $0x10] sm:$0xff]
    %v3077 = vld [vmem:[%s3073 + $0x18] sm:$0xff]
    %v3079 = vsel %vm621, %v3041, 0
    %v3082 = vsel %vm621, %v3042, 0
    %v3085 = vsel %vm621, %v3043, 0
    %v3088 = vsel %vm621, %v3044, 0
    %v3091 = vsel %vm621, %v3045, 0
    %v3094 = vsel %vm621, %v3046, 0
    %v3097 = vsel %vm621, %v3047, 0
    %v3100 = vsel %vm621, %v3048, 0
    %v3103 = vsel %vm621, %v3049, 0
    %v3106 = vsel %vm621, %v3050, 0
    %v3109 = vsel %vm621, %v3051, 0
    %v3112 = vsel %vm621, %v3052, 0
    %v3115 = vsel %vm621, %v3053, 0
    %v3118 = vsel %vm621, %v3054, 0
    %v3121 = vsel %vm621, %v3055, 0
    %v3124 = vsel %vm621, %v3056, 0
    %v3127 = vsel %vm621, %v3057, 0
    %v3130 = vsel %vm621, %v3058, 0
    %v3133 = vsel %vm621, %v3059, 0
    %v3136 = vsel %vm621, %v3060, 0
    %v3139 = vsel %vm621, %v3061, 0
    %v3142 = vsel %vm621, %v3062, 0
    %v3145 = vsel %vm621, %v3063, 0
    %v3148 = vsel %vm621, %v3064, 0
    %v3151 = vsel %vm621, %v3065, 0
    %v3154 = vsel %vm621, %v3066, 0
    %v3157 = vsel %vm621, %v3067, 0
    %v3160 = vsel %vm621, %v3068, 0
    %v3163 = vsel %vm621, %v3069, 0
    %v3166 = vsel %vm621, %v3070, 0
    %v3169 = vsel %vm621, %v3071, 0
    %v3172 = vsel %vm621, %v3072, 0
    %3174 = vmatprep.subr.mxu0 0.0
    %3175 = vmatpush1.msra.mxu0 0.0
    %3176 = vmatprep.subr.mxu0 0.0
    %3177 = vmatpush1.msra.mxu0 0.0
    %3178 = vmatprep.subr.mxu0 0.0
    %3179 = vmatpush1.msra.mxu0 0.0
    %3180 = vmatprep.subr.mxu0 0.0
    %3181 = vmatpush1.msra.mxu0 0.0
    %3182 = vmatprep.subr.mxu0 0.0
    %3183 = vmatpush1.msra.mxu0 0.0
    %3184 = vmatprep.subr.mxu0 0.0
    %3185 = vmatpush1.msra.mxu0 0.0
    %3186 = vmatprep.subr.mxu0 0.0
    %3187 = vmatpush1.msra.mxu0 0.0
    %3188 = vmatprep.subr.mxu0 0.0
    %3189 = vmatpush1.msra.mxu0 0.0
    %3190 = vmatprep.subr.mxu0 0.0
    %3191 = vmatpush1.msra.mxu0 0.0
    %3192 = vmatprep.subr.mxu0 0.0
    %3193 = vmatpush1.msra.mxu0 0.0
    %3194 = vmatprep.subr.mxu0 0.0
    %3195 = vmatpush1.msra.mxu0 0.0
    %3196 = vmatprep.subr.mxu0 0.0
    %3197 = vmatpush1.msra.mxu0 0.0
    %3198 = vmatprep.subr.mxu0 0.0
    %3199 = vmatpush1.msra.mxu0 %v3077
    %3200 = vmatprep.subr.mxu0 0.0
    %3201 = vmatpush1.msra.mxu0 %v3076
    %3202 = vmatprep.subr.mxu0 0.0
    %3203 = vmatpush1.msra.mxu0 %v3075
    %3204 = vmatprep.subr.mxu0 0.0
    %3205 = vmatpush1.msra.mxu0 %v3074
    %3206 = vmatprep.subr.mxu0 0.0
    %3207 = vmatpush2.msra.mxu0 0.0
    %3208 = vmatprep.subr.mxu0 0.0
    %3209 = vmatpush2.msra.mxu0 0.0
    %3210 = vmatprep.subr.mxu0 0.0
    %3211 = vmatpush2.msra.mxu0 0.0
    %3212 = vmatprep.subr.mxu0 0.0
    %3213 = vmatpush2.msra.mxu0 0.0
    %3214 = vmatprep.subr.mxu0 0.0
    %3215 = vmatpush2.msra.mxu0 0.0
    %3216 = vmatprep.subr.mxu0 0.0
    %3217 = vmatpush2.msra.mxu0 0.0
    %3218 = vmatprep.subr.mxu0 0.0
    %3219 = vmatpush2.msra.mxu0 0.0
    %3220 = vmatprep.subr.mxu0 0.0
    %3221 = vmatpush2.msra.mxu0 0.0
    %3222 = vmatprep.subr.mxu0 0.0
    %3223 = vmatpush2.msra.mxu0 0.0
    %3224 = vmatprep.subr.mxu0 0.0
    %3225 = vmatpush2.msra.mxu0 0.0
    %3226 = vmatprep.subr.mxu0 0.0
    %3227 = vmatpush2.msra.mxu0 0.0
    %3228 = vmatprep.subr.mxu0 0.0
    %3229 = vmatpush2.msra.mxu0 0.0
    %3230 = vmatprep.subr.mxu0 0.0
    %3231 = vmatpush2.msra.mxu0 0.0
    %3232 = vmatprep.subr.mxu0 0.0
    %3233 = vmatpush2.msra.mxu0 0.0
    %3234 = vmatprep.subr.mxu0 0.0
    %3235 = vmatpush2.msra.mxu0 0.0
    %3236 = vmatprep.subr.mxu0 0.0
    %3237 = vmatpush2.msra.mxu0 0.0
    %3238 = vmatprep.mubr.f32.mxu0 0.0
    %3239 = vmatmul.mubr.f32.gmra.mxu0 %v3079
    %v3240 = vpop.f32.mrf.mxu0
    %v3241 = vadd.f32 0.0, %v3240
    %v3242 = vpop.f32.mrf.mxu0
    %3243 = vmatprep.mubr.f32.mxu0 0.0
    %3244 = vmatmul.mubr.f32.gmra.mxu0 %v3082
    %v3245 = vpop.f32.mrf.mxu0
    %v3246 = vadd.f32 0.0, %v3245
    %v3247 = vpop.f32.mrf.mxu0
    %3248 = vmatprep.mubr.f32.mxu0 0.0
    %3249 = vmatmul.mubr.f32.gmra.mxu0 %v3085
    %v3250 = vpop.f32.mrf.mxu0
    %v3251 = vadd.f32 0.0, %v3250
    %v3252 = vpop.f32.mrf.mxu0
    %3253 = vmatprep.mubr.f32.mxu0 0.0
    %3254 = vmatmul.mubr.f32.gmra.mxu0 %v3088
    %v3255 = vpop.f32.mrf.mxu0
    %v3256 = vadd.f32 0.0, %v3255
    %v3257 = vpop.f32.mrf.mxu0
    %3258 = vmatprep.mubr.f32.mxu0 0.0
    %3259 = vmatmul.mubr.f32.gmra.mxu0 %v3091
    %v3260 = vpop.f32.mrf.mxu0
    %v3261 = vadd.f32 0.0, %v3260
    %v3262 = vpop.f32.mrf.mxu0
    %3263 = vmatprep.mubr.f32.mxu0 0.0
    %3264 = vmatmul.mubr.f32.gmra.mxu0 %v3094
    %v3265 = vpop.f32.mrf.mxu0
    %v3266 = vadd.f32 0.0, %v3265
    %v3267 = vpop.f32.mrf.mxu0
    %3268 = vmatprep.mubr.f32.mxu0 0.0
    %3269 = vmatmul.mubr.f32.gmra.mxu0 %v3097
    %v3270 = vpop.f32.mrf.mxu0
    %v3271 = vadd.f32 0.0, %v3270
    %v3272 = vpop.f32.mrf.mxu0
    %3273 = vmatprep.mubr.f32.mxu0 0.0
    %3274 = vmatmul.mubr.f32.gmra.mxu0 %v3100
    %v3275 = vpop.f32.mrf.mxu0
    %v3276 = vadd.f32 0.0, %v3275
    %v3277 = vpop.f32.mrf.mxu0
    %3278 = vmatprep.mubr.f32.mxu0 0.0
    %3279 = vmatmul.mubr.f32.gmra.mxu0 %v3103
    %v3280 = vpop.f32.mrf.mxu0
    %v3281 = vadd.f32 0.0, %v3280
    %v3282 = vpop.f32.mrf.mxu0
    %3283 = vmatprep.mubr.f32.mxu0 0.0
    %3284 = vmatmul.mubr.f32.gmra.mxu0 %v3106
    %v3285 = vpop.f32.mrf.mxu0
    %v3286 = vadd.f32 0.0, %v3285
    %v3287 = vpop.f32.mrf.mxu0
    %3288 = vmatprep.mubr.f32.mxu0 0.0
    %3289 = vmatmul.mubr.f32.gmra.mxu0 %v3109
    %v3290 = vpop.f32.mrf.mxu0
    %v3291 = vadd.f32 0.0, %v3290
    %v3292 = vpop.f32.mrf.mxu0
    %3293 = vmatprep.mubr.f32.mxu0 0.0
    %3294 = vmatmul.mubr.f32.gmra.mxu0 %v3112
    %v3295 = vpop.f32.mrf.mxu0
    %v3296 = vadd.f32 0.0, %v3295
    %v3297 = vpop.f32.mrf.mxu0
    %3298 = vmatprep.mubr.f32.mxu0 0.0
    %3299 = vmatmul.mubr.f32.gmra.mxu0 %v3115
    %v3300 = vpop.f32.mrf.mxu0
    %v3301 = vadd.f32 0.0, %v3300
    %v3302 = vpop.f32.mrf.mxu0
    %3303 = vmatprep.mubr.f32.mxu0 0.0
    %3304 = vmatmul.mubr.f32.gmra.mxu0 %v3118
    %v3305 = vpop.f32.mrf.mxu0
    %v3306 = vadd.f32 0.0, %v3305
    %v3307 = vpop.f32.mrf.mxu0
    %3308 = vmatprep.mubr.f32.mxu0 0.0
    %3309 = vmatmul.mubr.f32.gmra.mxu0 %v3121
    %v3310 = vpop.f32.mrf.mxu0
    %v3311 = vadd.f32 0.0, %v3310
    %v3312 = vpop.f32.mrf.mxu0
    %3313 = vmatprep.mubr.f32.mxu0 0.0
    %3314 = vmatmul.mubr.f32.gmra.mxu0 %v3124
    %v3315 = vpop.f32.mrf.mxu0
    %v3316 = vadd.f32 0.0, %v3315
    %v3317 = vpop.f32.mrf.mxu0
    %3318 = vmatprep.mubr.f32.mxu0 0.0
    %3319 = vmatmul.mubr.f32.gmra.mxu0 %v3127
    %v3320 = vpop.f32.mrf.mxu0
    %v3321 = vadd.f32 0.0, %v3320
    %v3322 = vpop.f32.mrf.mxu0
    %3323 = vmatprep.mubr.f32.mxu0 0.0
    %3324 = vmatmul.mubr.f32.gmra.mxu0 %v3130
    %v3325 = vpop.f32.mrf.mxu0
    %v3326 = vadd.f32 0.0, %v3325
    %v3327 = vpop.f32.mrf.mxu0
    %3328 = vmatprep.mubr.f32.mxu0 0.0
    %3329 = vmatmul.mubr.f32.gmra.mxu0 %v3133
    %v3330 = vpop.f32.mrf.mxu0
    %v3331 = vadd.f32 0.0, %v3330
    %v3332 = vpop.f32.mrf.mxu0
    %3333 = vmatprep.mubr.f32.mxu0 0.0
    %3334 = vmatmul.mubr.f32.gmra.mxu0 %v3136
    %v3335 = vpop.f32.mrf.mxu0
    %v3336 = vadd.f32 0.0, %v3335
    %v3337 = vpop.f32.mrf.mxu0
    %3338 = vmatprep.mubr.f32.mxu0 0.0
    %3339 = vmatmul.mubr.f32.gmra.mxu0 %v3139
    %v3340 = vpop.f32.mrf.mxu0
    %v3341 = vadd.f32 0.0, %v3340
    %v3342 = vpop.f32.mrf.mxu0
    %3343 = vmatprep.mubr.f32.mxu0 0.0
    %3344 = vmatmul.mubr.f32.gmra.mxu0 %v3142
    %v3345 = vpop.f32.mrf.mxu0
    %v3346 = vadd.f32 0.0, %v3345
    %v3347 = vpop.f32.mrf.mxu0
    %3348 = vmatprep.mubr.f32.mxu0 0.0
    %3349 = vmatmul.mubr.f32.gmra.mxu0 %v3145
    %v3350 = vpop.f32.mrf.mxu0
    %v3351 = vadd.f32 0.0, %v3350
    %v3352 = vpop.f32.mrf.mxu0
    %3353 = vmatprep.mubr.f32.mxu0 0.0
    %3354 = vmatmul.mubr.f32.gmra.mxu0 %v3148
    %v3355 = vpop.f32.mrf.mxu0
    %v3356 = vadd.f32 0.0, %v3355
    %v3357 = vpop.f32.mrf.mxu0
    %3358 = vmatprep.mubr.f32.mxu0 0.0
    %3359 = vmatmul.mubr.f32.gmra.mxu0 %v3151
    %v3360 = vpop.f32.mrf.mxu0
    %v3361 = vadd.f32 0.0, %v3360
    %v3362 = vpop.f32.mrf.mxu0
    %3363 = vmatprep.mubr.f32.mxu0 0.0
    %3364 = vmatmul.mubr.f32.gmra.mxu0 %v3154
    %v3365 = vpop.f32.mrf.mxu0
    %v3366 = vadd.f32 0.0, %v3365
    %v3367 = vpop.f32.mrf.mxu0
    %3368 = vmatprep.mubr.f32.mxu0 0.0
    %3369 = vmatmul.mubr.f32.gmra.mxu0 %v3157
    %v3370 = vpop.f32.mrf.mxu0
    %v3371 = vadd.f32 0.0, %v3370
    %v3372 = vpop.f32.mrf.mxu0
    %3373 = vmatprep.mubr.f32.mxu0 0.0
    %3374 = vmatmul.mubr.f32.gmra.mxu0 %v3160
    %v3375 = vpop.f32.mrf.mxu0
    %v3376 = vadd.f32 0.0, %v3375
    %v3377 = vpop.f32.mrf.mxu0
    %3378 = vmatprep.mubr.f32.mxu0 0.0
    %3379 = vmatmul.mubr.f32.gmra.mxu0 %v3163
    %v3380 = vpop.f32.mrf.mxu0
    %v3381 = vadd.f32 0.0, %v3380
    %v3382 = vpop.f32.mrf.mxu0
    %3383 = vmatprep.mubr.f32.mxu0 0.0
    %3384 = vmatmul.mubr.f32.gmra.mxu0 %v3166
    %v3385 = vpop.f32.mrf.mxu0
    %v3386 = vadd.f32 0.0, %v3385
    %v3387 = vpop.f32.mrf.mxu0
    %3388 = vmatprep.mubr.f32.mxu0 0.0
    %3389 = vmatmul.mubr.f32.gmra.mxu0 %v3169
    %v3390 = vpop.f32.mrf.mxu0
    %v3391 = vadd.f32 0.0, %v3390
    %v3392 = vpop.f32.mrf.mxu0
    %3393 = vmatprep.mubr.f32.mxu0 0.0
    %3394 = vmatmul.mubr.f32.gmra.mxu0 %v3172
    %v3395 = vpop.f32.mrf.mxu0
    %v3396 = vadd.f32 0.0, %v3395
    %v3397 = vpop.f32.mrf.mxu0
    %3398 = vdwg.mxu0
    %3399 = vmatprep.subr.mxu0 0.0
    %3400 = vmatpush1.msra.mxu0 %v3316
    %3401 = vmatprep.subr.mxu0 0.0
    %3402 = vmatpush1.msra.mxu0 %v3311
    %3403 = vmatprep.subr.mxu0 0.0
    %3404 = vmatpush1.msra.mxu0 %v3306
    %3405 = vmatprep.subr.mxu0 0.0
    %3406 = vmatpush1.msra.mxu0 %v3301
    %3407 = vmatprep.subr.mxu0 0.0
    %3408 = vmatpush1.msra.mxu0 %v3296
    %3409 = vmatprep.subr.mxu0 0.0
    %3410 = vmatpush1.msra.mxu0 %v3291
    %3411 = vmatprep.subr.mxu0 0.0
    %3412 = vmatpush1.msra.mxu0 %v3286
    %3413 = vmatprep.subr.mxu0 0.0
    %3414 = vmatpush1.msra.mxu0 %v3281
    %3415 = vmatprep.subr.mxu0 0.0
    %3416 = vmatpush1.msra.mxu0 %v3276
    %3417 = vmatprep.subr.mxu0 0.0
    %3418 = vmatpush1.msra.mxu0 %v3271
    %3419 = vmatprep.subr.mxu0 0.0
    %3420 = vmatpush1.msra.mxu0 %v3266
    %3421 = vmatprep.subr.mxu0 0.0
    %3422 = vmatpush1.msra.mxu0 %v3261
    %3423 = vmatprep.subr.mxu0 0.0
    %3424 = vmatpush1.msra.mxu0 %v3256
    %3425 = vmatprep.subr.mxu0 0.0
    %3426 = vmatpush1.msra.mxu0 %v3251
    %3427 = vmatprep.subr.mxu0 0.0
    %3428 = vmatpush1.msra.mxu0 %v3246
    %3429 = vmatprep.subr.mxu0 0.0
    %3430 = vmatpush1.msra.mxu0 %v3241
    %3431 = vmatprep.subr.mxu0 0.0
    %3432 = vmatpush2.msra.mxu0 %v3396
    %3433 = vmatprep.subr.mxu0 0.0
    %3434 = vmatpush2.msra.mxu0 %v3391
    %3435 = vmatprep.subr.mxu0 0.0
    %3436 = vmatpush2.msra.mxu0 %v3386
    %3437 = vmatprep.subr.mxu0 0.0
    %3438 = vmatpush2.msra.mxu0 %v3381
    %3439 = vmatprep.subr.mxu0 0.0
    %3440 = vmatpush2.msra.mxu0 %v3376
    %3441 = vmatprep.subr.mxu0 0.0
    %3442 = vmatpush2.msra.mxu0 %v3371
    %3443 = vmatprep.subr.mxu0 0.0
    %3444 = vmatpush2.msra.mxu0 %v3366
    %3445 = vmatprep.subr.mxu0 0.0
    %3446 = vmatpush2.msra.mxu0 %v3361
    %3447 = vmatprep.subr.mxu0 0.0
    %3448 = vmatpush2.msra.mxu0 %v3356
    %3449 = vmatprep.subr.mxu0 0.0
    %3450 = vmatpush2.msra.mxu0 %v3351
    %3451 = vmatprep.subr.mxu0 0.0
    %3452 = vmatpush2.msra.mxu0 %v3346
    %3453 = vmatprep.subr.mxu0 0.0
    %3454 = vmatpush2.msra.mxu0 %v3341
    %3455 = vmatprep.subr.mxu0 0.0
    %3456 = vmatpush2.msra.mxu0 %v3336
    %3457 = vmatprep.subr.mxu0 0.0
    %3458 = vmatpush2.msra.mxu0 %v3331
    %3459 = vmatprep.subr.mxu0 0.0
    %3460 = vmatpush2.msra.mxu0 %v3326
    %3461 = vmatprep.subr.mxu0 0.0
    %3462 = vmatpush2.msra.mxu0 %v3321
    %3463 = vmatprep.mubr.f32.mxu0 1.0
    %3464 = vmatmul.mubr.f32.gmra.mxu0 1.0
    %v3465 = vpop.f32.mrf.mxu0
    %v3466 = vadd.f32 0.0, %v3465
    %v3467 = vpop.f32.mrf.mxu0
    %3468 = vdwg.mxu0
    %v3469 = vmul.f32 %v3241, %v3241
    %v3470 = vmul.f32 %v3246, %v3246
    %v3471 = vmul.f32 %v3251, %v3251
    %v3472 = vmul.f32 %v3256, %v3256
    %v3473 = vmul.f32 %v3261, %v3261
    %v3474 = vmul.f32 %v3266, %v3266
    %v3475 = vmul.f32 %v3271, %v3271
    %v3476 = vmul.f32 %v3276, %v3276
    %v3477 = vmul.f32 %v3281, %v3281
    %v3478 = vmul.f32 %v3286, %v3286
    %v3479 = vmul.f32 %v3291, %v3291
    %v3480 = vmul.f32 %v3296, %v3296
    %v3481 = vmul.f32 %v3301, %v3301
    %v3482 = vmul.f32 %v3306, %v3306
    %v3483 = vmul.f32 %v3311, %v3311
    %v3484 = vmul.f32 %v3316, %v3316
    %v3485 = vmul.f32 %v3321, %v3321
    %v3486 = vmul.f32 %v3326, %v3326
    %v3487 = vmul.f32 %v3331, %v3331
    %v3488 = vmul.f32 %v3336, %v3336
    %v3489 = vmul.f32 %v3341, %v3341
    %v3490 = vmul.f32 %v3346, %v3346
    %v3491 = vmul.f32 %v3351, %v3351
    %v3492 = vmul.f32 %v3356, %v3356
    %v3493 = vmul.f32 %v3361, %v3361
    %v3494 = vmul.f32 %v3366, %v3366
    %v3495 = vmul.f32 %v3371, %v3371
    %v3496 = vmul.f32 %v3376, %v3376
    %v3497 = vmul.f32 %v3381, %v3381
    %v3498 = vmul.f32 %v3386, %v3386
    %v3499 = vmul.f32 %v3391, %v3391
    %v3500 = vmul.f32 %v3396, %v3396
    %3501 = vmatprep.subr.mxu0 0.0
    %3502 = vmatpush1.msra.mxu0 %v3484
    %3503 = vmatprep.subr.mxu0 0.0
    %3504 = vmatpush1.msra.mxu0 %v3483
    %3505 = vmatprep.subr.mxu0 0.0
    %3506 = vmatpush1.msra.mxu0 %v3482
    %3507 = vmatprep.subr.mxu0 0.0
    %3508 = vmatpush1.msra.mxu0 %v3481
    %3509 = vmatprep.subr.mxu0 0.0
    %3510 = vmatpush1.msra.mxu0 %v3480
    %3511 = vmatprep.subr.mxu0 0.0
    %3512 = vmatpush1.msra.mxu0 %v3479
    %3513 = vmatprep.subr.mxu0 0.0
    %3514 = vmatpush1.msra.mxu0 %v3478
    %3515 = vmatprep.subr.mxu0 0.0
    %3516 = vmatpush1.msra.mxu0 %v3477
    %3517 = vmatprep.subr.mxu0 0.0
    %3518 = vmatpush1.msra.mxu0 %v3476
    %3519 = vmatprep.subr.mxu0 0.0
    %3520 = vmatpush1.msra.mxu0 %v3475
    %3521 = vmatprep.subr.mxu0 0.0
    %3522 = vmatpush1.msra.mxu0 %v3474
    %3523 = vmatprep.subr.mxu0 0.0
    %3524 = vmatpush1.msra.mxu0 %v3473
    %3525 = vmatprep.subr.mxu0 0.0
    %3526 = vmatpush1.msra.mxu0 %v3472
    %3527 = vmatprep.subr.mxu0 0.0
    %3528 = vmatpush1.msra.mxu0 %v3471
    %3529 = vmatprep.subr.mxu0 0.0
    %3530 = vmatpush1.msra.mxu0 %v3470
    %3531 = vmatprep.subr.mxu0 0.0
    %3532 = vmatpush1.msra.mxu0 %v3469
    %3533 = vmatprep.subr.mxu0 0.0
    %3534 = vmatpush2.msra.mxu0 %v3500
    %3535 = vmatprep.subr.mxu0 0.0
    %3536 = vmatpush2.msra.mxu0 %v3499
    %3537 = vmatprep.subr.mxu0 0.0
    %3538 = vmatpush2.msra.mxu0 %v3498
    %3539 = vmatprep.subr.mxu0 0.0
    %3540 = vmatpush2.msra.mxu0 %v3497
    %3541 = vmatprep.subr.mxu0 0.0
    %3542 = vmatpush2.msra.mxu0 %v3496
    %3543 = vmatprep.subr.mxu0 0.0
    %3544 = vmatpush2.msra.mxu0 %v3495
    %3545 = vmatprep.subr.mxu0 0.0
    %3546 = vmatpush2.msra.mxu0 %v3494
    %3547 = vmatprep.subr.mxu0 0.0
    %3548 = vmatpush2.msra.mxu0 %v3493
    %3549 = vmatprep.subr.mxu0 0.0
    %3550 = vmatpush2.msra.mxu0 %v3492
    %3551 = vmatprep.subr.mxu0 0.0
    %3552 = vmatpush2.msra.mxu0 %v3491
    %3553 = vmatprep.subr.mxu0 0.0
    %3554 = vmatpush2.msra.mxu0 %v3490
    %3555 = vmatprep.subr.mxu0 0.0
    %3556 = vmatpush2.msra.mxu0 %v3489
    %3557 = vmatprep.subr.mxu0 0.0
    %3558 = vmatpush2.msra.mxu0 %v3488
    %3559 = vmatprep.subr.mxu0 0.0
    %3560 = vmatpush2.msra.mxu0 %v3487
    %3561 = vmatprep.subr.mxu0 0.0
    %3562 = vmatpush2.msra.mxu0 %v3486
    %3563 = vmatprep.subr.mxu0 0.0
    %3564 = vmatpush2.msra.mxu0 %v3485
    %3565 = vmatprep.mubr.f32.mxu0 1.0
    %3566 = vmatmul.mubr.f32.gmra.mxu0 1.0
    %v3567 = vpop.f32.mrf.mxu0
    %v3568 = vadd.f32 0.0, %v3567
    %v3569 = vpop.f32.mrf.mxu0
    %3570 = vdwg.mxu0
    %v3571 = vmul.f32 %v3466, 0.00390625
    %v3572 = vmul.f32 %v3568, 0.00390625
    %v3573 = vmul.f32 %v3571, %v3571
    %v3574 = vsub.f32 %v3572, %v3573
    %v3575 = vmax.f32 %v3574, 0.0
    %v3576 = vld [vmem:[%s3 + $0x5] sm:$0x1]
    %v3577 = vadd.f32 %v3575, 1e-05
    %v3578 = vrsqrt.pop %v3577
    %v3579 = vmul.f32 %v3576, %v3578
    %v3580 = vld [vmem:[%s4 + $0x5] sm:$0x1]
    %v3581 = vmul.f32 %v3571, %v3579
    %v3582 = vsub.f32 %v3580, %v3581
    %v3583 = vlaneseq
    %v3584 = vshrl.u32 %v3583, 7
    %v3585 = vsub.s32 0, %v3584
    %v3586 = vrot.slane %v3579, %v3585
    %v3587 = vmul.f32 %v3241, %v3586
    %v3588 = vmul.f32 %v3246, %v3586
    %v3589 = vmul.f32 %v3251, %v3586
    %v3590 = vmul.f32 %v3256, %v3586
    %v3591 = vmul.f32 %v3261, %v3586
    %v3592 = vmul.f32 %v3266, %v3586
    %v3593 = vmul.f32 %v3271, %v3586
    %v3594 = vmul.f32 %v3276, %v3586
    %v3595 = vmul.f32 %v3281, %v3586
    %v3596 = vmul.f32 %v3286, %v3586
    %v3597 = vmul.f32 %v3291, %v3586
    %v3598 = vmul.f32 %v3296, %v3586
    %v3599 = vmul.f32 %v3301, %v3586
    %v3600 = vmul.f32 %v3306, %v3586
    %v3601 = vmul.f32 %v3311, %v3586
    %v3602 = vmul.f32 %v3316, %v3586
    %v3603 = vmul.f32 %v3321, %v3586
    %v3604 = vmul.f32 %v3326, %v3586
    %v3605 = vmul.f32 %v3331, %v3586
    %v3606 = vmul.f32 %v3336, %v3586
    %v3607 = vmul.f32 %v3341, %v3586
    %v3608 = vmul.f32 %v3346, %v3586
    %v3609 = vmul.f32 %v3351, %v3586
    %v3610 = vmul.f32 %v3356, %v3586
    %v3611 = vmul.f32 %v3361, %v3586
    %v3612 = vmul.f32 %v3366, %v3586
    %v3613 = vmul.f32 %v3371, %v3586
    %v3614 = vmul.f32 %v3376, %v3586
    %v3615 = vmul.f32 %v3381, %v3586
    %v3616 = vmul.f32 %v3386, %v3586
    %v3617 = vmul.f32 %v3391, %v3586
    %v3618 = vmul.f32 %v3396, %v3586
    %v3619 = vlaneseq
    %v3620 = vshrl.u32 %v3619, 7
    %v3621 = vsub.s32 0, %v3620
    %v3622 = vrot.slane %v3582, %v3621
    %v3623 = vadd.f32 %v3587, %v3622
    %v3624 = vadd.f32 %v3588, %v3622
    %v3625 = vadd.f32 %v3589, %v3622
    %v3626 = vadd.f32 %v3590, %v3622
    %v3627 = vadd.f32 %v3591, %v3622
    %v3628 = vadd.f32 %v3592, %v3622
    %v3629 = vadd.f32 %v3593, %v3622
    %v3630 = vadd.f32 %v3594, %v3622
    %v3631 = vadd.f32 %v3595, %v3622
    %v3632 = vadd.f32 %v3596, %v3622
    %v3633 = vadd.f32 %v3597, %v3622
    %v3634 = vadd.f32 %v3598, %v3622
    %v3635 = vadd.f32 %v3599, %v3622
    %v3636 = vadd.f32 %v3600, %v3622
    %v3637 = vadd.f32 %v3601, %v3622
    %v3638 = vadd.f32 %v3602, %v3622
    %v3639 = vadd.f32 %v3603, %v3622
    %v3640 = vadd.f32 %v3604, %v3622
    %v3641 = vadd.f32 %v3605, %v3622
    %v3642 = vadd.f32 %v3606, %v3622
    %v3643 = vadd.f32 %v3607, %v3622
    %v3644 = vadd.f32 %v3608, %v3622
    %v3645 = vadd.f32 %v3609, %v3622
    %v3646 = vadd.f32 %v3610, %v3622
    %v3647 = vadd.f32 %v3611, %v3622
    %v3648 = vadd.f32 %v3612, %v3622
    %v3649 = vadd.f32 %v3613, %v3622
    %v3650 = vadd.f32 %v3614, %v3622
    %v3651 = vadd.f32 %v3615, %v3622
    %v3652 = vadd.f32 %v3616, %v3622
    %v3653 = vadd.f32 %v3617, %v3622
    %v3654 = vadd.f32 %v3618, %v3622
    %v3655 = vmax.f32 %v3623, 0.0
    %v3656 = vmax.f32 %v3624, 0.0
    %v3657 = vmax.f32 %v3625, 0.0
    %v3658 = vmax.f32 %v3626, 0.0
    %v3659 = vmax.f32 %v3627, 0.0
    %v3660 = vmax.f32 %v3628, 0.0
    %v3661 = vmax.f32 %v3629, 0.0
    %v3662 = vmax.f32 %v3630, 0.0
    %v3663 = vmax.f32 %v3631, 0.0
    %v3664 = vmax.f32 %v3632, 0.0
    %v3665 = vmax.f32 %v3633, 0.0
    %v3666 = vmax.f32 %v3634, 0.0
    %v3667 = vmax.f32 %v3635, 0.0
    %v3668 = vmax.f32 %v3636, 0.0
    %v3669 = vmax.f32 %v3637, 0.0
    %v3670 = vmax.f32 %v3638, 0.0
    %v3671 = vmax.f32 %v3639, 0.0
    %v3672 = vmax.f32 %v3640, 0.0
    %v3673 = vmax.f32 %v3641, 0.0
    %v3674 = vmax.f32 %v3642, 0.0
    %v3675 = vmax.f32 %v3643, 0.0
    %v3676 = vmax.f32 %v3644, 0.0
    %v3677 = vmax.f32 %v3645, 0.0
    %v3678 = vmax.f32 %v3646, 0.0
    %v3679 = vmax.f32 %v3647, 0.0
    %v3680 = vmax.f32 %v3648, 0.0
    %v3681 = vmax.f32 %v3649, 0.0
    %v3682 = vmax.f32 %v3650, 0.0
    %v3683 = vmax.f32 %v3651, 0.0
    %v3684 = vmax.f32 %v3652, 0.0
    %v3685 = vmax.f32 %v3653, 0.0
    %v3686 = vmax.f32 %v3654, 0.0
    %s3687 = scalar_lea.vmem [#allocation5], 160
    %v3688 = vld [vmem:[%s3687] sm:$0xff]
    %v3689 = vld [vmem:[%s3687 + $0x8] sm:$0xff]
    %v3690 = vld [vmem:[%s3687 + $0x10] sm:$0xff]
    %v3691 = vld [vmem:[%s3687 + $0x18] sm:$0xff]
    %v3693 = vsel %vm621, %v3655, 0
    %v3696 = vsel %vm621, %v3656, 0
    %v3699 = vsel %vm621, %v3657, 0
    %v3702 = vsel %vm621, %v3658, 0
    %v3705 = vsel %vm621, %v3659, 0
    %v3708 = vsel %vm621, %v3660, 0
    %v3711 = vsel %vm621, %v3661, 0
    %v3714 = vsel %vm621, %v3662, 0
    %v3717 = vsel %vm621, %v3663, 0
    %v3720 = vsel %vm621, %v3664, 0
    %v3723 = vsel %vm621, %v3665, 0
    %v3726 = vsel %vm621, %v3666, 0
    %v3729 = vsel %vm621, %v3667, 0
    %v3732 = vsel %vm621, %v3668, 0
    %v3735 = vsel %vm621, %v3669, 0
    %v3738 = vsel %vm621, %v3670, 0
    %v3741 = vsel %vm621, %v3671, 0
    %v3744 = vsel %vm621, %v3672, 0
    %v3747 = vsel %vm621, %v3673, 0
    %v3750 = vsel %vm621, %v3674, 0
    %v3753 = vsel %vm621, %v3675, 0
    %v3756 = vsel %vm621, %v3676, 0
    %v3759 = vsel %vm621, %v3677, 0
    %v3762 = vsel %vm621, %v3678, 0
    %v3765 = vsel %vm621, %v3679, 0
    %v3768 = vsel %vm621, %v3680, 0
    %v3771 = vsel %vm621, %v3681, 0
    %v3774 = vsel %vm621, %v3682, 0
    %v3777 = vsel %vm621, %v3683, 0
    %v3780 = vsel %vm621, %v3684, 0
    %v3783 = vsel %vm621, %v3685, 0
    %v3786 = vsel %vm621, %v3686, 0
    %3788 = vmatprep.subr.mxu0 0.0
    %3789 = vmatpush1.msra.mxu0 0.0
    %3790 = vmatprep.subr.mxu0 0.0
    %3791 = vmatpush1.msra.mxu0 0.0
    %3792 = vmatprep.subr.mxu0 0.0
    %3793 = vmatpush1.msra.mxu0 0.0
    %3794 = vmatprep.subr.mxu0 0.0
    %3795 = vmatpush1.msra.mxu0 0.0
    %3796 = vmatprep.subr.mxu0 0.0
    %3797 = vmatpush1.msra.mxu0 0.0
    %3798 = vmatprep.subr.mxu0 0.0
    %3799 = vmatpush1.msra.mxu0 0.0
    %3800 = vmatprep.subr.mxu0 0.0
    %3801 = vmatpush1.msra.mxu0 0.0
    %3802 = vmatprep.subr.mxu0 0.0
    %3803 = vmatpush1.msra.mxu0 0.0
    %3804 = vmatprep.subr.mxu0 0.0
    %3805 = vmatpush1.msra.mxu0 0.0
    %3806 = vmatprep.subr.mxu0 0.0
    %3807 = vmatpush1.msra.mxu0 0.0
    %3808 = vmatprep.subr.mxu0 0.0
    %3809 = vmatpush1.msra.mxu0 0.0
    %3810 = vmatprep.subr.mxu0 0.0
    %3811 = vmatpush1.msra.mxu0 0.0
    %3812 = vmatprep.subr.mxu0 0.0
    %3813 = vmatpush1.msra.mxu0 %v3691
    %3814 = vmatprep.subr.mxu0 0.0
    %3815 = vmatpush1.msra.mxu0 %v3690
    %3816 = vmatprep.subr.mxu0 0.0
    %3817 = vmatpush1.msra.mxu0 %v3689
    %3818 = vmatprep.subr.mxu0 0.0
    %3819 = vmatpush1.msra.mxu0 %v3688
    %3820 = vmatprep.subr.mxu0 0.0
    %3821 = vmatpush2.msra.mxu0 0.0
    %3822 = vmatprep.subr.mxu0 0.0
    %3823 = vmatpush2.msra.mxu0 0.0
    %3824 = vmatprep.subr.mxu0 0.0
    %3825 = vmatpush2.msra.mxu0 0.0
    %3826 = vmatprep.subr.mxu0 0.0
    %3827 = vmatpush2.msra.mxu0 0.0
    %3828 = vmatprep.subr.mxu0 0.0
    %3829 = vmatpush2.msra.mxu0 0.0
    %3830 = vmatprep.subr.mxu0 0.0
    %3831 = vmatpush2.msra.mxu0 0.0
    %3832 = vmatprep.subr.mxu0 0.0
    %3833 = vmatpush2.msra.mxu0 0.0
    %3834 = vmatprep.subr.mxu0 0.0
    %3835 = vmatpush2.msra.mxu0 0.0
    %3836 = vmatprep.subr.mxu0 0.0
    %3837 = vmatpush2.msra.mxu0 0.0
    %3838 = vmatprep.subr.mxu0 0.0
    %3839 = vmatpush2.msra.mxu0 0.0
    %3840 = vmatprep.subr.mxu0 0.0
    %3841 = vmatpush2.msra.mxu0 0.0
    %3842 = vmatprep.subr.mxu0 0.0
    %3843 = vmatpush2.msra.mxu0 0.0
    %3844 = vmatprep.subr.mxu0 0.0
    %3845 = vmatpush2.msra.mxu0 0.0
    %3846 = vmatprep.subr.mxu0 0.0
    %3847 = vmatpush2.msra.mxu0 0.0
    %3848 = vmatprep.subr.mxu0 0.0
    %3849 = vmatpush2.msra.mxu0 0.0
    %3850 = vmatprep.subr.mxu0 0.0
    %3851 = vmatpush2.msra.mxu0 0.0
    %3852 = vmatprep.mubr.f32.mxu0 0.0
    %3853 = vmatmul.mubr.f32.gmra.mxu0 %v3693
    %v3854 = vpop.f32.mrf.mxu0
    %v3855 = vadd.f32 0.0, %v3854
    %v3856 = vpop.f32.mrf.mxu0
    %3857 = vmatprep.mubr.f32.mxu0 0.0
    %3858 = vmatmul.mubr.f32.gmra.mxu0 %v3696
    %v3859 = vpop.f32.mrf.mxu0
    %v3860 = vadd.f32 0.0, %v3859
    %v3861 = vpop.f32.mrf.mxu0
    %3862 = vmatprep.mubr.f32.mxu0 0.0
    %3863 = vmatmul.mubr.f32.gmra.mxu0 %v3699
    %v3864 = vpop.f32.mrf.mxu0
    %v3865 = vadd.f32 0.0, %v3864
    %v3866 = vpop.f32.mrf.mxu0
    %3867 = vmatprep.mubr.f32.mxu0 0.0
    %3868 = vmatmul.mubr.f32.gmra.mxu0 %v3702
    %v3869 = vpop.f32.mrf.mxu0
    %v3870 = vadd.f32 0.0, %v3869
    %v3871 = vpop.f32.mrf.mxu0
    %3872 = vmatprep.mubr.f32.mxu0 0.0
    %3873 = vmatmul.mubr.f32.gmra.mxu0 %v3705
    %v3874 = vpop.f32.mrf.mxu0
    %v3875 = vadd.f32 0.0, %v3874
    %v3876 = vpop.f32.mrf.mxu0
    %3877 = vmatprep.mubr.f32.mxu0 0.0
    %3878 = vmatmul.mubr.f32.gmra.mxu0 %v3708
    %v3879 = vpop.f32.mrf.mxu0
    %v3880 = vadd.f32 0.0, %v3879
    %v3881 = vpop.f32.mrf.mxu0
    %3882 = vmatprep.mubr.f32.mxu0 0.0
    %3883 = vmatmul.mubr.f32.gmra.mxu0 %v3711
    %v3884 = vpop.f32.mrf.mxu0
    %v3885 = vadd.f32 0.0, %v3884
    %v3886 = vpop.f32.mrf.mxu0
    %3887 = vmatprep.mubr.f32.mxu0 0.0
    %3888 = vmatmul.mubr.f32.gmra.mxu0 %v3714
    %v3889 = vpop.f32.mrf.mxu0
    %v3890 = vadd.f32 0.0, %v3889
    %v3891 = vpop.f32.mrf.mxu0
    %3892 = vmatprep.mubr.f32.mxu0 0.0
    %3893 = vmatmul.mubr.f32.gmra.mxu0 %v3717
    %v3894 = vpop.f32.mrf.mxu0
    %v3895 = vadd.f32 0.0, %v3894
    %v3896 = vpop.f32.mrf.mxu0
    %3897 = vmatprep.mubr.f32.mxu0 0.0
    %3898 = vmatmul.mubr.f32.gmra.mxu0 %v3720
    %v3899 = vpop.f32.mrf.mxu0
    %v3900 = vadd.f32 0.0, %v3899
    %v3901 = vpop.f32.mrf.mxu0
    %3902 = vmatprep.mubr.f32.mxu0 0.0
    %3903 = vmatmul.mubr.f32.gmra.mxu0 %v3723
    %v3904 = vpop.f32.mrf.mxu0
    %v3905 = vadd.f32 0.0, %v3904
    %v3906 = vpop.f32.mrf.mxu0
    %3907 = vmatprep.mubr.f32.mxu0 0.0
    %3908 = vmatmul.mubr.f32.gmra.mxu0 %v3726
    %v3909 = vpop.f32.mrf.mxu0
    %v3910 = vadd.f32 0.0, %v3909
    %v3911 = vpop.f32.mrf.mxu0
    %3912 = vmatprep.mubr.f32.mxu0 0.0
    %3913 = vmatmul.mubr.f32.gmra.mxu0 %v3729
    %v3914 = vpop.f32.mrf.mxu0
    %v3915 = vadd.f32 0.0, %v3914
    %v3916 = vpop.f32.mrf.mxu0
    %3917 = vmatprep.mubr.f32.mxu0 0.0
    %3918 = vmatmul.mubr.f32.gmra.mxu0 %v3732
    %v3919 = vpop.f32.mrf.mxu0
    %v3920 = vadd.f32 0.0, %v3919
    %v3921 = vpop.f32.mrf.mxu0
    %3922 = vmatprep.mubr.f32.mxu0 0.0
    %3923 = vmatmul.mubr.f32.gmra.mxu0 %v3735
    %v3924 = vpop.f32.mrf.mxu0
    %v3925 = vadd.f32 0.0, %v3924
    %v3926 = vpop.f32.mrf.mxu0
    %3927 = vmatprep.mubr.f32.mxu0 0.0
    %3928 = vmatmul.mubr.f32.gmra.mxu0 %v3738
    %v3929 = vpop.f32.mrf.mxu0
    %v3930 = vadd.f32 0.0, %v3929
    %v3931 = vpop.f32.mrf.mxu0
    %3932 = vmatprep.mubr.f32.mxu0 0.0
    %3933 = vmatmul.mubr.f32.gmra.mxu0 %v3741
    %v3934 = vpop.f32.mrf.mxu0
    %v3935 = vadd.f32 0.0, %v3934
    %v3936 = vpop.f32.mrf.mxu0
    %3937 = vmatprep.mubr.f32.mxu0 0.0
    %3938 = vmatmul.mubr.f32.gmra.mxu0 %v3744
    %v3939 = vpop.f32.mrf.mxu0
    %v3940 = vadd.f32 0.0, %v3939
    %v3941 = vpop.f32.mrf.mxu0
    %3942 = vmatprep.mubr.f32.mxu0 0.0
    %3943 = vmatmul.mubr.f32.gmra.mxu0 %v3747
    %v3944 = vpop.f32.mrf.mxu0
    %v3945 = vadd.f32 0.0, %v3944
    %v3946 = vpop.f32.mrf.mxu0
    %3947 = vmatprep.mubr.f32.mxu0 0.0
    %3948 = vmatmul.mubr.f32.gmra.mxu0 %v3750
    %v3949 = vpop.f32.mrf.mxu0
    %v3950 = vadd.f32 0.0, %v3949
    %v3951 = vpop.f32.mrf.mxu0
    %3952 = vmatprep.mubr.f32.mxu0 0.0
    %3953 = vmatmul.mubr.f32.gmra.mxu0 %v3753
    %v3954 = vpop.f32.mrf.mxu0
    %v3955 = vadd.f32 0.0, %v3954
    %v3956 = vpop.f32.mrf.mxu0
    %3957 = vmatprep.mubr.f32.mxu0 0.0
    %3958 = vmatmul.mubr.f32.gmra.mxu0 %v3756
    %v3959 = vpop.f32.mrf.mxu0
    %v3960 = vadd.f32 0.0, %v3959
    %v3961 = vpop.f32.mrf.mxu0
    %3962 = vmatprep.mubr.f32.mxu0 0.0
    %3963 = vmatmul.mubr.f32.gmra.mxu0 %v3759
    %v3964 = vpop.f32.mrf.mxu0
    %v3965 = vadd.f32 0.0, %v3964
    %v3966 = vpop.f32.mrf.mxu0
    %3967 = vmatprep.mubr.f32.mxu0 0.0
    %3968 = vmatmul.mubr.f32.gmra.mxu0 %v3762
    %v3969 = vpop.f32.mrf.mxu0
    %v3970 = vadd.f32 0.0, %v3969
    %v3971 = vpop.f32.mrf.mxu0
    %3972 = vmatprep.mubr.f32.mxu0 0.0
    %3973 = vmatmul.mubr.f32.gmra.mxu0 %v3765
    %v3974 = vpop.f32.mrf.mxu0
    %v3975 = vadd.f32 0.0, %v3974
    %v3976 = vpop.f32.mrf.mxu0
    %3977 = vmatprep.mubr.f32.mxu0 0.0
    %3978 = vmatmul.mubr.f32.gmra.mxu0 %v3768
    %v3979 = vpop.f32.mrf.mxu0
    %v3980 = vadd.f32 0.0, %v3979
    %v3981 = vpop.f32.mrf.mxu0
    %3982 = vmatprep.mubr.f32.mxu0 0.0
    %3983 = vmatmul.mubr.f32.gmra.mxu0 %v3771
    %v3984 = vpop.f32.mrf.mxu0
    %v3985 = vadd.f32 0.0, %v3984
    %v3986 = vpop.f32.mrf.mxu0
    %3987 = vmatprep.mubr.f32.mxu0 0.0
    %3988 = vmatmul.mubr.f32.gmra.mxu0 %v3774
    %v3989 = vpop.f32.mrf.mxu0
    %v3990 = vadd.f32 0.0, %v3989
    %v3991 = vpop.f32.mrf.mxu0
    %3992 = vmatprep.mubr.f32.mxu0 0.0
    %3993 = vmatmul.mubr.f32.gmra.mxu0 %v3777
    %v3994 = vpop.f32.mrf.mxu0
    %v3995 = vadd.f32 0.0, %v3994
    %v3996 = vpop.f32.mrf.mxu0
    %3997 = vmatprep.mubr.f32.mxu0 0.0
    %3998 = vmatmul.mubr.f32.gmra.mxu0 %v3780
    %v3999 = vpop.f32.mrf.mxu0
    %v4000 = vadd.f32 0.0, %v3999
    %v4001 = vpop.f32.mrf.mxu0
    %4002 = vmatprep.mubr.f32.mxu0 0.0
    %4003 = vmatmul.mubr.f32.gmra.mxu0 %v3783
    %v4004 = vpop.f32.mrf.mxu0
    %v4005 = vadd.f32 0.0, %v4004
    %v4006 = vpop.f32.mrf.mxu0
    %4007 = vmatprep.mubr.f32.mxu0 0.0
    %4008 = vmatmul.mubr.f32.gmra.mxu0 %v3786
    %v4009 = vpop.f32.mrf.mxu0
    %v4010 = vadd.f32 0.0, %v4009
    %v4011 = vpop.f32.mrf.mxu0
    %4012 = vdwg.mxu0
    %4013 = vmatprep.subr.mxu0 0.0
    %4014 = vmatpush1.msra.mxu0 %v3930
    %4015 = vmatprep.subr.mxu0 0.0
    %4016 = vmatpush1.msra.mxu0 %v3925
    %4017 = vmatprep.subr.mxu0 0.0
    %4018 = vmatpush1.msra.mxu0 %v3920
    %4019 = vmatprep.subr.mxu0 0.0
    %4020 = vmatpush1.msra.mxu0 %v3915
    %4021 = vmatprep.subr.mxu0 0.0
    %4022 = vmatpush1.msra.mxu0 %v3910
    %4023 = vmatprep.subr.mxu0 0.0
    %4024 = vmatpush1.msra.mxu0 %v3905
    %4025 = vmatprep.subr.mxu0 0.0
    %4026 = vmatpush1.msra.mxu0 %v3900
    %4027 = vmatprep.subr.mxu0 0.0
    %4028 = vmatpush1.msra.mxu0 %v3895
    %4029 = vmatprep.subr.mxu0 0.0
    %4030 = vmatpush1.msra.mxu0 %v3890
    %4031 = vmatprep.subr.mxu0 0.0
    %4032 = vmatpush1.msra.mxu0 %v3885
    %4033 = vmatprep.subr.mxu0 0.0
    %4034 = vmatpush1.msra.mxu0 %v3880
    %4035 = vmatprep.subr.mxu0 0.0
    %4036 = vmatpush1.msra.mxu0 %v3875
    %4037 = vmatprep.subr.mxu0 0.0
    %4038 = vmatpush1.msra.mxu0 %v3870
    %4039 = vmatprep.subr.mxu0 0.0
    %4040 = vmatpush1.msra.mxu0 %v3865
    %4041 = vmatprep.subr.mxu0 0.0
    %4042 = vmatpush1.msra.mxu0 %v3860
    %4043 = vmatprep.subr.mxu0 0.0
    %4044 = vmatpush1.msra.mxu0 %v3855
    %4045 = vmatprep.subr.mxu0 0.0
    %4046 = vmatpush2.msra.mxu0 %v4010
    %4047 = vmatprep.subr.mxu0 0.0
    %4048 = vmatpush2.msra.mxu0 %v4005
    %4049 = vmatprep.subr.mxu0 0.0
    %4050 = vmatpush2.msra.mxu0 %v4000
    %4051 = vmatprep.subr.mxu0 0.0
    %4052 = vmatpush2.msra.mxu0 %v3995
    %4053 = vmatprep.subr.mxu0 0.0
    %4054 = vmatpush2.msra.mxu0 %v3990
    %4055 = vmatprep.subr.mxu0 0.0
    %4056 = vmatpush2.msra.mxu0 %v3985
    %4057 = vmatprep.subr.mxu0 0.0
    %4058 = vmatpush2.msra.mxu0 %v3980
    %4059 = vmatprep.subr.mxu0 0.0
    %4060 = vmatpush2.msra.mxu0 %v3975
    %4061 = vmatprep.subr.mxu0 0.0
    %4062 = vmatpush2.msra.mxu0 %v3970
    %4063 = vmatprep.subr.mxu0 0.0
    %4064 = vmatpush2.msra.mxu0 %v3965
    %4065 = vmatprep.subr.mxu0 0.0
    %4066 = vmatpush2.msra.mxu0 %v3960
    %4067 = vmatprep.subr.mxu0 0.0
    %4068 = vmatpush2.msra.mxu0 %v3955
    %4069 = vmatprep.subr.mxu0 0.0
    %4070 = vmatpush2.msra.mxu0 %v3950
    %4071 = vmatprep.subr.mxu0 0.0
    %4072 = vmatpush2.msra.mxu0 %v3945
    %4073 = vmatprep.subr.mxu0 0.0
    %4074 = vmatpush2.msra.mxu0 %v3940
    %4075 = vmatprep.subr.mxu0 0.0
    %4076 = vmatpush2.msra.mxu0 %v3935
    %4077 = vmatprep.mubr.f32.mxu0 1.0
    %4078 = vmatmul.mubr.f32.gmra.mxu0 1.0
    %v4079 = vpop.f32.mrf.mxu0
    %v4080 = vadd.f32 0.0, %v4079
    %v4081 = vpop.f32.mrf.mxu0
    %4082 = vdwg.mxu0
    %v4083 = vmul.f32 %v3855, %v3855
    %v4084 = vmul.f32 %v3860, %v3860
    %v4085 = vmul.f32 %v3865, %v3865
    %v4086 = vmul.f32 %v3870, %v3870
    %v4087 = vmul.f32 %v3875, %v3875
    %v4088 = vmul.f32 %v3880, %v3880
    %v4089 = vmul.f32 %v3885, %v3885
    %v4090 = vmul.f32 %v3890, %v3890
    %v4091 = vmul.f32 %v3895, %v3895
    %v4092 = vmul.f32 %v3900, %v3900
    %v4093 = vmul.f32 %v3905, %v3905
    %v4094 = vmul.f32 %v3910, %v3910
    %v4095 = vmul.f32 %v3915, %v3915
    %v4096 = vmul.f32 %v3920, %v3920
    %v4097 = vmul.f32 %v3925, %v3925
    %v4098 = vmul.f32 %v3930, %v3930
    %v4099 = vmul.f32 %v3935, %v3935
    %v4100 = vmul.f32 %v3940, %v3940
    %v4101 = vmul.f32 %v3945, %v3945
    %v4102 = vmul.f32 %v3950, %v3950
    %v4103 = vmul.f32 %v3955, %v3955
    %v4104 = vmul.f32 %v3960, %v3960
    %v4105 = vmul.f32 %v3965, %v3965
    %v4106 = vmul.f32 %v3970, %v3970
    %v4107 = vmul.f32 %v3975, %v3975
    %v4108 = vmul.f32 %v3980, %v3980
    %v4109 = vmul.f32 %v3985, %v3985
    %v4110 = vmul.f32 %v3990, %v3990
    %v4111 = vmul.f32 %v3995, %v3995
    %v4112 = vmul.f32 %v4000, %v4000
    %v4113 = vmul.f32 %v4005, %v4005
    %v4114 = vmul.f32 %v4010, %v4010
    %4115 = vmatprep.subr.mxu0 0.0
    %4116 = vmatpush1.msra.mxu0 %v4098
    %4117 = vmatprep.subr.mxu0 0.0
    %4118 = vmatpush1.msra.mxu0 %v4097
    %4119 = vmatprep.subr.mxu0 0.0
    %4120 = vmatpush1.msra.mxu0 %v4096
    %4121 = vmatprep.subr.mxu0 0.0
    %4122 = vmatpush1.msra.mxu0 %v4095
    %4123 = vmatprep.subr.mxu0 0.0
    %4124 = vmatpush1.msra.mxu0 %v4094
    %4125 = vmatprep.subr.mxu0 0.0
    %4126 = vmatpush1.msra.mxu0 %v4093
    %4127 = vmatprep.subr.mxu0 0.0
    %4128 = vmatpush1.msra.mxu0 %v4092
    %4129 = vmatprep.subr.mxu0 0.0
    %4130 = vmatpush1.msra.mxu0 %v4091
    %4131 = vmatprep.subr.mxu0 0.0
    %4132 = vmatpush1.msra.mxu0 %v4090
    %4133 = vmatprep.subr.mxu0 0.0
    %4134 = vmatpush1.msra.mxu0 %v4089
    %4135 = vmatprep.subr.mxu0 0.0
    %4136 = vmatpush1.msra.mxu0 %v4088
    %4137 = vmatprep.subr.mxu0 0.0
    %4138 = vmatpush1.msra.mxu0 %v4087
    %4139 = vmatprep.subr.mxu0 0.0
    %4140 = vmatpush1.msra.mxu0 %v4086
    %4141 = vmatprep.subr.mxu0 0.0
    %4142 = vmatpush1.msra.mxu0 %v4085
    %4143 = vmatprep.subr.mxu0 0.0
    %4144 = vmatpush1.msra.mxu0 %v4084
    %4145 = vmatprep.subr.mxu0 0.0
    %4146 = vmatpush1.msra.mxu0 %v4083
    %4147 = vmatprep.subr.mxu0 0.0
    %4148 = vmatpush2.msra.mxu0 %v4114
    %4149 = vmatprep.subr.mxu0 0.0
    %4150 = vmatpush2.msra.mxu0 %v4113
    %4151 = vmatprep.subr.mxu0 0.0
    %4152 = vmatpush2.msra.mxu0 %v4112
    %4153 = vmatprep.subr.mxu0 0.0
    %4154 = vmatpush2.msra.mxu0 %v4111
    %4155 = vmatprep.subr.mxu0 0.0
    %4156 = vmatpush2.msra.mxu0 %v4110
    %4157 = vmatprep.subr.mxu0 0.0
    %4158 = vmatpush2.msra.mxu0 %v4109
    %4159 = vmatprep.subr.mxu0 0.0
    %4160 = vmatpush2.msra.mxu0 %v4108
    %4161 = vmatprep.subr.mxu0 0.0
    %4162 = vmatpush2.msra.mxu0 %v4107
    %4163 = vmatprep.subr.mxu0 0.0
    %4164 = vmatpush2.msra.mxu0 %v4106
    %4165 = vmatprep.subr.mxu0 0.0
    %4166 = vmatpush2.msra.mxu0 %v4105
    %4167 = vmatprep.subr.mxu0 0.0
    %4168 = vmatpush2.msra.mxu0 %v4104
    %4169 = vmatprep.subr.mxu0 0.0
    %4170 = vmatpush2.msra.mxu0 %v4103
    %4171 = vmatprep.subr.mxu0 0.0
    %4172 = vmatpush2.msra.mxu0 %v4102
    %4173 = vmatprep.subr.mxu0 0.0
    %4174 = vmatpush2.msra.mxu0 %v4101
    %4175 = vmatprep.subr.mxu0 0.0
    %4176 = vmatpush2.msra.mxu0 %v4100
    %4177 = vmatprep.subr.mxu0 0.0
    %4178 = vmatpush2.msra.mxu0 %v4099
    %4179 = vmatprep.mubr.f32.mxu0 1.0
    %4180 = vmatmul.mubr.f32.gmra.mxu0 1.0
    %v4181 = vpop.f32.mrf.mxu0
    %v4182 = vadd.f32 0.0, %v4181
    %v4183 = vpop.f32.mrf.mxu0
    %4184 = vdwg.mxu0
    %v4185 = vmul.f32 %v4080, 0.00390625
    %v4186 = vmul.f32 %v4182, 0.00390625
    %v4187 = vmul.f32 %v4185, %v4185
    %v4188 = vsub.f32 %v4186, %v4187
    %v4189 = vmax.f32 %v4188, 0.0
    %v4190 = vld [vmem:[%s3 + $0x6] sm:$0x1]
    %v4191 = vadd.f32 %v4189, 1e-05
    %v4192 = vrsqrt.pop %v4191
    %v4193 = vmul.f32 %v4190, %v4192
    %v4194 = vld [vmem:[%s4 + $0x6] sm:$0x1]
    %v4195 = vmul.f32 %v4185, %v4193
    %v4196 = vsub.f32 %v4194, %v4195
    %v4197 = vlaneseq
    %v4198 = vshrl.u32 %v4197, 7
    %v4199 = vsub.s32 0, %v4198
    %v4200 = vrot.slane %v4193, %v4199
    %v4201 = vmul.f32 %v3855, %v4200
    %v4202 = vmul.f32 %v3860, %v4200
    %v4203 = vmul.f32 %v3865, %v4200
    %v4204 = vmul.f32 %v3870, %v4200
    %v4205 = vmul.f32 %v3875, %v4200
    %v4206 = vmul.f32 %v3880, %v4200
    %v4207 = vmul.f32 %v3885, %v4200
    %v4208 = vmul.f32 %v3890, %v4200
    %v4209 = vmul.f32 %v3895, %v4200
    %v4210 = vmul.f32 %v3900, %v4200
    %v4211 = vmul.f32 %v3905, %v4200
    %v4212 = vmul.f32 %v3910, %v4200
    %v4213 = vmul.f32 %v3915, %v4200
    %v4214 = vmul.f32 %v3920, %v4200
    %v4215 = vmul.f32 %v3925, %v4200
    %v4216 = vmul.f32 %v3930, %v4200
    %v4217 = vmul.f32 %v3935, %v4200
    %v4218 = vmul.f32 %v3940, %v4200
    %v4219 = vmul.f32 %v3945, %v4200
    %v4220 = vmul.f32 %v3950, %v4200
    %v4221 = vmul.f32 %v3955, %v4200
    %v4222 = vmul.f32 %v3960, %v4200
    %v4223 = vmul.f32 %v3965, %v4200
    %v4224 = vmul.f32 %v3970, %v4200
    %v4225 = vmul.f32 %v3975, %v4200
    %v4226 = vmul.f32 %v3980, %v4200
    %v4227 = vmul.f32 %v3985, %v4200
    %v4228 = vmul.f32 %v3990, %v4200
    %v4229 = vmul.f32 %v3995, %v4200
    %v4230 = vmul.f32 %v4000, %v4200
    %v4231 = vmul.f32 %v4005, %v4200
    %v4232 = vmul.f32 %v4010, %v4200
    %v4233 = vlaneseq
    %v4234 = vshrl.u32 %v4233, 7
    %v4235 = vsub.s32 0, %v4234
    %v4236 = vrot.slane %v4196, %v4235
    %v4237 = vadd.f32 %v4201, %v4236
    %v4238 = vadd.f32 %v4202, %v4236
    %v4239 = vadd.f32 %v4203, %v4236
    %v4240 = vadd.f32 %v4204, %v4236
    %v4241 = vadd.f32 %v4205, %v4236
    %v4242 = vadd.f32 %v4206, %v4236
    %v4243 = vadd.f32 %v4207, %v4236
    %v4244 = vadd.f32 %v4208, %v4236
    %v4245 = vadd.f32 %v4209, %v4236
    %v4246 = vadd.f32 %v4210, %v4236
    %v4247 = vadd.f32 %v4211, %v4236
    %v4248 = vadd.f32 %v4212, %v4236
    %v4249 = vadd.f32 %v4213, %v4236
    %v4250 = vadd.f32 %v4214, %v4236
    %v4251 = vadd.f32 %v4215, %v4236
    %v4252 = vadd.f32 %v4216, %v4236
    %v4253 = vadd.f32 %v4217, %v4236
    %v4254 = vadd.f32 %v4218, %v4236
    %v4255 = vadd.f32 %v4219, %v4236
    %v4256 = vadd.f32 %v4220, %v4236
    %v4257 = vadd.f32 %v4221, %v4236
    %v4258 = vadd.f32 %v4222, %v4236
    %v4259 = vadd.f32 %v4223, %v4236
    %v4260 = vadd.f32 %v4224, %v4236
    %v4261 = vadd.f32 %v4225, %v4236
    %v4262 = vadd.f32 %v4226, %v4236
    %v4263 = vadd.f32 %v4227, %v4236
    %v4264 = vadd.f32 %v4228, %v4236
    %v4265 = vadd.f32 %v4229, %v4236
    %v4266 = vadd.f32 %v4230, %v4236
    %v4267 = vadd.f32 %v4231, %v4236
    %v4268 = vadd.f32 %v4232, %v4236
    %v4269 = vmax.f32 %v4237, 0.0
    %v4270 = vmax.f32 %v4238, 0.0
    %v4271 = vmax.f32 %v4239, 0.0
    %v4272 = vmax.f32 %v4240, 0.0
    %v4273 = vmax.f32 %v4241, 0.0
    %v4274 = vmax.f32 %v4242, 0.0
    %v4275 = vmax.f32 %v4243, 0.0
    %v4276 = vmax.f32 %v4244, 0.0
    %v4277 = vmax.f32 %v4245, 0.0
    %v4278 = vmax.f32 %v4246, 0.0
    %v4279 = vmax.f32 %v4247, 0.0
    %v4280 = vmax.f32 %v4248, 0.0
    %v4281 = vmax.f32 %v4249, 0.0
    %v4282 = vmax.f32 %v4250, 0.0
    %v4283 = vmax.f32 %v4251, 0.0
    %v4284 = vmax.f32 %v4252, 0.0
    %v4285 = vmax.f32 %v4253, 0.0
    %v4286 = vmax.f32 %v4254, 0.0
    %v4287 = vmax.f32 %v4255, 0.0
    %v4288 = vmax.f32 %v4256, 0.0
    %v4289 = vmax.f32 %v4257, 0.0
    %v4290 = vmax.f32 %v4258, 0.0
    %v4291 = vmax.f32 %v4259, 0.0
    %v4292 = vmax.f32 %v4260, 0.0
    %v4293 = vmax.f32 %v4261, 0.0
    %v4294 = vmax.f32 %v4262, 0.0
    %v4295 = vmax.f32 %v4263, 0.0
    %v4296 = vmax.f32 %v4264, 0.0
    %v4297 = vmax.f32 %v4265, 0.0
    %v4298 = vmax.f32 %v4266, 0.0
    %v4299 = vmax.f32 %v4267, 0.0
    %v4300 = vmax.f32 %v4268, 0.0
    %s4301 = scalar_lea.vmem [#allocation5], 192
    %v4302 = vld [vmem:[%s4301] sm:$0xff]
    %v4303 = vld [vmem:[%s4301 + $0x8] sm:$0xff]
    %v4304 = vld [vmem:[%s4301 + $0x10] sm:$0xff]
    %v4305 = vld [vmem:[%s4301 + $0x18] sm:$0xff]
    %v4307 = vsel %vm621, %v4269, 0
    %v4310 = vsel %vm621, %v4270, 0
    %v4313 = vsel %vm621, %v4271, 0
    %v4316 = vsel %vm621, %v4272, 0
    %v4319 = vsel %vm621, %v4273, 0
    %v4322 = vsel %vm621, %v4274, 0
    %v4325 = vsel %vm621, %v4275, 0
    %v4328 = vsel %vm621, %v4276, 0
    %v4331 = vsel %vm621, %v4277, 0
    %v4334 = vsel %vm621, %v4278, 0
    %v4337 = vsel %vm621, %v4279, 0
    %v4340 = vsel %vm621, %v4280, 0
    %v4343 = vsel %vm621, %v4281, 0
    %v4346 = vsel %vm621, %v4282, 0
    %v4349 = vsel %vm621, %v4283, 0
    %v4352 = vsel %vm621, %v4284, 0
    %v4355 = vsel %vm621, %v4285, 0
    %v4358 = vsel %vm621, %v4286, 0
    %v4361 = vsel %vm621, %v4287, 0
    %v4364 = vsel %vm621, %v4288, 0
    %v4367 = vsel %vm621, %v4289, 0
    %v4370 = vsel %vm621, %v4290, 0
    %v4373 = vsel %vm621, %v4291, 0
    %v4376 = vsel %vm621, %v4292, 0
    %v4379 = vsel %vm621, %v4293, 0
    %v4382 = vsel %vm621, %v4294, 0
    %v4385 = vsel %vm621, %v4295, 0
    %v4388 = vsel %vm621, %v4296, 0
    %v4391 = vsel %vm621, %v4297, 0
    %v4394 = vsel %vm621, %v4298, 0
    %v4397 = vsel %vm621, %v4299, 0
    %v4400 = vsel %vm621, %v4300, 0
    %4402 = vmatprep.subr.mxu0 0.0
    %4403 = vmatpush1.msra.mxu0 0.0
    %4404 = vmatprep.subr.mxu0 0.0
    %4405 = vmatpush1.msra.mxu0 0.0
    %4406 = vmatprep.subr.mxu0 0.0
    %4407 = vmatpush1.msra.mxu0 0.0
    %4408 = vmatprep.subr.mxu0 0.0
    %4409 = vmatpush1.msra.mxu0 0.0
    %4410 = vmatprep.subr.mxu0 0.0
    %4411 = vmatpush1.msra.mxu0 0.0
    %4412 = vmatprep.subr.mxu0 0.0
    %4413 = vmatpush1.msra.mxu0 0.0
    %4414 = vmatprep.subr.mxu0 0.0
    %4415 = vmatpush1.msra.mxu0 0.0
    %4416 = vmatprep.subr.mxu0 0.0
    %4417 = vmatpush1.msra.mxu0 0.0
    %4418 = vmatprep.subr.mxu0 0.0
    %4419 = vmatpush1.msra.mxu0 0.0
    %4420 = vmatprep.subr.mxu0 0.0
    %4421 = vmatpush1.msra.mxu0 0.0
    %4422 = vmatprep.subr.mxu0 0.0
    %4423 = vmatpush1.msra.mxu0 0.0
    %4424 = vmatprep.subr.mxu0 0.0
    %4425 = vmatpush1.msra.mxu0 0.0
    %4426 = vmatprep.subr.mxu0 0.0
    %4427 = vmatpush1.msra.mxu0 %v4305
    %4428 = vmatprep.subr.mxu0 0.0
    %4429 = vmatpush1.msra.mxu0 %v4304
    %4430 = vmatprep.subr.mxu0 0.0
    %4431 = vmatpush1.msra.mxu0 %v4303
    %4432 = vmatprep.subr.mxu0 0.0
    %4433 = vmatpush1.msra.mxu0 %v4302
    %4434 = vmatprep.subr.mxu0 0.0
    %4435 = vmatpush2.msra.mxu0 0.0
    %4436 = vmatprep.subr.mxu0 0.0
    %4437 = vmatpush2.msra.mxu0 0.0
    %4438 = vmatprep.subr.mxu0 0.0
    %4439 = vmatpush2.msra.mxu0 0.0
    %4440 = vmatprep.subr.mxu0 0.0
    %4441 = vmatpush2.msra.mxu0 0.0
    %4442 = vmatprep.subr.mxu0 0.0
    %4443 = vmatpush2.msra.mxu0 0.0
    %4444 = vmatprep.subr.mxu0 0.0
    %4445 = vmatpush2.msra.mxu0 0.0
    %4446 = vmatprep.subr.mxu0 0.0
    %4447 = vmatpush2.msra.mxu0 0.0
    %4448 = vmatprep.subr.mxu0 0.0
    %4449 = vmatpush2.msra.mxu0 0.0
    %4450 = vmatprep.subr.mxu0 0.0
    %4451 = vmatpush2.msra.mxu0 0.0
    %4452 = vmatprep.subr.mxu0 0.0
    %4453 = vmatpush2.msra.mxu0 0.0
    %4454 = vmatprep.subr.mxu0 0.0
    %4455 = vmatpush2.msra.mxu0 0.0
    %4456 = vmatprep.subr.mxu0 0.0
    %4457 = vmatpush2.msra.mxu0 0.0
    %4458 = vmatprep.subr.mxu0 0.0
    %4459 = vmatpush2.msra.mxu0 0.0
    %4460 = vmatprep.subr.mxu0 0.0
    %4461 = vmatpush2.msra.mxu0 0.0
    %4462 = vmatprep.subr.mxu0 0.0
    %4463 = vmatpush2.msra.mxu0 0.0
    %4464 = vmatprep.subr.mxu0 0.0
    %4465 = vmatpush2.msra.mxu0 0.0
    %4466 = vmatprep.mubr.f32.mxu0 0.0
    %4467 = vmatmul.mubr.f32.gmra.mxu0 %v4307
    %v4468 = vpop.f32.mrf.mxu0
    %v4469 = vadd.f32 0.0, %v4468
    %v4470 = vpop.f32.mrf.mxu0
    %4471 = vmatprep.mubr.f32.mxu0 0.0
    %4472 = vmatmul.mubr.f32.gmra.mxu0 %v4310
    %v4473 = vpop.f32.mrf.mxu0
    %v4474 = vadd.f32 0.0, %v4473
    %v4475 = vpop.f32.mrf.mxu0
    %4476 = vmatprep.mubr.f32.mxu0 0.0
    %4477 = vmatmul.mubr.f32.gmra.mxu0 %v4313
    %v4478 = vpop.f32.mrf.mxu0
    %v4479 = vadd.f32 0.0, %v4478
    %v4480 = vpop.f32.mrf.mxu0
    %4481 = vmatprep.mubr.f32.mxu0 0.0
    %4482 = vmatmul.mubr.f32.gmra.mxu0 %v4316
    %v4483 = vpop.f32.mrf.mxu0
    %v4484 = vadd.f32 0.0, %v4483
    %v4485 = vpop.f32.mrf.mxu0
    %4486 = vmatprep.mubr.f32.mxu0 0.0
    %4487 = vmatmul.mubr.f32.gmra.mxu0 %v4319
    %v4488 = vpop.f32.mrf.mxu0
    %v4489 = vadd.f32 0.0, %v4488
    %v4490 = vpop.f32.mrf.mxu0
    %4491 = vmatprep.mubr.f32.mxu0 0.0
    %4492 = vmatmul.mubr.f32.gmra.mxu0 %v4322
    %v4493 = vpop.f32.mrf.mxu0
    %v4494 = vadd.f32 0.0, %v4493
    %v4495 = vpop.f32.mrf.mxu0
    %4496 = vmatprep.mubr.f32.mxu0 0.0
    %4497 = vmatmul.mubr.f32.gmra.mxu0 %v4325
    %v4498 = vpop.f32.mrf.mxu0
    %v4499 = vadd.f32 0.0, %v4498
    %v4500 = vpop.f32.mrf.mxu0
    %4501 = vmatprep.mubr.f32.mxu0 0.0
    %4502 = vmatmul.mubr.f32.gmra.mxu0 %v4328
    %v4503 = vpop.f32.mrf.mxu0
    %v4504 = vadd.f32 0.0, %v4503
    %v4505 = vpop.f32.mrf.mxu0
    %4506 = vmatprep.mubr.f32.mxu0 0.0
    %4507 = vmatmul.mubr.f32.gmra.mxu0 %v4331
    %v4508 = vpop.f32.mrf.mxu0
    %v4509 = vadd.f32 0.0, %v4508
    %v4510 = vpop.f32.mrf.mxu0
    %4511 = vmatprep.mubr.f32.mxu0 0.0
    %4512 = vmatmul.mubr.f32.gmra.mxu0 %v4334
    %v4513 = vpop.f32.mrf.mxu0
    %v4514 = vadd.f32 0.0, %v4513
    %v4515 = vpop.f32.mrf.mxu0
    %4516 = vmatprep.mubr.f32.mxu0 0.0
    %4517 = vmatmul.mubr.f32.gmra.mxu0 %v4337
    %v4518 = vpop.f32.mrf.mxu0
    %v4519 = vadd.f32 0.0, %v4518
    %v4520 = vpop.f32.mrf.mxu0
    %4521 = vmatprep.mubr.f32.mxu0 0.0
    %4522 = vmatmul.mubr.f32.gmra.mxu0 %v4340
    %v4523 = vpop.f32.mrf.mxu0
    %v4524 = vadd.f32 0.0, %v4523
    %v4525 = vpop.f32.mrf.mxu0
    %4526 = vmatprep.mubr.f32.mxu0 0.0
    %4527 = vmatmul.mubr.f32.gmra.mxu0 %v4343
    %v4528 = vpop.f32.mrf.mxu0
    %v4529 = vadd.f32 0.0, %v4528
    %v4530 = vpop.f32.mrf.mxu0
    %4531 = vmatprep.mubr.f32.mxu0 0.0
    %4532 = vmatmul.mubr.f32.gmra.mxu0 %v4346
    %v4533 = vpop.f32.mrf.mxu0
    %v4534 = vadd.f32 0.0, %v4533
    %v4535 = vpop.f32.mrf.mxu0
    %4536 = vmatprep.mubr.f32.mxu0 0.0
    %4537 = vmatmul.mubr.f32.gmra.mxu0 %v4349
    %v4538 = vpop.f32.mrf.mxu0
    %v4539 = vadd.f32 0.0, %v4538
    %v4540 = vpop.f32.mrf.mxu0
    %4541 = vmatprep.mubr.f32.mxu0 0.0
    %4542 = vmatmul.mubr.f32.gmra.mxu0 %v4352
    %v4543 = vpop.f32.mrf.mxu0
    %v4544 = vadd.f32 0.0, %v4543
    %v4545 = vpop.f32.mrf.mxu0
    %4546 = vmatprep.mubr.f32.mxu0 0.0
    %4547 = vmatmul.mubr.f32.gmra.mxu0 %v4355
    %v4548 = vpop.f32.mrf.mxu0
    %v4549 = vadd.f32 0.0, %v4548
    %v4550 = vpop.f32.mrf.mxu0
    %4551 = vmatprep.mubr.f32.mxu0 0.0
    %4552 = vmatmul.mubr.f32.gmra.mxu0 %v4358
    %v4553 = vpop.f32.mrf.mxu0
    %v4554 = vadd.f32 0.0, %v4553
    %v4555 = vpop.f32.mrf.mxu0
    %4556 = vmatprep.mubr.f32.mxu0 0.0
    %4557 = vmatmul.mubr.f32.gmra.mxu0 %v4361
    %v4558 = vpop.f32.mrf.mxu0
    %v4559 = vadd.f32 0.0, %v4558
    %v4560 = vpop.f32.mrf.mxu0
    %4561 = vmatprep.mubr.f32.mxu0 0.0
    %4562 = vmatmul.mubr.f32.gmra.mxu0 %v4364
    %v4563 = vpop.f32.mrf.mxu0
    %v4564 = vadd.f32 0.0, %v4563
    %v4565 = vpop.f32.mrf.mxu0
    %4566 = vmatprep.mubr.f32.mxu0 0.0
    %4567 = vmatmul.mubr.f32.gmra.mxu0 %v4367
    %v4568 = vpop.f32.mrf.mxu0
    %v4569 = vadd.f32 0.0, %v4568
    %v4570 = vpop.f32.mrf.mxu0
    %4571 = vmatprep.mubr.f32.mxu0 0.0
    %4572 = vmatmul.mubr.f32.gmra.mxu0 %v4370
    %v4573 = vpop.f32.mrf.mxu0
    %v4574 = vadd.f32 0.0, %v4573
    %v4575 = vpop.f32.mrf.mxu0
    %4576 = vmatprep.mubr.f32.mxu0 0.0
    %4577 = vmatmul.mubr.f32.gmra.mxu0 %v4373
    %v4578 = vpop.f32.mrf.mxu0
    %v4579 = vadd.f32 0.0, %v4578
    %v4580 = vpop.f32.mrf.mxu0
    %4581 = vmatprep.mubr.f32.mxu0 0.0
    %4582 = vmatmul.mubr.f32.gmra.mxu0 %v4376
    %v4583 = vpop.f32.mrf.mxu0
    %v4584 = vadd.f32 0.0, %v4583
    %v4585 = vpop.f32.mrf.mxu0
    %4586 = vmatprep.mubr.f32.mxu0 0.0
    %4587 = vmatmul.mubr.f32.gmra.mxu0 %v4379
    %v4588 = vpop.f32.mrf.mxu0
    %v4589 = vadd.f32 0.0, %v4588
    %v4590 = vpop.f32.mrf.mxu0
    %4591 = vmatprep.mubr.f32.mxu0 0.0
    %4592 = vmatmul.mubr.f32.gmra.mxu0 %v4382
    %v4593 = vpop.f32.mrf.mxu0
    %v4594 = vadd.f32 0.0, %v4593
    %v4595 = vpop.f32.mrf.mxu0
    %4596 = vmatprep.mubr.f32.mxu0 0.0
    %4597 = vmatmul.mubr.f32.gmra.mxu0 %v4385
    %v4598 = vpop.f32.mrf.mxu0
    %v4599 = vadd.f32 0.0, %v4598
    %v4600 = vpop.f32.mrf.mxu0
    %4601 = vmatprep.mubr.f32.mxu0 0.0
    %4602 = vmatmul.mubr.f32.gmra.mxu0 %v4388
    %v4603 = vpop.f32.mrf.mxu0
    %v4604 = vadd.f32 0.0, %v4603
    %v4605 = vpop.f32.mrf.mxu0
    %4606 = vmatprep.mubr.f32.mxu0 0.0
    %4607 = vmatmul.mubr.f32.gmra.mxu0 %v4391
    %v4608 = vpop.f32.mrf.mxu0
    %v4609 = vadd.f32 0.0, %v4608
    %v4610 = vpop.f32.mrf.mxu0
    %4611 = vmatprep.mubr.f32.mxu0 0.0
    %4612 = vmatmul.mubr.f32.gmra.mxu0 %v4394
    %v4613 = vpop.f32.mrf.mxu0
    %v4614 = vadd.f32 0.0, %v4613
    %v4615 = vpop.f32.mrf.mxu0
    %4616 = vmatprep.mubr.f32.mxu0 0.0
    %4617 = vmatmul.mubr.f32.gmra.mxu0 %v4397
    %v4618 = vpop.f32.mrf.mxu0
    %v4619 = vadd.f32 0.0, %v4618
    %v4620 = vpop.f32.mrf.mxu0
    %4621 = vmatprep.mubr.f32.mxu0 0.0
    %4622 = vmatmul.mubr.f32.gmra.mxu0 %v4400
    %v4623 = vpop.f32.mrf.mxu0
    %v4624 = vadd.f32 0.0, %v4623
    %v4625 = vpop.f32.mrf.mxu0
    %4626 = vdwg.mxu0
    %4627 = vmatprep.subr.mxu0 0.0
    %4628 = vmatpush1.msra.mxu0 %v4544
    %4629 = vmatprep.subr.mxu0 0.0
    %4630 = vmatpush1.msra.mxu0 %v4539
    %4631 = vmatprep.subr.mxu0 0.0
    %4632 = vmatpush1.msra.mxu0 %v4534
    %4633 = vmatprep.subr.mxu0 0.0
    %4634 = vmatpush1.msra.mxu0 %v4529
    %4635 = vmatprep.subr.mxu0 0.0
    %4636 = vmatpush1.msra.mxu0 %v4524
    %4637 = vmatprep.subr.mxu0 0.0
    %4638 = vmatpush1.msra.mxu0 %v4519
    %4639 = vmatprep.subr.mxu0 0.0
    %4640 = vmatpush1.msra.mxu0 %v4514
    %4641 = vmatprep.subr.mxu0 0.0
    %4642 = vmatpush1.msra.mxu0 %v4509
    %4643 = vmatprep.subr.mxu0 0.0
    %4644 = vmatpush1.msra.mxu0 %v4504
    %4645 = vmatprep.subr.mxu0 0.0
    %4646 = vmatpush1.msra.mxu0 %v4499
    %4647 = vmatprep.subr.mxu0 0.0
    %4648 = vmatpush1.msra.mxu0 %v4494
    %4649 = vmatprep.subr.mxu0 0.0
    %4650 = vmatpush1.msra.mxu0 %v4489
    %4651 = vmatprep.subr.mxu0 0.0
    %4652 = vmatpush1.msra.mxu0 %v4484
    %4653 = vmatprep.subr.mxu0 0.0
    %4654 = vmatpush1.msra.mxu0 %v4479
    %4655 = vmatprep.subr.mxu0 0.0
    %4656 = vmatpush1.msra.mxu0 %v4474
    %4657 = vmatprep.subr.mxu0 0.0
    %4658 = vmatpush1.msra.mxu0 %v4469
    %4659 = vmatprep.subr.mxu0 0.0
    %4660 = vmatpush2.msra.mxu0 %v4624
    %4661 = vmatprep.subr.mxu0 0.0
    %4662 = vmatpush2.msra.mxu0 %v4619
    %4663 = vmatprep.subr.mxu0 0.0
    %4664 = vmatpush2.msra.mxu0 %v4614
    %4665 = vmatprep.subr.mxu0 0.0
    %4666 = vmatpush2.msra.mxu0 %v4609
    %4667 = vmatprep.subr.mxu0 0.0
    %4668 = vmatpush2.msra.mxu0 %v4604
    %4669 = vmatprep.subr.mxu0 0.0
    %4670 = vmatpush2.msra.mxu0 %v4599
    %4671 = vmatprep.subr.mxu0 0.0
    %4672 = vmatpush2.msra.mxu0 %v4594
    %4673 = vmatprep.subr.mxu0 0.0
    %4674 = vmatpush2.msra.mxu0 %v4589
    %4675 = vmatprep.subr.mxu0 0.0
    %4676 = vmatpush2.msra.mxu0 %v4584
    %4677 = vmatprep.subr.mxu0 0.0
    %4678 = vmatpush2.msra.mxu0 %v4579
    %4679 = vmatprep.subr.mxu0 0.0
    %4680 = vmatpush2.msra.mxu0 %v4574
    %4681 = vmatprep.subr.mxu0 0.0
    %4682 = vmatpush2.msra.mxu0 %v4569
    %4683 = vmatprep.subr.mxu0 0.0
    %4684 = vmatpush2.msra.mxu0 %v4564
    %4685 = vmatprep.subr.mxu0 0.0
    %4686 = vmatpush2.msra.mxu0 %v4559
    %4687 = vmatprep.subr.mxu0 0.0
    %4688 = vmatpush2.msra.mxu0 %v4554
    %4689 = vmatprep.subr.mxu0 0.0
    %4690 = vmatpush2.msra.mxu0 %v4549
    %4691 = vmatprep.mubr.f32.mxu0 1.0
    %4692 = vmatmul.mubr.f32.gmra.mxu0 1.0
    %v4693 = vpop.f32.mrf.mxu0
    %v4694 = vadd.f32 0.0, %v4693
    %v4695 = vpop.f32.mrf.mxu0
    %4696 = vdwg.mxu0
    %v4697 = vmul.f32 %v4469, %v4469
    %v4698 = vmul.f32 %v4474, %v4474
    %v4699 = vmul.f32 %v4479, %v4479
    %v4700 = vmul.f32 %v4484, %v4484
    %v4701 = vmul.f32 %v4489, %v4489
    %v4702 = vmul.f32 %v4494, %v4494
    %v4703 = vmul.f32 %v4499, %v4499
    %v4704 = vmul.f32 %v4504, %v4504
    %v4705 = vmul.f32 %v4509, %v4509
    %v4706 = vmul.f32 %v4514, %v4514
    %v4707 = vmul.f32 %v4519, %v4519
    %v4708 = vmul.f32 %v4524, %v4524
    %v4709 = vmul.f32 %v4529, %v4529
    %v4710 = vmul.f32 %v4534, %v4534
    %v4711 = vmul.f32 %v4539, %v4539
    %v4712 = vmul.f32 %v4544, %v4544
    %v4713 = vmul.f32 %v4549, %v4549
    %v4714 = vmul.f32 %v4554, %v4554
    %v4715 = vmul.f32 %v4559, %v4559
    %v4716 = vmul.f32 %v4564, %v4564
    %v4717 = vmul.f32 %v4569, %v4569
    %v4718 = vmul.f32 %v4574, %v4574
    %v4719 = vmul.f32 %v4579, %v4579
    %v4720 = vmul.f32 %v4584, %v4584
    %v4721 = vmul.f32 %v4589, %v4589
    %v4722 = vmul.f32 %v4594, %v4594
    %v4723 = vmul.f32 %v4599, %v4599
    %v4724 = vmul.f32 %v4604, %v4604
    %v4725 = vmul.f32 %v4609, %v4609
    %v4726 = vmul.f32 %v4614, %v4614
    %v4727 = vmul.f32 %v4619, %v4619
    %v4728 = vmul.f32 %v4624, %v4624
    %4729 = vmatprep.subr.mxu0 0.0
    %4730 = vmatpush1.msra.mxu0 %v4712
    %4731 = vmatprep.subr.mxu0 0.0
    %4732 = vmatpush1.msra.mxu0 %v4711
    %4733 = vmatprep.subr.mxu0 0.0
    %4734 = vmatpush1.msra.mxu0 %v4710
    %4735 = vmatprep.subr.mxu0 0.0
    %4736 = vmatpush1.msra.mxu0 %v4709
    %4737 = vmatprep.subr.mxu0 0.0
    %4738 = vmatpush1.msra.mxu0 %v4708
    %4739 = vmatprep.subr.mxu0 0.0
    %4740 = vmatpush1.msra.mxu0 %v4707
    %4741 = vmatprep.subr.mxu0 0.0
    %4742 = vmatpush1.msra.mxu0 %v4706
    %4743 = vmatprep.subr.mxu0 0.0
    %4744 = vmatpush1.msra.mxu0 %v4705
    %4745 = vmatprep.subr.mxu0 0.0
    %4746 = vmatpush1.msra.mxu0 %v4704
    %4747 = vmatprep.subr.mxu0 0.0
    %4748 = vmatpush1.msra.mxu0 %v4703
    %4749 = vmatprep.subr.mxu0 0.0
    %4750 = vmatpush1.msra.mxu0 %v4702
    %4751 = vmatprep.subr.mxu0 0.0
    %4752 = vmatpush1.msra.mxu0 %v4701
    %4753 = vmatprep.subr.mxu0 0.0
    %4754 = vmatpush1.msra.mxu0 %v4700
    %4755 = vmatprep.subr.mxu0 0.0
    %4756 = vmatpush1.msra.mxu0 %v4699
    %4757 = vmatprep.subr.mxu0 0.0
    %4758 = vmatpush1.msra.mxu0 %v4698
    %4759 = vmatprep.subr.mxu0 0.0
    %4760 = vmatpush1.msra.mxu0 %v4697
    %4761 = vmatprep.subr.mxu0 0.0
    %4762 = vmatpush2.msra.mxu0 %v4728
    %4763 = vmatprep.subr.mxu0 0.0
    %4764 = vmatpush2.msra.mxu0 %v4727
    %4765 = vmatprep.subr.mxu0 0.0
    %4766 = vmatpush2.msra.mxu0 %v4726
    %4767 = vmatprep.subr.mxu0 0.0
    %4768 = vmatpush2.msra.mxu0 %v4725
    %4769 = vmatprep.subr.mxu0 0.0
    %4770 = vmatpush2.msra.mxu0 %v4724
    %4771 = vmatprep.subr.mxu0 0.0
    %4772 = vmatpush2.msra.mxu0 %v4723
    %4773 = vmatprep.subr.mxu0 0.0
    %4774 = vmatpush2.msra.mxu0 %v4722
    %4775 = vmatprep.subr.mxu0 0.0
    %4776 = vmatpush2.msra.mxu0 %v4721
    %4777 = vmatprep.subr.mxu0 0.0
    %4778 = vmatpush2.msra.mxu0 %v4720
    %4779 = vmatprep.subr.mxu0 0.0
    %4780 = vmatpush2.msra.mxu0 %v4719
    %4781 = vmatprep.subr.mxu0 0.0
    %4782 = vmatpush2.msra.mxu0 %v4718
    %4783 = vmatprep.subr.mxu0 0.0
    %4784 = vmatpush2.msra.mxu0 %v4717
    %4785 = vmatprep.subr.mxu0 0.0
    %4786 = vmatpush2.msra.mxu0 %v4716
    %4787 = vmatprep.subr.mxu0 0.0
    %4788 = vmatpush2.msra.mxu0 %v4715
    %4789 = vmatprep.subr.mxu0 0.0
    %4790 = vmatpush2.msra.mxu0 %v4714
    %4791 = vmatprep.subr.mxu0 0.0
    %4792 = vmatpush2.msra.mxu0 %v4713
    %4793 = vmatprep.mubr.f32.mxu0 1.0
    %4794 = vmatmul.mubr.f32.gmra.mxu0 1.0
    %v4795 = vpop.f32.mrf.mxu0
    %v4796 = vadd.f32 0.0, %v4795
    %v4797 = vpop.f32.mrf.mxu0
    %4798 = vdwg.mxu0
    %v4799 = vmul.f32 %v4694, 0.00390625
    %v4800 = vmul.f32 %v4796, 0.00390625
    %v4801 = vmul.f32 %v4799, %v4799
    %v4802 = vsub.f32 %v4800, %v4801
    %v4803 = vmax.f32 %v4802, 0.0
    %v4804 = vld [vmem:[%s3 + $0x7] sm:$0x1]
    %v4805 = vadd.f32 %v4803, 1e-05
    %v4806 = vrsqrt.pop %v4805
    %v4807 = vmul.f32 %v4804, %v4806
    %v4808 = vld [vmem:[%s4 + $0x7] sm:$0x1]
    %v4809 = vmul.f32 %v4799, %v4807
    %v4810 = vsub.f32 %v4808, %v4809
    %v4811 = vlaneseq
    %v4812 = vshrl.u32 %v4811, 7
    %v4813 = vsub.s32 0, %v4812
    %v4814 = vrot.slane %v4807, %v4813
    %v4815 = vmul.f32 %v4469, %v4814
    %v4816 = vmul.f32 %v4474, %v4814
    %v4817 = vmul.f32 %v4479, %v4814
    %v4818 = vmul.f32 %v4484, %v4814
    %v4819 = vmul.f32 %v4489, %v4814
    %v4820 = vmul.f32 %v4494, %v4814
    %v4821 = vmul.f32 %v4499, %v4814
    %v4822 = vmul.f32 %v4504, %v4814
    %v4823 = vmul.f32 %v4509, %v4814
    %v4824 = vmul.f32 %v4514, %v4814
    %v4825 = vmul.f32 %v4519, %v4814
    %v4826 = vmul.f32 %v4524, %v4814
    %v4827 = vmul.f32 %v4529, %v4814
    %v4828 = vmul.f32 %v4534, %v4814
    %v4829 = vmul.f32 %v4539, %v4814
    %v4830 = vmul.f32 %v4544, %v4814
    %v4831 = vmul.f32 %v4549, %v4814
    %v4832 = vmul.f32 %v4554, %v4814
    %v4833 = vmul.f32 %v4559, %v4814
    %v4834 = vmul.f32 %v4564, %v4814
    %v4835 = vmul.f32 %v4569, %v4814
    %v4836 = vmul.f32 %v4574, %v4814
    %v4837 = vmul.f32 %v4579, %v4814
    %v4838 = vmul.f32 %v4584, %v4814
    %v4839 = vmul.f32 %v4589, %v4814
    %v4840 = vmul.f32 %v4594, %v4814
    %v4841 = vmul.f32 %v4599, %v4814
    %v4842 = vmul.f32 %v4604, %v4814
    %v4843 = vmul.f32 %v4609, %v4814
    %v4844 = vmul.f32 %v4614, %v4814
    %v4845 = vmul.f32 %v4619, %v4814
    %v4846 = vmul.f32 %v4624, %v4814
    %v4847 = vlaneseq
    %v4848 = vshrl.u32 %v4847, 7
    %v4849 = vsub.s32 0, %v4848
    %v4850 = vrot.slane %v4810, %v4849
    %v4851 = vadd.f32 %v4815, %v4850
    %v4852 = vadd.f32 %v4816, %v4850
    %v4853 = vadd.f32 %v4817, %v4850
    %v4854 = vadd.f32 %v4818, %v4850
    %v4855 = vadd.f32 %v4819, %v4850
    %v4856 = vadd.f32 %v4820, %v4850
    %v4857 = vadd.f32 %v4821, %v4850
    %v4858 = vadd.f32 %v4822, %v4850
    %v4859 = vadd.f32 %v4823, %v4850
    %v4860 = vadd.f32 %v4824, %v4850
    %v4861 = vadd.f32 %v4825, %v4850
    %v4862 = vadd.f32 %v4826, %v4850
    %v4863 = vadd.f32 %v4827, %v4850
    %v4864 = vadd.f32 %v4828, %v4850
    %v4865 = vadd.f32 %v4829, %v4850
    %v4866 = vadd.f32 %v4830, %v4850
    %v4867 = vadd.f32 %v4831, %v4850
    %v4868 = vadd.f32 %v4832, %v4850
    %v4869 = vadd.f32 %v4833, %v4850
    %v4870 = vadd.f32 %v4834, %v4850
    %v4871 = vadd.f32 %v4835, %v4850
    %v4872 = vadd.f32 %v4836, %v4850
    %v4873 = vadd.f32 %v4837, %v4850
    %v4874 = vadd.f32 %v4838, %v4850
    %v4875 = vadd.f32 %v4839, %v4850
    %v4876 = vadd.f32 %v4840, %v4850
    %v4877 = vadd.f32 %v4841, %v4850
    %v4878 = vadd.f32 %v4842, %v4850
    %v4879 = vadd.f32 %v4843, %v4850
    %v4880 = vadd.f32 %v4844, %v4850
    %v4881 = vadd.f32 %v4845, %v4850
    %v4882 = vadd.f32 %v4846, %v4850
    %v4883 = vmax.f32 %v4851, 0.0
    %v4884 = vmax.f32 %v4852, 0.0
    %v4885 = vmax.f32 %v4853, 0.0
    %v4886 = vmax.f32 %v4854, 0.0
    %v4887 = vmax.f32 %v4855, 0.0
    %v4888 = vmax.f32 %v4856, 0.0
    %v4889 = vmax.f32 %v4857, 0.0
    %v4890 = vmax.f32 %v4858, 0.0
    %v4891 = vmax.f32 %v4859, 0.0
    %v4892 = vmax.f32 %v4860, 0.0
    %v4893 = vmax.f32 %v4861, 0.0
    %v4894 = vmax.f32 %v4862, 0.0
    %v4895 = vmax.f32 %v4863, 0.0
    %v4896 = vmax.f32 %v4864, 0.0
    %v4897 = vmax.f32 %v4865, 0.0
    %v4898 = vmax.f32 %v4866, 0.0
    %v4899 = vmax.f32 %v4867, 0.0
    %v4900 = vmax.f32 %v4868, 0.0
    %v4901 = vmax.f32 %v4869, 0.0
    %v4902 = vmax.f32 %v4870, 0.0
    %v4903 = vmax.f32 %v4871, 0.0
    %v4904 = vmax.f32 %v4872, 0.0
    %v4905 = vmax.f32 %v4873, 0.0
    %v4906 = vmax.f32 %v4874, 0.0
    %v4907 = vmax.f32 %v4875, 0.0
    %v4908 = vmax.f32 %v4876, 0.0
    %v4909 = vmax.f32 %v4877, 0.0
    %v4910 = vmax.f32 %v4878, 0.0
    %v4911 = vmax.f32 %v4879, 0.0
    %v4912 = vmax.f32 %v4880, 0.0
    %v4913 = vmax.f32 %v4881, 0.0
    %v4914 = vmax.f32 %v4882, 0.0
    %v4915 = vld [vmem:[%s5] sm:$0x1]
    %v4917 = vlaneseq
    %v4918 = vshrl.u32 %v4917, 7
    %v4919 = vsub.s32 0, %v4918
    %v4920 = vrot.slane %v4915, %v4919
    %v4922 = vmul.f32 %v4883, %v4920
    %v4923 = vmul.f32 %v4884, %v4920
    %v4924 = vmul.f32 %v4885, %v4920
    %v4925 = vmul.f32 %v4886, %v4920
    %v4926 = vmul.f32 %v4887, %v4920
    %v4927 = vmul.f32 %v4888, %v4920
    %v4928 = vmul.f32 %v4889, %v4920
    %v4929 = vmul.f32 %v4890, %v4920
    %v4930 = vmul.f32 %v4891, %v4920
    %v4931 = vmul.f32 %v4892, %v4920
    %v4932 = vmul.f32 %v4893, %v4920
    %v4933 = vmul.f32 %v4894, %v4920
    %v4934 = vmul.f32 %v4895, %v4920
    %v4935 = vmul.f32 %v4896, %v4920
    %v4936 = vmul.f32 %v4897, %v4920
    %v4937 = vmul.f32 %v4898, %v4920
    %v4938 = vmul.f32 %v4899, %v4920
    %v4939 = vmul.f32 %v4900, %v4920
    %v4940 = vmul.f32 %v4901, %v4920
    %v4941 = vmul.f32 %v4902, %v4920
    %v4942 = vmul.f32 %v4903, %v4920
    %v4943 = vmul.f32 %v4904, %v4920
    %v4944 = vmul.f32 %v4905, %v4920
    %v4945 = vmul.f32 %v4906, %v4920
    %v4946 = vmul.f32 %v4907, %v4920
    %v4947 = vmul.f32 %v4908, %v4920
    %v4948 = vmul.f32 %v4909, %v4920
    %v4949 = vmul.f32 %v4910, %v4920
    %v4950 = vmul.f32 %v4911, %v4920
    %v4951 = vmul.f32 %v4912, %v4920
    %v4952 = vmul.f32 %v4913, %v4920
    %v4953 = vmul.f32 %v4914, %v4920
    %v4954 = vsel %vm621, %v4922, 0.0
    %4955 = vadd.xlane.f32.xlu0 %v4954
    %v4956 = vpop.xlane.xlu0 %4955
    %v4957 = vsel %vm621, %v4923, 0.0
    %4958 = vadd.xlane.f32.xlu0 %v4957
    %v4959 = vpop.xlane.xlu0 %4958
    %v4960 = vsel %vm621, %v4924, 0.0
    %4961 = vadd.xlane.f32.xlu0 %v4960
    %v4962 = vpop.xlane.xlu0 %4961
    %v4963 = vsel %vm621, %v4925, 0.0
    %4964 = vadd.xlane.f32.xlu0 %v4963
    %v4965 = vpop.xlane.xlu0 %4964
    %v4966 = vsel %vm621, %v4926, 0.0
    %4967 = vadd.xlane.f32.xlu0 %v4966
    %v4968 = vpop.xlane.xlu0 %4967
    %v4969 = vsel %vm621, %v4927, 0.0
    %4970 = vadd.xlane.f32.xlu0 %v4969
    %v4971 = vpop.xlane.xlu0 %4970
    %v4972 = vsel %vm621, %v4928, 0.0
    %4973 = vadd.xlane.f32.xlu0 %v4972
    %v4974 = vpop.xlane.xlu0 %4973
    %v4975 = vsel %vm621, %v4929, 0.0
    %4976 = vadd.xlane.f32.xlu0 %v4975
    %v4977 = vpop.xlane.xlu0 %4976
    %v4978 = vsel %vm621, %v4930, 0.0
    %4979 = vadd.xlane.f32.xlu0 %v4978
    %v4980 = vpop.xlane.xlu0 %4979
    %v4981 = vsel %vm621, %v4931, 0.0
    %4982 = vadd.xlane.f32.xlu0 %v4981
    %v4983 = vpop.xlane.xlu0 %4982
    %v4984 = vsel %vm621, %v4932, 0.0
    %4985 = vadd.xlane.f32.xlu0 %v4984
    %v4986 = vpop.xlane.xlu0 %4985
    %v4987 = vsel %vm621, %v4933, 0.0
    %4988 = vadd.xlane.f32.xlu0 %v4987
    %v4989 = vpop.xlane.xlu0 %4988
    %v4990 = vsel %vm621, %v4934, 0.0
    %4991 = vadd.xlane.f32.xlu0 %v4990
    %v4992 = vpop.xlane.xlu0 %4991
    %v4993 = vsel %vm621, %v4935, 0.0
    %4994 = vadd.xlane.f32.xlu0 %v4993
    %v4995 = vpop.xlane.xlu0 %4994
    %v4996 = vsel %vm621, %v4936, 0.0
    %4997 = vadd.xlane.f32.xlu0 %v4996
    %v4998 = vpop.xlane.xlu0 %4997
    %v4999 = vsel %vm621, %v4937, 0.0
    %5000 = vadd.xlane.f32.xlu0 %v4999
    %v5001 = vpop.xlane.xlu0 %5000
    %v5002 = vsel %vm621, %v4938, 0.0
    %5003 = vadd.xlane.f32.xlu0 %v5002
    %v5004 = vpop.xlane.xlu0 %5003
    %v5005 = vsel %vm621, %v4939, 0.0
    %5006 = vadd.xlane.f32.xlu0 %v5005
    %v5007 = vpop.xlane.xlu0 %5006
    %v5008 = vsel %vm621, %v4940, 0.0
    %5009 = vadd.xlane.f32.xlu0 %v5008
    %v5010 = vpop.xlane.xlu0 %5009
    %v5011 = vsel %vm621, %v4941, 0.0
    %5012 = vadd.xlane.f32.xlu0 %v5011
    %v5013 = vpop.xlane.xlu0 %5012
    %v5014 = vsel %vm621, %v4942, 0.0
    %5015 = vadd.xlane.f32.xlu0 %v5014
    %v5016 = vpop.xlane.xlu0 %5015
    %v5017 = vsel %vm621, %v4943, 0.0
    %5018 = vadd.xlane.f32.xlu0 %v5017
    %v5019 = vpop.xlane.xlu0 %5018
    %v5020 = vsel %vm621, %v4944, 0.0
    %5021 = vadd.xlane.f32.xlu0 %v5020
    %v5022 = vpop.xlane.xlu0 %5021
    %v5023 = vsel %vm621, %v4945, 0.0
    %5024 = vadd.xlane.f32.xlu0 %v5023
    %v5025 = vpop.xlane.xlu0 %5024
    %v5026 = vsel %vm621, %v4946, 0.0
    %5027 = vadd.xlane.f32.xlu0 %v5026
    %v5028 = vpop.xlane.xlu0 %5027
    %v5029 = vsel %vm621, %v4947, 0.0
    %5030 = vadd.xlane.f32.xlu0 %v5029
    %v5031 = vpop.xlane.xlu0 %5030
    %v5032 = vsel %vm621, %v4948, 0.0
    %5033 = vadd.xlane.f32.xlu0 %v5032
    %v5034 = vpop.xlane.xlu0 %5033
    %v5035 = vsel %vm621, %v4949, 0.0
    %5036 = vadd.xlane.f32.xlu0 %v5035
    %v5037 = vpop.xlane.xlu0 %5036
    %v5038 = vsel %vm621, %v4950, 0.0
    %5039 = vadd.xlane.f32.xlu0 %v5038
    %v5040 = vpop.xlane.xlu0 %5039
    %v5041 = vsel %vm621, %v4951, 0.0
    %5042 = vadd.xlane.f32.xlu0 %v5041
    %v5043 = vpop.xlane.xlu0 %5042
    %v5044 = vsel %vm621, %v4952, 0.0
    %5045 = vadd.xlane.f32.xlu0 %v5044
    %v5046 = vpop.xlane.xlu0 %5045
    %v5047 = vsel %vm621, %v4953, 0.0
    %5048 = vadd.xlane.f32.xlu0 %v5047
    %v5049 = vpop.xlane.xlu0 %5048
    %v5050 = vld [vmem:[#allocation2] sm:$0x1]
    %v5052 = vlaneseq
    %v5053 = vshrl.u32 %v5052, 7
    %v5054 = vsub.s32 0, %v5053
    %v5055 = vrot.slane %v5050, %v5054
    %v5057 = vadd.f32 %v4956, %v5055
    %v5058 = vadd.f32 %v4959, %v5055
    %v5059 = vadd.f32 %v4962, %v5055
    %v5060 = vadd.f32 %v4965, %v5055
    %v5061 = vadd.f32 %v4968, %v5055
    %v5062 = vadd.f32 %v4971, %v5055
    %v5063 = vadd.f32 %v4974, %v5055
    %v5064 = vadd.f32 %v4977, %v5055
    %v5065 = vadd.f32 %v4980, %v5055
    %v5066 = vadd.f32 %v4983, %v5055
    %v5067 = vadd.f32 %v4986, %v5055
    %v5068 = vadd.f32 %v4989, %v5055
    %v5069 = vadd.f32 %v4992, %v5055
    %v5070 = vadd.f32 %v4995, %v5055
    %v5071 = vadd.f32 %v4998, %v5055
    %v5072 = vadd.f32 %v5001, %v5055
    %v5073 = vadd.f32 %v5004, %v5055
    %v5074 = vadd.f32 %v5007, %v5055
    %v5075 = vadd.f32 %v5010, %v5055
    %v5076 = vadd.f32 %v5013, %v5055
    %v5077 = vadd.f32 %v5016, %v5055
    %v5078 = vadd.f32 %v5019, %v5055
    %v5079 = vadd.f32 %v5022, %v5055
    %v5080 = vadd.f32 %v5025, %v5055
    %v5081 = vadd.f32 %v5028, %v5055
    %v5082 = vadd.f32 %v5031, %v5055
    %v5083 = vadd.f32 %v5034, %v5055
    %v5084 = vadd.f32 %v5037, %v5055
    %v5085 = vadd.f32 %v5040, %v5055
    %v5086 = vadd.f32 %v5043, %v5055
    %v5087 = vadd.f32 %v5046, %v5055
    %v5088 = vadd.f32 %v5049, %v5055
    %vm5089 = vcmask 7168
    %5090 = vst.msk [vmem:[%s7] sm:$0xff] %vm5089, %v5057
    %5091 = vst.msk [vmem:[%s7 + $0x8] sm:$0xff] %vm5089, %v5058
    %5092 = vst.msk [vmem:[%s7 + $0x10] sm:$0xff] %vm5089, %v5059
    %5093 = vst.msk [vmem:[%s7 + $0x18] sm:$0xff] %vm5089, %v5060
    %5094 = vst.msk [vmem:[%s7 + $0x20] sm:$0xff] %vm5089, %v5061
    %5095 = vst.msk [vmem:[%s7 + $0x28] sm:$0xff] %vm5089, %v5062
    %5096 = vst.msk [vmem:[%s7 + $0x30] sm:$0xff] %vm5089, %v5063
    %5097 = vst.msk [vmem:[%s7 + $0x38] sm:$0xff] %vm5089, %v5064
    %5098 = vst.msk [vmem:[%s7 + $0x40] sm:$0xff] %vm5089, %v5065
    %5099 = vst.msk [vmem:[%s7 + $0x48] sm:$0xff] %vm5089, %v5066
    %5100 = vst.msk [vmem:[%s7 + $0x50] sm:$0xff] %vm5089, %v5067
    %5101 = vst.msk [vmem:[%s7 + $0x58] sm:$0xff] %vm5089, %v5068
    %5102 = vst.msk [vmem:[%s7 + $0x60] sm:$0xff] %vm5089, %v5069
    %5103 = vst.msk [vmem:[%s7 + $0x68] sm:$0xff] %vm5089, %v5070
    %5104 = vst.msk [vmem:[%s7 + $0x70] sm:$0xff] %vm5089, %v5071
    %5105 = vst.msk [vmem:[%s7 + $0x78] sm:$0xff] %vm5089, %v5072
    %5106 = vst.msk [vmem:[%s7 + $0x80] sm:$0xff] %vm5089, %v5073
    %5107 = vst.msk [vmem:[%s7 + $0x88] sm:$0xff] %vm5089, %v5074
    %5108 = vst.msk [vmem:[%s7 + $0x90] sm:$0xff] %vm5089, %v5075
    %5109 = vst.msk [vmem:[%s7 + $0x98] sm:$0xff] %vm5089, %v5076
    %5110 = vst.msk [vmem:[%s7 + $0xa0] sm:$0xff] %vm5089, %v5077
    %5111 = vst.msk [vmem:[%s7 + $0xa8] sm:$0xff] %vm5089, %v5078
    %5112 = vst.msk [vmem:[%s7 + $0xb0] sm:$0xff] %vm5089, %v5079
    %5113 = vst.msk [vmem:[%s7 + $0xb8] sm:$0xff] %vm5089, %v5080
    %5114 = vst.msk [vmem:[%s7 + $0xc0] sm:$0xff] %vm5089, %v5081
    %5115 = vst.msk [vmem:[%s7 + $0xc8] sm:$0xff] %vm5089, %v5082
    %5116 = vst.msk [vmem:[%s7 + $0xd0] sm:$0xff] %vm5089, %v5083
    %5117 = vst.msk [vmem:[%s7 + $0xd8] sm:$0xff] %vm5089, %v5084
    %5118 = vst.msk [vmem:[%s7 + $0xe0] sm:$0xff] %vm5089, %v5085
    %5119 = vst.msk [vmem:[%s7 + $0xe8] sm:$0xff] %vm5089, %v5086
    %5120 = vst.msk [vmem:[%s7 + $0xf0] sm:$0xff] %vm5089, %v5087
    %5121 = vst.msk [vmem:[%s7 + $0xf8] sm:$0xff] %vm5089, %v5088
    // Predicated region
    $region38: #{tpu_custom_call.1} parent=1 // pred_check
      _
    $region39: #{tpu_custom_call.1} parent=1 // pred_check_branch
      %5123 = sbr.rel (0) target = $region41
    $region40: #{tpu_custom_call.1} parent=1 // pred_region
      _
    $region41: #{tpu_custom_call.1} parent=1 // pred_fallthru
      _
    // Predicated region
    $region42: #{tpu_custom_call.1} parent=1 // pred_check
      _
    $region43: #{tpu_custom_call.1} parent=1 // pred_check_branch
      %5125 = sbr.rel (0) target = $region45
    $region44: #{tpu_custom_call.1} parent=1 // pred_region
      _
    $region45: #{tpu_custom_call.1} parent=1 // pred_fallthru
      _
    %5126 = vsyncpa [#allocation4], 1
    %5127 = vsyncpa [#allocation6], 1

</llo_original>
